<compile_context>
chip_gen: v6e
topology: v6e:2x2x1
jax: 0.10.0
libtpu: 0.0.40
codegen_flags: <defaults>
</compile_context>

<pallas_src>
import functools
import math

import numpy as np
import jax
import jax.numpy as jnp
from jax.experimental import pallas as pl
from jax.experimental.pallas import tpu as pltpu

WBLK = 128  # lane alignment of every packed weight block


# ----------------------------------------------------------------------------
# Single fused forward kernel
# ----------------------------------------------------------------------------
def _forward_kernel(x_ref, abias_ref, pool_ref, w32_ref, w64_ref, vec_ref, out_ref,
                    *, layout, cfg, batch, seq):
    Hd = cfg["hidden_size"]
    nh = cfg["num_attention_heads"]
    dh = Hd // nh
    bf16 = jnp.bfloat16

    # ---- slab accessors (all offsets are static Python constants) ----
    def vec(name):
        r, wd = layout["vec"][name]
        return vec_ref[r:r + 1, :wd]                       # f32 [1, wd]

    def dense(h, name, slab="w32"):
        ref = w32_ref if slab == "w32" else w64_ref
        off, wd = layout[slab][name]
        w = ref[:, off:off + wd]                           # bf16, 128-lane-aligned start
        return (jnp.dot(h.astype(bf16), w, preferred_element_type=jnp.float32)
                + vec(name))

    def batchnorm(h, gname, bname, eps=1e-5):
        # torch BatchNorm1d train-mode stats over all rows (= batch*seq), per column.
        mu = jnp.mean(h, axis=0, keepdims=True)
        var = jnp.mean(jnp.square(h - mu), axis=0, keepdims=True)
        return (h - mu) * jax.lax.rsqrt(var + eps) * vec(gname) + vec(bname)

    def layernorm(h, gname, bname, eps=1e-12):
        mu = jnp.mean(h, axis=-1, keepdims=True)
        var = jnp.mean(jnp.square(h - mu), axis=-1, keepdims=True)
        return (h - mu) * jax.lax.rsqrt(var + eps) * vec(gname) + vec(bname)

    def gelu_new(x):
        return 0.5 * x * (1.0 + jnp.tanh(
            math.sqrt(2.0 / math.pi) * (x + 0.044715 * x * x * x)))

    abias = abias_ref[...]                                 # [B*S, B*S] cross-batch mask

    def attention(h, pfx):
        # Fused QKV projection (Q columns pre-scaled by 1/sqrt(dh) at pack time).
        qkv = dense(h, pfx + "qkv")                        # [B*S, 3*Hd] f32
        parts = []
        for hi in range(nh):
            q = qkv[:, hi * dh:(hi + 1) * dh].astype(bf16)
            k = qkv[:, Hd + hi * dh:Hd + (hi + 1) * dh].astype(bf16)
            v = qkv[:, 2 * Hd + hi * dh:2 * Hd + (hi + 1) * dh].astype(bf16)
            # Both batch elements in one matmul; cross-batch blocks masked to -1e9.
            s = jax.lax.dot_general(q, k, (((1,), (1,)), ((), ())),
                                    preferred_element_type=jnp.float32)
            s = s + abias
            s = s - jnp.max(s, axis=-1, keepdims=True)
            p = jnp.exp(s)
            p = p / jnp.sum(p, axis=-1, keepdims=True)     # exact softmax denom
            parts.append(jnp.dot(p.astype(bf16), v, preferred_element_type=jnp.float32))
        return jnp.concatenate(parts, axis=-1)             # [B*S, Hd], register-resident

    # -------------------------- forward pass --------------------------
    x = x_ref[...]                                         # [B*S, Hd] (features zero-padded)

    h = batchnorm(x, "input_bn_g", "input_bn_b")
    h = jnp.maximum(dense(h, "embedder"), 0.0)
    h = batchnorm(h, "embed_bn_g", "embed_bn_b")

    # mask is None in the reference -> additive attention mask is all zeros (dropped).
    h = dense(h, "embed_map")                              # embedding -> hidden (encoder 0)
    for e in range(cfg["num_encoders"]):
        pfx = "enc%d_" % e
        # TODO(synk): switch to lax.fori_loop if num_hidden_layers grows (code size /
        # vreg pressure); with 2 shared-weight iterations full unroll is cheaper.
        for _ in range(cfg["num_hidden_layers"]):
            ctx = attention(h, pfx)
            h = layernorm(h + dense(ctx, pfx + "o"), pfx + "ln1_g", pfx + "ln1_b")
            f1 = gelu_new(dense(h, pfx + "ffn1"))
            h = layernorm(h + dense(f1, pfx + "ffn2", "w64"), pfx + "ln2_g", pfx + "ln2_b")

    # Decoders (self.relu == gelu_new in the reference).
    h = gelu_new(dense(h, "dec0"))
    h = batchnorm(h, "dbn0_g", "dbn0_b")
    h = gelu_new(dense(h, "dec1"))
    h = batchnorm(h, "dbn1_g", "dbn1_b")
    h = dense(h, "dec2")                                   # [B*S, Hd], cols >= n_out are 0

    # replace_mean == False -> sequence mean, expressed as a host-precomputed pooling
    # matmul (MXU) instead of in-kernel iota/div/where construction.
    t = jnp.dot(pool_ref[...].astype(bf16), h.astype(bf16),
                preferred_element_type=jnp.float32)        # [B, Hd]

    # final_embedder: Linear,ReLU,Linear | Linear,ReLU,Linear,ReLU,Linear,ReLU,Linear
    t = jnp.maximum(dense(t, "fe0"), 0.0)
    t = dense(t, "fe2")
    t = jnp.maximum(dense(t, "fe3"), 0.0)
    t = jnp.maximum(dense(t, "fe5"), 0.0)
    t = jnp.maximum(dense(t, "fe7"), 0.0)
    t = dense(t, "fe9")                                    # [B, 128] lane-dense; logits in [:ncls]
    out_ref[...] = t.astype(out_ref.dtype)


# ----------------------------------------------------------------------------
# Wrapper: one gridless pallas_call, everything resident in VMEM.
# ----------------------------------------------------------------------------
def transformer_forward(packed, layout, x, cfg):
    B, S, F = x.shape
    Hd = cfg["hidden_size"]
    M = B * S
    # Pad the feature axis to the hidden width so the embedder lives in the K=Hd slab
    # (padded BN gamma/beta and weight rows are zero -> padded columns stay exactly 0).
    x2 = jnp.pad(x.reshape(M, F).astype(jnp.float32), ((0, 0), (0, Hd - F)))

    # Host-side constants: cross-batch block-diagonal attention mask and mean-pool matrix.
    bid = np.repeat(np.arange(B), S)
    abias = np.where(bid[:, None] == bid[None, :], 0.0, -1e9).astype(np.float32)
    pool = (bid[None, :] == np.arange(B)[:, None]).astype(np.float32) / float(S)

    kernel = functools.partial(_forward_kernel, layout=layout, cfg=cfg, batch=B, seq=S)
    vmem = pl.BlockSpec(memory_space=pltpu.MemorySpace.VMEM)
    out = pl.pallas_call(
        kernel,
        out_shape=jax.ShapeDtypeStruct((B, 128), jnp.float32),
        in_specs=[vmem] * 6,
        out_specs=vmem,
        # Total resident bytes << default VMEM limit on v5e/v6e/v7x; no grid needed.
    )(x2, jnp.asarray(abias), jnp.asarray(pool),
      packed["w32"], packed["w64"], packed["vecs"])
    return out[:, :cfg["nclasses"]]


# ----------------------------------------------------------------------------
# Deterministic init (normal(0, 0.02) Linear weights, zero biases, ones/zeros for
# norm scale/shift — matches _init_weights) + packing into three VMEM slabs.
# Weights are stored pre-transposed as [K, N]; QKV is fused and Q pre-scaled.
# ----------------------------------------------------------------------------
def make_packed_params(key, cfg):
    F = cfg["feature_size"]
    E = cfg["embedding_size"]
    Hd = cfg["hidden_size"]
    nh = cfg["num_attention_heads"]
    I = cfg["intermediate_size"]
    n_out = cfg["n_out_nodes"]
    ncls = cfg["nclasses"]
    dh = Hd // nh

    assert E == Hd and F <= Hd and Hd % nh == 0
    assert n_out * 4 <= Hd and ncls <= WBLK

    kit = iter(jax.random.split(key, 64))

    def lin(k_in, n_cols):
        w = 0.02 * np.asarray(jax.random.normal(next(kit), (k_in, n_cols), jnp.float32))
        return w.astype(np.float32), np.zeros((n_cols,), np.float32)

    w32_items, w64_items, vec_items = [], [], []   # (name, array, used_width)

    def add_w32(name, w, width=None): w32_items.append((name, w, width or w.shape[1]))
    def add_w64(name, w, width=None): w64_items.append((name, w, width or w.shape[1]))
    def add_vec(name, v, width=None): vec_items.append((name, v, width or v.shape[0]))

    # input BN (padded feature columns get gamma=0, beta=0 -> stay exactly 0)
    add_vec("input_bn_g", np.ones(F, np.float32), Hd)
    add_vec("input_bn_b", np.zeros(F, np.float32), Hd)
    w, b = lin(F, E); add_w32("embedder", w); add_vec("embedder", b)
    add_vec("embed_bn_g", np.ones(E, np.float32))
    add_vec("embed_bn_b", np.zeros(E, np.float32))
    w, b = lin(E, Hd); add_w32("embed_map", w); add_vec("embed_map", b)

    inv = 1.0 / math.sqrt(dh)
    for e in range(cfg["num_encoders"]):
        p = "enc%d_" % e
        wq, bq = lin(Hd, Hd); wk, bk = lin(Hd, Hd); wv, bv = lin(Hd, Hd)
        add_w32(p + "qkv", np.concatenate([wq * inv, wk, wv], axis=1))
        add_vec(p + "qkv", np.concatenate([bq * inv, bk, bv]))
        w, b = lin(Hd, Hd); add_w32(p + "o", w); add_vec(p + "o", b)
        add_vec(p + "ln1_g", np.ones(Hd, np.float32))
        add_vec(p + "ln1_b", np.zeros(Hd, np.float32))
        w, b = lin(Hd, I); add_w32(p + "ffn1", w); add_vec(p + "ffn1", b)
        w, b = lin(I, Hd); add_w64(p + "ffn2", w); add_vec(p + "ffn2", b)
        add_vec(p + "ln2_g", np.ones(Hd, np.float32))
        add_vec(p + "ln2_b", np.zeros(Hd, np.float32))

    w, b = lin(Hd, Hd); add_w32("dec0", w); add_vec("dec0", b)
    add_vec("dbn0_g", np.ones(Hd, np.float32)); add_vec("dbn0_b", np.zeros(Hd, np.float32))
    w, b = lin(Hd, Hd); add_w32("dec1", w); add_vec("dec1", b)
    add_vec("dbn1_g", np.ones(Hd, np.float32)); add_vec("dbn1_b", np.zeros(Hd, np.float32))
    w, b = lin(Hd, n_out); add_w32("dec2", w, Hd); add_vec("dec2", b, Hd)

    # Final embedder chain carried at width Hd (zero-padded cols stay exactly 0 through
    # linear + relu); the last layer is padded to 128 lanes for a lane-dense output store.
    w, b = lin(n_out, n_out // 2);      add_w32("fe0", w, Hd);   add_vec("fe0", b, Hd)
    w, b = lin(n_out // 2, n_out // 2); add_w32("fe2", w, Hd);   add_vec("fe2", b, Hd)
    w, b = lin(n_out // 2, n_out * 4);  add_w32("fe3", w, Hd);   add_vec("fe3", b, Hd)
    w, b = lin(n_out * 4, n_out * 2);   add_w32("fe5", w, Hd);   add_vec("fe5", b, Hd)
    w, b = lin(n_out * 2, n_out // 2);  add_w32("fe7", w, Hd);   add_vec("fe7", b, Hd)
    w, b = lin(n_out // 2, ncls);       add_w32("fe9", w, WBLK); add_vec("fe9", b, WBLK)

    # ---- assemble slabs (every block starts at a 128-lane-aligned offset) ----
    def build_wslab(items, k_rows):
        blocks, layoutd, off = [], {}, 0
        for name, w_, wd in items:
            nlanes = WBLK * (-(-wd // WBLK))
            blk = np.zeros((k_rows, nlanes), np.float32)
            blk[:w_.shape[0], :w_.shape[1]] = w_
            layoutd[name] = (off, wd)
            blocks.append(blk)
            off += nlanes
        return np.concatenate(blocks, axis=1), layoutd

    w32_np, w32_layout = build_wslab(w32_items, Hd)
    w64_np, w64_layout = build_wslab(w64_items, I)

    maxw = max(wd for _, _, wd in vec_items)
    VW = WBLK * (-(-maxw // WBLK))
    vec_np = np.zeros((len(vec_items), VW), np.float32)
    vec_layout = {}
    for i, (name, v, wd) in enumerate(vec_items):
        vec_np[i, :v.shape[0]] = v
        vec_layout[name] = (i, wd)

    packed = {
        "w32": jnp.asarray(w32_np, dtype=jnp.bfloat16),   # bf16 at the MXU boundary
        "w64": jnp.asarray(w64_np, dtype=jnp.bfloat16),
        "vecs": jnp.asarray(vec_np, dtype=jnp.float32),   # VPU math stays f32
    }
    layout = {"w32": w32_layout, "w64": w64_layout, "vec": vec_layout}
    return packed, layout


if __name__ == "__main__":
    cfg = dict(
        feature_size=16,
        embedding_size=32,
        hidden_size=32,
        num_attention_heads=4,
        intermediate_size=64,
        num_hidden_layers=2,
        num_encoders=2,
        n_out_nodes=8,
        nclasses=4,
        nparts=8,
    )
    key = jax.random.PRNGKey(0)
    kp, kx = jax.random.split(key)
    packed, layout = make_packed_params(kp, cfg)

    B, S, F = 2, cfg["nparts"], cfg["feature_size"]
    x = jax.random.normal(kx, (B, S, F), jnp.float32)

    fwd = jax.jit(lambda pk, xx: transformer_forward(pk, layout, xx, cfg))
    out = jax.block_until_ready(fwd(packed, x))

    assert out.shape == (B, cfg["nclasses"]), out.shape
    assert bool(jnp.all(jnp.isfinite(out)))
    print("KERNEL_OK")
</pallas_src>

<mosaic_0001>
module attributes {stable_mosaic.version = 11 : i64} {
  func.func @_forward_kernel(%arg0: memref<16x32xf32, #tpu.memory_space<vmem>>, %arg1: memref<16x16xf32, #tpu.memory_space<vmem>>, %arg2: memref<2x16xf32, #tpu.memory_space<vmem>>, %arg3: memref<32x2176xbf16, #tpu.memory_space<vmem>>, %arg4: memref<64x256xbf16, #tpu.memory_space<vmem>>, %arg5: memref<35x128xf32, #tpu.memory_space<vmem>>, %arg6: memref<2x128xf32, #tpu.memory_space<vmem>>) attributes {dimension_semantics = [], scalar_prefetch = 0 : i64, scratch_operands = 0 : i64, tpu.core_type = #tpu.core_type<tc>} {
    %c0 = arith.constant 0 : index
    %c0_0 = arith.constant 0 : index
    %0 = vector.load %arg1[%c0, %c0_0] : memref<16x16xf32, #tpu.memory_space<vmem>>, vector<16x16xf32>
    %c0_1 = arith.constant 0 : index
    %c0_2 = arith.constant 0 : index
    %1 = vector.load %arg0[%c0_1, %c0_2] : memref<16x32xf32, #tpu.memory_space<vmem>>, vector<16x32xf32>
    %cst = arith.constant dense<0.000000e+00> : vector<32xf32>
    %2 = vector.multi_reduction <add>, %1, %cst [0] : vector<16x32xf32> to vector<32xf32>
    %3 = vector.shape_cast %2 : vector<32xf32> to vector<1x32xf32>
    %cst_3 = arith.constant 1.600000e+01 : f32
    %4 = vector.broadcast %cst_3 : f32 to vector<1x32xf32>
    %5 = arith.divf %3, %4 : vector<1x32xf32>
    %6 = vector.broadcast %5 : vector<1x32xf32> to vector<16x32xf32>
    %7 = arith.subf %1, %6 : vector<16x32xf32>
    %8 = arith.mulf %7, %7 : vector<16x32xf32>
    %cst_4 = arith.constant dense<0.000000e+00> : vector<32xf32>
    %9 = vector.multi_reduction <add>, %8, %cst_4 [0] : vector<16x32xf32> to vector<32xf32>
    %10 = vector.shape_cast %9 : vector<32xf32> to vector<1x32xf32>
    %cst_5 = arith.constant 1.600000e+01 : f32
    %11 = vector.broadcast %cst_5 : f32 to vector<1x32xf32>
    %12 = arith.divf %10, %11 : vector<1x32xf32>
    %13 = vector.broadcast %5 : vector<1x32xf32> to vector<16x32xf32>
    %14 = arith.subf %1, %13 : vector<16x32xf32>
    %cst_6 = arith.constant 9.99999974E-6 : f32
    %15 = vector.broadcast %cst_6 : f32 to vector<1x32xf32>
    %16 = arith.addf %12, %15 : vector<1x32xf32>
    %17 = math.rsqrt %16 : vector<1x32xf32>
    %18 = vector.broadcast %17 : vector<1x32xf32> to vector<16x32xf32>
    %19 = arith.mulf %14, %18 : vector<16x32xf32>
    %c0_7 = arith.constant 0 : index
    %c0_8 = arith.constant 0 : index
    %20 = vector.load %arg5[%c0_7, %c0_8] : memref<35x128xf32, #tpu.memory_space<vmem>>, vector<1x32xf32>
    %21 = vector.broadcast %20 : vector<1x32xf32> to vector<16x32xf32>
    %22 = arith.mulf %19, %21 : vector<16x32xf32>
    %c1 = arith.constant 1 : index
    %c0_9 = arith.constant 0 : index
    %23 = vector.load %arg5[%c1, %c0_9] : memref<35x128xf32, #tpu.memory_space<vmem>>, vector<1x32xf32>
    %24 = vector.broadcast %23 : vector<1x32xf32> to vector<16x32xf32>
    %25 = arith.addf %22, %24 : vector<16x32xf32>
    %c0_10 = arith.constant 0 : index
    %c0_11 = arith.constant 0 : index
    %26 = vector.load %arg3[%c0_10, %c0_11] : memref<32x2176xbf16, #tpu.memory_space<vmem>>, vector<32x32xbf16>
    %27 = arith.truncf %25 : vector<16x32xf32> to vector<16x32xbf16>
    %cst_12 = arith.constant dense<0.000000e+00> : vector<16x32xf32>
    %28 = tpu.matmul %27, %26, %cst_12 {dimension_numbers = #tpu.dot_dimension_numbers<[1], [0], [0], [1], [0, 0, 1, 1], [], []>} : vector<16x32xbf16>, vector<32x32xbf16>, vector<16x32xf32> -> vector<16x32xf32>
    %c2 = arith.constant 2 : index
    %c0_13 = arith.constant 0 : index
    %29 = vector.load %arg5[%c2, %c0_13] : memref<35x128xf32, #tpu.memory_space<vmem>>, vector<1x32xf32>
    %30 = vector.broadcast %29 : vector<1x32xf32> to vector<16x32xf32>
    %31 = arith.addf %28, %30 : vector<16x32xf32>
    %cst_14 = arith.constant 0.000000e+00 : f32
    %32 = vector.broadcast %cst_14 : f32 to vector<16x32xf32>
    %33 = arith.maximumf %31, %32 : vector<16x32xf32>
    %cst_15 = arith.constant dense<0.000000e+00> : vector<32xf32>
    %34 = vector.multi_reduction <add>, %33, %cst_15 [0] : vector<16x32xf32> to vector<32xf32>
    %35 = vector.shape_cast %34 : vector<32xf32> to vector<1x32xf32>
    %cst_16 = arith.constant 1.600000e+01 : f32
    %36 = vector.broadcast %cst_16 : f32 to vector<1x32xf32>
    %37 = arith.divf %35, %36 : vector<1x32xf32>
    %38 = vector.broadcast %37 : vector<1x32xf32> to vector<16x32xf32>
    %39 = arith.subf %33, %38 : vector<16x32xf32>
    %40 = arith.mulf %39, %39 : vector<16x32xf32>
    %cst_17 = arith.constant dense<0.000000e+00> : vector<32xf32>
    %41 = vector.multi_reduction <add>, %40, %cst_17 [0] : vector<16x32xf32> to vector<32xf32>
    %42 = vector.shape_cast %41 : vector<32xf32> to vector<1x32xf32>
    %cst_18 = arith.constant 1.600000e+01 : f32
    %43 = vector.broadcast %cst_18 : f32 to vector<1x32xf32>
    %44 = arith.divf %42, %43 : vector<1x32xf32>
    %45 = vector.broadcast %37 : vector<1x32xf32> to vector<16x32xf32>
    %46 = arith.subf %33, %45 : vector<16x32xf32>
    %cst_19 = arith.constant 9.99999974E-6 : f32
    %47 = vector.broadcast %cst_19 : f32 to vector<1x32xf32>
    %48 = arith.addf %44, %47 : vector<1x32xf32>
    %49 = math.rsqrt %48 : vector<1x32xf32>
    %50 = vector.broadcast %49 : vector<1x32xf32> to vector<16x32xf32>
    %51 = arith.mulf %46, %50 : vector<16x32xf32>
    %c3 = arith.constant 3 : index
    %c0_20 = arith.constant 0 : index
    %52 = vector.load %arg5[%c3, %c0_20] : memref<35x128xf32, #tpu.memory_space<vmem>>, vector<1x32xf32>
    %53 = vector.broadcast %52 : vector<1x32xf32> to vector<16x32xf32>
    %54 = arith.mulf %51, %53 : vector<16x32xf32>
    %c4 = arith.constant 4 : index
    %c0_21 = arith.constant 0 : index
    %55 = vector.load %arg5[%c4, %c0_21] : memref<35x128xf32, #tpu.memory_space<vmem>>, vector<1x32xf32>
    %56 = vector.broadcast %55 : vector<1x32xf32> to vector<16x32xf32>
    %57 = arith.addf %54, %56 : vector<16x32xf32>
    %c0_22 = arith.constant 0 : index
    %c128 = arith.constant 128 : index
    %58 = vector.load %arg3[%c0_22, %c128] : memref<32x2176xbf16, #tpu.memory_space<vmem>>, vector<32x32xbf16>
    %59 = arith.truncf %57 : vector<16x32xf32> to vector<16x32xbf16>
    %cst_23 = arith.constant dense<0.000000e+00> : vector<16x32xf32>
    %60 = tpu.matmul %59, %58, %cst_23 {dimension_numbers = #tpu.dot_dimension_numbers<[1], [0], [0], [1], [0, 0, 1, 1], [], []>} : vector<16x32xbf16>, vector<32x32xbf16>, vector<16x32xf32> -> vector<16x32xf32>
    %c5 = arith.constant 5 : index
    %c0_24 = arith.constant 0 : index
    %61 = vector.load %arg5[%c5, %c0_24] : memref<35x128xf32, #tpu.memory_space<vmem>>, vector<1x32xf32>
    %62 = vector.broadcast %61 : vector<1x32xf32> to vector<16x32xf32>
    %63 = arith.addf %60, %62 : vector<16x32xf32>
    %c0_25 = arith.constant 0 : index
    %c256 = arith.constant 256 : index
    %64 = vector.load %arg3[%c0_25, %c256] : memref<32x2176xbf16, #tpu.memory_space<vmem>>, vector<32x96xbf16>
    %65 = arith.truncf %63 : vector<16x32xf32> to vector<16x32xbf16>
    %cst_26 = arith.constant dense<0.000000e+00> : vector<16x96xf32>
    %66 = tpu.matmul %65, %64, %cst_26 {dimension_numbers = #tpu.dot_dimension_numbers<[1], [0], [0], [1], [0, 0, 1, 1], [], []>} : vector<16x32xbf16>, vector<32x96xbf16>, vector<16x96xf32> -> vector<16x96xf32>
    %c6 = arith.constant 6 : index
    %c0_27 = arith.constant 0 : index
    %67 = vector.load %arg5[%c6, %c0_27] : memref<35x128xf32, #tpu.memory_space<vmem>>, vector<1x96xf32>
    %68 = vector.broadcast %67 : vector<1x96xf32> to vector<16x96xf32>
    %69 = arith.addf %66, %68 : vector<16x96xf32>
    %70 = vector.extract_strided_slice %69 {offsets = [0, 0], sizes = [16, 8], strides = [1, 1]} : vector<16x96xf32> to vector<16x8xf32>
    %71 = arith.truncf %70 : vector<16x8xf32> to vector<16x8xbf16>
    %72 = vector.extract_strided_slice %69 {offsets = [0, 32], sizes = [16, 8], strides = [1, 1]} : vector<16x96xf32> to vector<16x8xf32>
    %73 = arith.truncf %72 : vector<16x8xf32> to vector<16x8xbf16>
    %74 = vector.extract_strided_slice %69 {offsets = [0, 64], sizes = [16, 8], strides = [1, 1]} : vector<16x96xf32> to vector<16x8xf32>
    %75 = arith.truncf %74 : vector<16x8xf32> to vector<16x8xbf16>
    %cst_28 = arith.constant dense<0.000000e+00> : vector<16x16xf32>
    %76 = tpu.matmul %71, %73, %cst_28 {dimension_numbers = #tpu.dot_dimension_numbers<[1], [1], [0], [0], [0, 0, 1, 0], [], []>} : vector<16x8xbf16>, vector<16x8xbf16>, vector<16x16xf32> -> vector<16x16xf32>
    %77 = arith.addf %76, %0 : vector<16x16xf32>
    %cst_29 = arith.constant dense<0xFF800000> : vector<16xf32>
    %78 = vector.multi_reduction <maximumf>, %77, %cst_29 [1] : vector<16x16xf32> to vector<16xf32>
    %79 = vector.shape_cast %78 : vector<16xf32> to vector<16x1xf32>
    %80 = vector.broadcast %79 : vector<16x1xf32> to vector<16x16xf32>
    %81 = arith.subf %77, %80 : vector<16x16xf32>
    %82 = math.exp %81 : vector<16x16xf32>
    %cst_30 = arith.constant dense<0.000000e+00> : vector<16xf32>
    %83 = vector.multi_reduction <add>, %82, %cst_30 [1] : vector<16x16xf32> to vector<16xf32>
    %84 = vector.shape_cast %83 : vector<16xf32> to vector<16x1xf32>
    %85 = vector.broadcast %84 : vector<16x1xf32> to vector<16x16xf32>
    %86 = arith.divf %82, %85 : vector<16x16xf32>
    %87 = arith.truncf %86 : vector<16x16xf32> to vector<16x16xbf16>
    %cst_31 = arith.constant dense<0.000000e+00> : vector<16x8xf32>
    %88 = tpu.matmul %87, %75, %cst_31 {dimension_numbers = #tpu.dot_dimension_numbers<[1], [0], [0], [1], [0, 0, 1, 1], [], []>} : vector<16x16xbf16>, vector<16x8xbf16>, vector<16x8xf32> -> vector<16x8xf32>
    %89 = vector.extract_strided_slice %69 {offsets = [0, 8], sizes = [16, 8], strides = [1, 1]} : vector<16x96xf32> to vector<16x8xf32>
    %90 = arith.truncf %89 : vector<16x8xf32> to vector<16x8xbf16>
    %91 = vector.extract_strided_slice %69 {offsets = [0, 40], sizes = [16, 8], strides = [1, 1]} : vector<16x96xf32> to vector<16x8xf32>
    %92 = arith.truncf %91 : vector<16x8xf32> to vector<16x8xbf16>
    %93 = vector.extract_strided_slice %69 {offsets = [0, 72], sizes = [16, 8], strides = [1, 1]} : vector<16x96xf32> to vector<16x8xf32>
    %94 = arith.truncf %93 : vector<16x8xf32> to vector<16x8xbf16>
    %cst_32 = arith.constant dense<0.000000e+00> : vector<16x16xf32>
    %95 = tpu.matmul %90, %92, %cst_32 {dimension_numbers = #tpu.dot_dimension_numbers<[1], [1], [0], [0], [0, 0, 1, 0], [], []>} : vector<16x8xbf16>, vector<16x8xbf16>, vector<16x16xf32> -> vector<16x16xf32>
    %96 = arith.addf %95, %0 : vector<16x16xf32>
    %cst_33 = arith.constant dense<0xFF800000> : vector<16xf32>
    %97 = vector.multi_reduction <maximumf>, %96, %cst_33 [1] : vector<16x16xf32> to vector<16xf32>
    %98 = vector.shape_cast %97 : vector<16xf32> to vector<16x1xf32>
    %99 = vector.broadcast %98 : vector<16x1xf32> to vector<16x16xf32>
    %100 = arith.subf %96, %99 : vector<16x16xf32>
    %101 = math.exp %100 : vector<16x16xf32>
    %cst_34 = arith.constant dense<0.000000e+00> : vector<16xf32>
    %102 = vector.multi_reduction <add>, %101, %cst_34 [1] : vector<16x16xf32> to vector<16xf32>
    %103 = vector.shape_cast %102 : vector<16xf32> to vector<16x1xf32>
    %104 = vector.broadcast %103 : vector<16x1xf32> to vector<16x16xf32>
    %105 = arith.divf %101, %104 : vector<16x16xf32>
    %106 = arith.truncf %105 : vector<16x16xf32> to vector<16x16xbf16>
    %cst_35 = arith.constant dense<0.000000e+00> : vector<16x8xf32>
    %107 = tpu.matmul %106, %94, %cst_35 {dimension_numbers = #tpu.dot_dimension_numbers<[1], [0], [0], [1], [0, 0, 1, 1], [], []>} : vector<16x16xbf16>, vector<16x8xbf16>, vector<16x8xf32> -> vector<16x8xf32>
    %108 = vector.extract_strided_slice %69 {offsets = [0, 16], sizes = [16, 8], strides = [1, 1]} : vector<16x96xf32> to vector<16x8xf32>
    %109 = arith.truncf %108 : vector<16x8xf32> to vector<16x8xbf16>
    %110 = vector.extract_strided_slice %69 {offsets = [0, 48], sizes = [16, 8], strides = [1, 1]} : vector<16x96xf32> to vector<16x8xf32>
    %111 = arith.truncf %110 : vector<16x8xf32> to vector<16x8xbf16>
    %112 = vector.extract_strided_slice %69 {offsets = [0, 80], sizes = [16, 8], strides = [1, 1]} : vector<16x96xf32> to vector<16x8xf32>
    %113 = arith.truncf %112 : vector<16x8xf32> to vector<16x8xbf16>
    %cst_36 = arith.constant dense<0.000000e+00> : vector<16x16xf32>
    %114 = tpu.matmul %109, %111, %cst_36 {dimension_numbers = #tpu.dot_dimension_numbers<[1], [1], [0], [0], [0, 0, 1, 0], [], []>} : vector<16x8xbf16>, vector<16x8xbf16>, vector<16x16xf32> -> vector<16x16xf32>
    %115 = arith.addf %114, %0 : vector<16x16xf32>
    %cst_37 = arith.constant dense<0xFF800000> : vector<16xf32>
    %116 = vector.multi_reduction <maximumf>, %115, %cst_37 [1] : vector<16x16xf32> to vector<16xf32>
    %117 = vector.shape_cast %116 : vector<16xf32> to vector<16x1xf32>
    %118 = vector.broadcast %117 : vector<16x1xf32> to vector<16x16xf32>
    %119 = arith.subf %115, %118 : vector<16x16xf32>
    %120 = math.exp %119 : vector<16x16xf32>
    %cst_38 = arith.constant dense<0.000000e+00> : vector<16xf32>
    %121 = vector.multi_reduction <add>, %120, %cst_38 [1] : vector<16x16xf32> to vector<16xf32>
    %122 = vector.shape_cast %121 : vector<16xf32> to vector<16x1xf32>
    %123 = vector.broadcast %122 : vector<16x1xf32> to vector<16x16xf32>
    %124 = arith.divf %120, %123 : vector<16x16xf32>
    %125 = arith.truncf %124 : vector<16x16xf32> to vector<16x16xbf16>
    %cst_39 = arith.constant dense<0.000000e+00> : vector<16x8xf32>
    %126 = tpu.matmul %125, %113, %cst_39 {dimension_numbers = #tpu.dot_dimension_numbers<[1], [0], [0], [1], [0, 0, 1, 1], [], []>} : vector<16x16xbf16>, vector<16x8xbf16>, vector<16x8xf32> -> vector<16x8xf32>
    %127 = vector.extract_strided_slice %69 {offsets = [0, 24], sizes = [16, 8], strides = [1, 1]} : vector<16x96xf32> to vector<16x8xf32>
    %128 = arith.truncf %127 : vector<16x8xf32> to vector<16x8xbf16>
    %129 = vector.extract_strided_slice %69 {offsets = [0, 56], sizes = [16, 8], strides = [1, 1]} : vector<16x96xf32> to vector<16x8xf32>
    %130 = arith.truncf %129 : vector<16x8xf32> to vector<16x8xbf16>
    %131 = vector.extract_strided_slice %69 {offsets = [0, 88], sizes = [16, 8], strides = [1, 1]} : vector<16x96xf32> to vector<16x8xf32>
    %132 = arith.truncf %131 : vector<16x8xf32> to vector<16x8xbf16>
    %cst_40 = arith.constant dense<0.000000e+00> : vector<16x16xf32>
    %133 = tpu.matmul %128, %130, %cst_40 {dimension_numbers = #tpu.dot_dimension_numbers<[1], [1], [0], [0], [0, 0, 1, 0], [], []>} : vector<16x8xbf16>, vector<16x8xbf16>, vector<16x16xf32> -> vector<16x16xf32>
    %134 = arith.addf %133, %0 : vector<16x16xf32>
    %cst_41 = arith.constant dense<0xFF800000> : vector<16xf32>
    %135 = vector.multi_reduction <maximumf>, %134, %cst_41 [1] : vector<16x16xf32> to vector<16xf32>
    %136 = vector.shape_cast %135 : vector<16xf32> to vector<16x1xf32>
    %137 = vector.broadcast %136 : vector<16x1xf32> to vector<16x16xf32>
    %138 = arith.subf %134, %137 : vector<16x16xf32>
    %139 = math.exp %138 : vector<16x16xf32>
    %cst_42 = arith.constant dense<0.000000e+00> : vector<16xf32>
    %140 = vector.multi_reduction <add>, %139, %cst_42 [1] : vector<16x16xf32> to vector<16xf32>
    %141 = vector.shape_cast %140 : vector<16xf32> to vector<16x1xf32>
    %142 = vector.broadcast %141 : vector<16x1xf32> to vector<16x16xf32>
    %143 = arith.divf %139, %142 : vector<16x16xf32>
    %144 = arith.truncf %143 : vector<16x16xf32> to vector<16x16xbf16>
    %cst_43 = arith.constant dense<0.000000e+00> : vector<16x8xf32>
    %145 = tpu.matmul %144, %132, %cst_43 {dimension_numbers = #tpu.dot_dimension_numbers<[1], [0], [0], [1], [0, 0, 1, 1], [], []>} : vector<16x16xbf16>, vector<16x8xbf16>, vector<16x8xf32> -> vector<16x8xf32>
    %146 = tpu.concatenate %88, %107, %126, %145 in 1 : vector<16x8xf32>, vector<16x8xf32>, vector<16x8xf32>, vector<16x8xf32> -> vector<16x32xf32>
    %c0_44 = arith.constant 0 : index
    %c384 = arith.constant 384 : index
    %147 = vector.load %arg3[%c0_44, %c384] : memref<32x2176xbf16, #tpu.memory_space<vmem>>, vector<32x32xbf16>
    %148 = arith.truncf %146 : vector<16x32xf32> to vector<16x32xbf16>
    %cst_45 = arith.constant dense<0.000000e+00> : vector<16x32xf32>
    %149 = tpu.matmul %148, %147, %cst_45 {dimension_numbers = #tpu.dot_dimension_numbers<[1], [0], [0], [1], [0, 0, 1, 1], [], []>} : vector<16x32xbf16>, vector<32x32xbf16>, vector<16x32xf32> -> vector<16x32xf32>
    %c7 = arith.constant 7 : index
    %c0_46 = arith.constant 0 : index
    %150 = vector.load %arg5[%c7, %c0_46] : memref<35x128xf32, #tpu.memory_space<vmem>>, vector<1x32xf32>
    %151 = vector.broadcast %150 : vector<1x32xf32> to vector<16x32xf32>
    %152 = arith.addf %149, %151 : vector<16x32xf32>
    %153 = arith.addf %63, %152 : vector<16x32xf32>
    %cst_47 = arith.constant dense<0.000000e+00> : vector<16xf32>
    %154 = vector.multi_reduction <add>, %153, %cst_47 [1] : vector<16x32xf32> to vector<16xf32>
    %155 = vector.shape_cast %154 : vector<16xf32> to vector<16x1xf32>
    %cst_48 = arith.constant 3.200000e+01 : f32
    %156 = vector.broadcast %cst_48 : f32 to vector<16x1xf32>
    %157 = arith.divf %155, %156 : vector<16x1xf32>
    %158 = vector.broadcast %157 : vector<16x1xf32> to vector<16x32xf32>
    %159 = arith.subf %153, %158 : vector<16x32xf32>
    %160 = arith.mulf %159, %159 : vector<16x32xf32>
    %cst_49 = arith.constant dense<0.000000e+00> : vector<16xf32>
    %161 = vector.multi_reduction <add>, %160, %cst_49 [1] : vector<16x32xf32> to vector<16xf32>
    %162 = vector.shape_cast %161 : vector<16xf32> to vector<16x1xf32>
    %cst_50 = arith.constant 3.200000e+01 : f32
    %163 = vector.broadcast %cst_50 : f32 to vector<16x1xf32>
    %164 = arith.divf %162, %163 : vector<16x1xf32>
    %165 = vector.broadcast %157 : vector<16x1xf32> to vector<16x32xf32>
    %166 = arith.subf %153, %165 : vector<16x32xf32>
    %cst_51 = arith.constant 9.99999996E-13 : f32
    %167 = vector.broadcast %cst_51 : f32 to vector<16x1xf32>
    %168 = arith.addf %164, %167 : vector<16x1xf32>
    %169 = math.rsqrt %168 : vector<16x1xf32>
    %170 = vector.broadcast %169 : vector<16x1xf32> to vector<16x32xf32>
    %171 = arith.mulf %166, %170 : vector<16x32xf32>
    %c8 = arith.constant 8 : index
    %c0_52 = arith.constant 0 : index
    %172 = vector.load %arg5[%c8, %c0_52] : memref<35x128xf32, #tpu.memory_space<vmem>>, vector<1x32xf32>
    %173 = vector.broadcast %172 : vector<1x32xf32> to vector<16x32xf32>
    %174 = arith.mulf %171, %173 : vector<16x32xf32>
    %c9 = arith.constant 9 : index
    %c0_53 = arith.constant 0 : index
    %175 = vector.load %arg5[%c9, %c0_53] : memref<35x128xf32, #tpu.memory_space<vmem>>, vector<1x32xf32>
    %176 = vector.broadcast %175 : vector<1x32xf32> to vector<16x32xf32>
    %177 = arith.addf %174, %176 : vector<16x32xf32>
    %c0_54 = arith.constant 0 : index
    %c512 = arith.constant 512 : index
    %178 = vector.load %arg3[%c0_54, %c512] : memref<32x2176xbf16, #tpu.memory_space<vmem>>, vector<32x64xbf16>
    %179 = arith.truncf %177 : vector<16x32xf32> to vector<16x32xbf16>
    %cst_55 = arith.constant dense<0.000000e+00> : vector<16x64xf32>
    %180 = tpu.matmul %179, %178, %cst_55 {dimension_numbers = #tpu.dot_dimension_numbers<[1], [0], [0], [1], [0, 0, 1, 1], [], []>} : vector<16x32xbf16>, vector<32x64xbf16>, vector<16x64xf32> -> vector<16x64xf32>
    %c10 = arith.constant 10 : index
    %c0_56 = arith.constant 0 : index
    %181 = vector.load %arg5[%c10, %c0_56] : memref<35x128xf32, #tpu.memory_space<vmem>>, vector<1x64xf32>
    %182 = vector.broadcast %181 : vector<1x64xf32> to vector<16x64xf32>
    %183 = arith.addf %180, %182 : vector<16x64xf32>
    %cst_57 = arith.constant 5.000000e-01 : f32
    %184 = vector.broadcast %cst_57 : f32 to vector<16x64xf32>
    %185 = arith.mulf %184, %183 : vector<16x64xf32>
    %cst_58 = arith.constant 4.471500e-02 : f32
    %186 = vector.broadcast %cst_58 : f32 to vector<16x64xf32>
    %187 = arith.mulf %186, %183 : vector<16x64xf32>
    %188 = arith.mulf %187, %183 : vector<16x64xf32>
    %189 = arith.mulf %188, %183 : vector<16x64xf32>
    %190 = arith.addf %183, %189 : vector<16x64xf32>
    %cst_59 = arith.constant 0.797884583 : f32
    %191 = vector.broadcast %cst_59 : f32 to vector<16x64xf32>
    %192 = arith.mulf %191, %190 : vector<16x64xf32>
    %193 = math.tanh %192 : vector<16x64xf32>
    %cst_60 = arith.constant 1.000000e+00 : f32
    %194 = vector.broadcast %cst_60 : f32 to vector<16x64xf32>
    %195 = arith.addf %194, %193 : vector<16x64xf32>
    %196 = arith.mulf %185, %195 : vector<16x64xf32>
    %c0_61 = arith.constant 0 : index
    %c0_62 = arith.constant 0 : index
    %197 = vector.load %arg4[%c0_61, %c0_62] : memref<64x256xbf16, #tpu.memory_space<vmem>>, vector<64x32xbf16>
    %198 = arith.truncf %196 : vector<16x64xf32> to vector<16x64xbf16>
    %cst_63 = arith.constant dense<0.000000e+00> : vector<16x32xf32>
    %199 = tpu.matmul %198, %197, %cst_63 {dimension_numbers = #tpu.dot_dimension_numbers<[1], [0], [0], [1], [0, 0, 1, 1], [], []>} : vector<16x64xbf16>, vector<64x32xbf16>, vector<16x32xf32> -> vector<16x32xf32>
    %c11 = arith.constant 11 : index
    %c0_64 = arith.constant 0 : index
    %200 = vector.load %arg5[%c11, %c0_64] : memref<35x128xf32, #tpu.memory_space<vmem>>, vector<1x32xf32>
    %201 = vector.broadcast %200 : vector<1x32xf32> to vector<16x32xf32>
    %202 = arith.addf %199, %201 : vector<16x32xf32>
    %203 = arith.addf %177, %202 : vector<16x32xf32>
    %cst_65 = arith.constant dense<0.000000e+00> : vector<16xf32>
    %204 = vector.multi_reduction <add>, %203, %cst_65 [1] : vector<16x32xf32> to vector<16xf32>
    %205 = vector.shape_cast %204 : vector<16xf32> to vector<16x1xf32>
    %cst_66 = arith.constant 3.200000e+01 : f32
    %206 = vector.broadcast %cst_66 : f32 to vector<16x1xf32>
    %207 = arith.divf %205, %206 : vector<16x1xf32>
    %208 = vector.broadcast %207 : vector<16x1xf32> to vector<16x32xf32>
    %209 = arith.subf %203, %208 : vector<16x32xf32>
    %210 = arith.mulf %209, %209 : vector<16x32xf32>
    %cst_67 = arith.constant dense<0.000000e+00> : vector<16xf32>
    %211 = vector.multi_reduction <add>, %210, %cst_67 [1] : vector<16x32xf32> to vector<16xf32>
    %212 = vector.shape_cast %211 : vector<16xf32> to vector<16x1xf32>
    %cst_68 = arith.constant 3.200000e+01 : f32
    %213 = vector.broadcast %cst_68 : f32 to vector<16x1xf32>
    %214 = arith.divf %212, %213 : vector<16x1xf32>
    %215 = vector.broadcast %207 : vector<16x1xf32> to vector<16x32xf32>
    %216 = arith.subf %203, %215 : vector<16x32xf32>
    %cst_69 = arith.constant 9.99999996E-13 : f32
    %217 = vector.broadcast %cst_69 : f32 to vector<16x1xf32>
    %218 = arith.addf %214, %217 : vector<16x1xf32>
    %219 = math.rsqrt %218 : vector<16x1xf32>
    %220 = vector.broadcast %219 : vector<16x1xf32> to vector<16x32xf32>
    %221 = arith.mulf %216, %220 : vector<16x32xf32>
    %c12 = arith.constant 12 : index
    %c0_70 = arith.constant 0 : index
    %222 = vector.load %arg5[%c12, %c0_70] : memref<35x128xf32, #tpu.memory_space<vmem>>, vector<1x32xf32>
    %223 = vector.broadcast %222 : vector<1x32xf32> to vector<16x32xf32>
    %224 = arith.mulf %221, %223 : vector<16x32xf32>
    %c13 = arith.constant 13 : index
    %c0_71 = arith.constant 0 : index
    %225 = vector.load %arg5[%c13, %c0_71] : memref<35x128xf32, #tpu.memory_space<vmem>>, vector<1x32xf32>
    %226 = vector.broadcast %225 : vector<1x32xf32> to vector<16x32xf32>
    %227 = arith.addf %224, %226 : vector<16x32xf32>
    %c0_72 = arith.constant 0 : index
    %c256_73 = arith.constant 256 : index
    %228 = vector.load %arg3[%c0_72, %c256_73] : memref<32x2176xbf16, #tpu.memory_space<vmem>>, vector<32x96xbf16>
    %229 = arith.truncf %227 : vector<16x32xf32> to vector<16x32xbf16>
    %cst_74 = arith.constant dense<0.000000e+00> : vector<16x96xf32>
    %230 = tpu.matmul %229, %228, %cst_74 {dimension_numbers = #tpu.dot_dimension_numbers<[1], [0], [0], [1], [0, 0, 1, 1], [], []>} : vector<16x32xbf16>, vector<32x96xbf16>, vector<16x96xf32> -> vector<16x96xf32>
    %c6_75 = arith.constant 6 : index
    %c0_76 = arith.constant 0 : index
    %231 = vector.load %arg5[%c6_75, %c0_76] : memref<35x128xf32, #tpu.memory_space<vmem>>, vector<1x96xf32>
    %232 = vector.broadcast %231 : vector<1x96xf32> to vector<16x96xf32>
    %233 = arith.addf %230, %232 : vector<16x96xf32>
    %234 = vector.extract_strided_slice %233 {offsets = [0, 0], sizes = [16, 8], strides = [1, 1]} : vector<16x96xf32> to vector<16x8xf32>
    %235 = arith.truncf %234 : vector<16x8xf32> to vector<16x8xbf16>
    %236 = vector.extract_strided_slice %233 {offsets = [0, 32], sizes = [16, 8], strides = [1, 1]} : vector<16x96xf32> to vector<16x8xf32>
    %237 = arith.truncf %236 : vector<16x8xf32> to vector<16x8xbf16>
    %238 = vector.extract_strided_slice %233 {offsets = [0, 64], sizes = [16, 8], strides = [1, 1]} : vector<16x96xf32> to vector<16x8xf32>
    %239 = arith.truncf %238 : vector<16x8xf32> to vector<16x8xbf16>
    %cst_77 = arith.constant dense<0.000000e+00> : vector<16x16xf32>
    %240 = tpu.matmul %235, %237, %cst_77 {dimension_numbers = #tpu.dot_dimension_numbers<[1], [1], [0], [0], [0, 0, 1, 0], [], []>} : vector<16x8xbf16>, vector<16x8xbf16>, vector<16x16xf32> -> vector<16x16xf32>
    %241 = arith.addf %240, %0 : vector<16x16xf32>
    %cst_78 = arith.constant dense<0xFF800000> : vector<16xf32>
    %242 = vector.multi_reduction <maximumf>, %241, %cst_78 [1] : vector<16x16xf32> to vector<16xf32>
    %243 = vector.shape_cast %242 : vector<16xf32> to vector<16x1xf32>
    %244 = vector.broadcast %243 : vector<16x1xf32> to vector<16x16xf32>
    %245 = arith.subf %241, %244 : vector<16x16xf32>
    %246 = math.exp %245 : vector<16x16xf32>
    %cst_79 = arith.constant dense<0.000000e+00> : vector<16xf32>
    %247 = vector.multi_reduction <add>, %246, %cst_79 [1] : vector<16x16xf32> to vector<16xf32>
    %248 = vector.shape_cast %247 : vector<16xf32> to vector<16x1xf32>
    %249 = vector.broadcast %248 : vector<16x1xf32> to vector<16x16xf32>
    %250 = arith.divf %246, %249 : vector<16x16xf32>
    %251 = arith.truncf %250 : vector<16x16xf32> to vector<16x16xbf16>
    %cst_80 = arith.constant dense<0.000000e+00> : vector<16x8xf32>
    %252 = tpu.matmul %251, %239, %cst_80 {dimension_numbers = #tpu.dot_dimension_numbers<[1], [0], [0], [1], [0, 0, 1, 1], [], []>} : vector<16x16xbf16>, vector<16x8xbf16>, vector<16x8xf32> -> vector<16x8xf32>
    %253 = vector.extract_strided_slice %233 {offsets = [0, 8], sizes = [16, 8], strides = [1, 1]} : vector<16x96xf32> to vector<16x8xf32>
    %254 = arith.truncf %253 : vector<16x8xf32> to vector<16x8xbf16>
    %255 = vector.extract_strided_slice %233 {offsets = [0, 40], sizes = [16, 8], strides = [1, 1]} : vector<16x96xf32> to vector<16x8xf32>
    %256 = arith.truncf %255 : vector<16x8xf32> to vector<16x8xbf16>
    %257 = vector.extract_strided_slice %233 {offsets = [0, 72], sizes = [16, 8], strides = [1, 1]} : vector<16x96xf32> to vector<16x8xf32>
    %258 = arith.truncf %257 : vector<16x8xf32> to vector<16x8xbf16>
    %cst_81 = arith.constant dense<0.000000e+00> : vector<16x16xf32>
    %259 = tpu.matmul %254, %256, %cst_81 {dimension_numbers = #tpu.dot_dimension_numbers<[1], [1], [0], [0], [0, 0, 1, 0], [], []>} : vector<16x8xbf16>, vector<16x8xbf16>, vector<16x16xf32> -> vector<16x16xf32>
    %260 = arith.addf %259, %0 : vector<16x16xf32>
    %cst_82 = arith.constant dense<0xFF800000> : vector<16xf32>
    %261 = vector.multi_reduction <maximumf>, %260, %cst_82 [1] : vector<16x16xf32> to vector<16xf32>
    %262 = vector.shape_cast %261 : vector<16xf32> to vector<16x1xf32>
    %263 = vector.broadcast %262 : vector<16x1xf32> to vector<16x16xf32>
    %264 = arith.subf %260, %263 : vector<16x16xf32>
    %265 = math.exp %264 : vector<16x16xf32>
    %cst_83 = arith.constant dense<0.000000e+00> : vector<16xf32>
    %266 = vector.multi_reduction <add>, %265, %cst_83 [1] : vector<16x16xf32> to vector<16xf32>
    %267 = vector.shape_cast %266 : vector<16xf32> to vector<16x1xf32>
    %268 = vector.broadcast %267 : vector<16x1xf32> to vector<16x16xf32>
    %269 = arith.divf %265, %268 : vector<16x16xf32>
    %270 = arith.truncf %269 : vector<16x16xf32> to vector<16x16xbf16>
    %cst_84 = arith.constant dense<0.000000e+00> : vector<16x8xf32>
    %271 = tpu.matmul %270, %258, %cst_84 {dimension_numbers = #tpu.dot_dimension_numbers<[1], [0], [0], [1], [0, 0, 1, 1], [], []>} : vector<16x16xbf16>, vector<16x8xbf16>, vector<16x8xf32> -> vector<16x8xf32>
    %272 = vector.extract_strided_slice %233 {offsets = [0, 16], sizes = [16, 8], strides = [1, 1]} : vector<16x96xf32> to vector<16x8xf32>
    %273 = arith.truncf %272 : vector<16x8xf32> to vector<16x8xbf16>
    %274 = vector.extract_strided_slice %233 {offsets = [0, 48], sizes = [16, 8], strides = [1, 1]} : vector<16x96xf32> to vector<16x8xf32>
    %275 = arith.truncf %274 : vector<16x8xf32> to vector<16x8xbf16>
    %276 = vector.extract_strided_slice %233 {offsets = [0, 80], sizes = [16, 8], strides = [1, 1]} : vector<16x96xf32> to vector<16x8xf32>
    %277 = arith.truncf %276 : vector<16x8xf32> to vector<16x8xbf16>
    %cst_85 = arith.constant dense<0.000000e+00> : vector<16x16xf32>
    %278 = tpu.matmul %273, %275, %cst_85 {dimension_numbers = #tpu.dot_dimension_numbers<[1], [1], [0], [0], [0, 0, 1, 0], [], []>} : vector<16x8xbf16>, vector<16x8xbf16>, vector<16x16xf32> -> vector<16x16xf32>
    %279 = arith.addf %278, %0 : vector<16x16xf32>
    %cst_86 = arith.constant dense<0xFF800000> : vector<16xf32>
    %280 = vector.multi_reduction <maximumf>, %279, %cst_86 [1] : vector<16x16xf32> to vector<16xf32>
    %281 = vector.shape_cast %280 : vector<16xf32> to vector<16x1xf32>
    %282 = vector.broadcast %281 : vector<16x1xf32> to vector<16x16xf32>
    %283 = arith.subf %279, %282 : vector<16x16xf32>
    %284 = math.exp %283 : vector<16x16xf32>
    %cst_87 = arith.constant dense<0.000000e+00> : vector<16xf32>
    %285 = vector.multi_reduction <add>, %284, %cst_87 [1] : vector<16x16xf32> to vector<16xf32>
    %286 = vector.shape_cast %285 : vector<16xf32> to vector<16x1xf32>
    %287 = vector.broadcast %286 : vector<16x1xf32> to vector<16x16xf32>
    %288 = arith.divf %284, %287 : vector<16x16xf32>
    %289 = arith.truncf %288 : vector<16x16xf32> to vector<16x16xbf16>
    %cst_88 = arith.constant dense<0.000000e+00> : vector<16x8xf32>
    %290 = tpu.matmul %289, %277, %cst_88 {dimension_numbers = #tpu.dot_dimension_numbers<[1], [0], [0], [1], [0, 0, 1, 1], [], []>} : vector<16x16xbf16>, vector<16x8xbf16>, vector<16x8xf32> -> vector<16x8xf32>
    %291 = vector.extract_strided_slice %233 {offsets = [0, 24], sizes = [16, 8], strides = [1, 1]} : vector<16x96xf32> to vector<16x8xf32>
    %292 = arith.truncf %291 : vector<16x8xf32> to vector<16x8xbf16>
    %293 = vector.extract_strided_slice %233 {offsets = [0, 56], sizes = [16, 8], strides = [1, 1]} : vector<16x96xf32> to vector<16x8xf32>
    %294 = arith.truncf %293 : vector<16x8xf32> to vector<16x8xbf16>
    %295 = vector.extract_strided_slice %233 {offsets = [0, 88], sizes = [16, 8], strides = [1, 1]} : vector<16x96xf32> to vector<16x8xf32>
    %296 = arith.truncf %295 : vector<16x8xf32> to vector<16x8xbf16>
    %cst_89 = arith.constant dense<0.000000e+00> : vector<16x16xf32>
    %297 = tpu.matmul %292, %294, %cst_89 {dimension_numbers = #tpu.dot_dimension_numbers<[1], [1], [0], [0], [0, 0, 1, 0], [], []>} : vector<16x8xbf16>, vector<16x8xbf16>, vector<16x16xf32> -> vector<16x16xf32>
    %298 = arith.addf %297, %0 : vector<16x16xf32>
    %cst_90 = arith.constant dense<0xFF800000> : vector<16xf32>
    %299 = vector.multi_reduction <maximumf>, %298, %cst_90 [1] : vector<16x16xf32> to vector<16xf32>
    %300 = vector.shape_cast %299 : vector<16xf32> to vector<16x1xf32>
    %301 = vector.broadcast %300 : vector<16x1xf32> to vector<16x16xf32>
    %302 = arith.subf %298, %301 : vector<16x16xf32>
    %303 = math.exp %302 : vector<16x16xf32>
    %cst_91 = arith.constant dense<0.000000e+00> : vector<16xf32>
    %304 = vector.multi_reduction <add>, %303, %cst_91 [1] : vector<16x16xf32> to vector<16xf32>
    %305 = vector.shape_cast %304 : vector<16xf32> to vector<16x1xf32>
    %306 = vector.broadcast %305 : vector<16x1xf32> to vector<16x16xf32>
    %307 = arith.divf %303, %306 : vector<16x16xf32>
    %308 = arith.truncf %307 : vector<16x16xf32> to vector<16x16xbf16>
    %cst_92 = arith.constant dense<0.000000e+00> : vector<16x8xf32>
    %309 = tpu.matmul %308, %296, %cst_92 {dimension_numbers = #tpu.dot_dimension_numbers<[1], [0], [0], [1], [0, 0, 1, 1], [], []>} : vector<16x16xbf16>, vector<16x8xbf16>, vector<16x8xf32> -> vector<16x8xf32>
    %310 = tpu.concatenate %252, %271, %290, %309 in 1 : vector<16x8xf32>, vector<16x8xf32>, vector<16x8xf32>, vector<16x8xf32> -> vector<16x32xf32>
    %c0_93 = arith.constant 0 : index
    %c384_94 = arith.constant 384 : index
    %311 = vector.load %arg3[%c0_93, %c384_94] : memref<32x2176xbf16, #tpu.memory_space<vmem>>, vector<32x32xbf16>
    %312 = arith.truncf %310 : vector<16x32xf32> to vector<16x32xbf16>
    %cst_95 = arith.constant dense<0.000000e+00> : vector<16x32xf32>
    %313 = tpu.matmul %312, %311, %cst_95 {dimension_numbers = #tpu.dot_dimension_numbers<[1], [0], [0], [1], [0, 0, 1, 1], [], []>} : vector<16x32xbf16>, vector<32x32xbf16>, vector<16x32xf32> -> vector<16x32xf32>
    %c7_96 = arith.constant 7 : index
    %c0_97 = arith.constant 0 : index
    %314 = vector.load %arg5[%c7_96, %c0_97] : memref<35x128xf32, #tpu.memory_space<vmem>>, vector<1x32xf32>
    %315 = vector.broadcast %314 : vector<1x32xf32> to vector<16x32xf32>
    %316 = arith.addf %313, %315 : vector<16x32xf32>
    %317 = arith.addf %227, %316 : vector<16x32xf32>
    %cst_98 = arith.constant dense<0.000000e+00> : vector<16xf32>
    %318 = vector.multi_reduction <add>, %317, %cst_98 [1] : vector<16x32xf32> to vector<16xf32>
    %319 = vector.shape_cast %318 : vector<16xf32> to vector<16x1xf32>
    %cst_99 = arith.constant 3.200000e+01 : f32
    %320 = vector.broadcast %cst_99 : f32 to vector<16x1xf32>
    %321 = arith.divf %319, %320 : vector<16x1xf32>
    %322 = vector.broadcast %321 : vector<16x1xf32> to vector<16x32xf32>
    %323 = arith.subf %317, %322 : vector<16x32xf32>
    %324 = arith.mulf %323, %323 : vector<16x32xf32>
    %cst_100 = arith.constant dense<0.000000e+00> : vector<16xf32>
    %325 = vector.multi_reduction <add>, %324, %cst_100 [1] : vector<16x32xf32> to vector<16xf32>
    %326 = vector.shape_cast %325 : vector<16xf32> to vector<16x1xf32>
    %cst_101 = arith.constant 3.200000e+01 : f32
    %327 = vector.broadcast %cst_101 : f32 to vector<16x1xf32>
    %328 = arith.divf %326, %327 : vector<16x1xf32>
    %329 = vector.broadcast %321 : vector<16x1xf32> to vector<16x32xf32>
    %330 = arith.subf %317, %329 : vector<16x32xf32>
    %cst_102 = arith.constant 9.99999996E-13 : f32
    %331 = vector.broadcast %cst_102 : f32 to vector<16x1xf32>
    %332 = arith.addf %328, %331 : vector<16x1xf32>
    %333 = math.rsqrt %332 : vector<16x1xf32>
    %334 = vector.broadcast %333 : vector<16x1xf32> to vector<16x32xf32>
    %335 = arith.mulf %330, %334 : vector<16x32xf32>
    %c8_103 = arith.constant 8 : index
    %c0_104 = arith.constant 0 : index
    %336 = vector.load %arg5[%c8_103, %c0_104] : memref<35x128xf32, #tpu.memory_space<vmem>>, vector<1x32xf32>
    %337 = vector.broadcast %336 : vector<1x32xf32> to vector<16x32xf32>
    %338 = arith.mulf %335, %337 : vector<16x32xf32>
    %c9_105 = arith.constant 9 : index
    %c0_106 = arith.constant 0 : index
    %339 = vector.load %arg5[%c9_105, %c0_106] : memref<35x128xf32, #tpu.memory_space<vmem>>, vector<1x32xf32>
    %340 = vector.broadcast %339 : vector<1x32xf32> to vector<16x32xf32>
    %341 = arith.addf %338, %340 : vector<16x32xf32>
    %c0_107 = arith.constant 0 : index
    %c512_108 = arith.constant 512 : index
    %342 = vector.load %arg3[%c0_107, %c512_108] : memref<32x2176xbf16, #tpu.memory_space<vmem>>, vector<32x64xbf16>
    %343 = arith.truncf %341 : vector<16x32xf32> to vector<16x32xbf16>
    %cst_109 = arith.constant dense<0.000000e+00> : vector<16x64xf32>
    %344 = tpu.matmul %343, %342, %cst_109 {dimension_numbers = #tpu.dot_dimension_numbers<[1], [0], [0], [1], [0, 0, 1, 1], [], []>} : vector<16x32xbf16>, vector<32x64xbf16>, vector<16x64xf32> -> vector<16x64xf32>
    %c10_110 = arith.constant 10 : index
    %c0_111 = arith.constant 0 : index
    %345 = vector.load %arg5[%c10_110, %c0_111] : memref<35x128xf32, #tpu.memory_space<vmem>>, vector<1x64xf32>
    %346 = vector.broadcast %345 : vector<1x64xf32> to vector<16x64xf32>
    %347 = arith.addf %344, %346 : vector<16x64xf32>
    %cst_112 = arith.constant 5.000000e-01 : f32
    %348 = vector.broadcast %cst_112 : f32 to vector<16x64xf32>
    %349 = arith.mulf %348, %347 : vector<16x64xf32>
    %cst_113 = arith.constant 4.471500e-02 : f32
    %350 = vector.broadcast %cst_113 : f32 to vector<16x64xf32>
    %351 = arith.mulf %350, %347 : vector<16x64xf32>
    %352 = arith.mulf %351, %347 : vector<16x64xf32>
    %353 = arith.mulf %352, %347 : vector<16x64xf32>
    %354 = arith.addf %347, %353 : vector<16x64xf32>
    %cst_114 = arith.constant 0.797884583 : f32
    %355 = vector.broadcast %cst_114 : f32 to vector<16x64xf32>
    %356 = arith.mulf %355, %354 : vector<16x64xf32>
    %357 = math.tanh %356 : vector<16x64xf32>
    %cst_115 = arith.constant 1.000000e+00 : f32
    %358 = vector.broadcast %cst_115 : f32 to vector<16x64xf32>
    %359 = arith.addf %358, %357 : vector<16x64xf32>
    %360 = arith.mulf %349, %359 : vector<16x64xf32>
    %c0_116 = arith.constant 0 : index
    %c0_117 = arith.constant 0 : index
    %361 = vector.load %arg4[%c0_116, %c0_117] : memref<64x256xbf16, #tpu.memory_space<vmem>>, vector<64x32xbf16>
    %362 = arith.truncf %360 : vector<16x64xf32> to vector<16x64xbf16>
    %cst_118 = arith.constant dense<0.000000e+00> : vector<16x32xf32>
    %363 = tpu.matmul %362, %361, %cst_118 {dimension_numbers = #tpu.dot_dimension_numbers<[1], [0], [0], [1], [0, 0, 1, 1], [], []>} : vector<16x64xbf16>, vector<64x32xbf16>, vector<16x32xf32> -> vector<16x32xf32>
    %c11_119 = arith.constant 11 : index
    %c0_120 = arith.constant 0 : index
    %364 = vector.load %arg5[%c11_119, %c0_120] : memref<35x128xf32, #tpu.memory_space<vmem>>, vector<1x32xf32>
    %365 = vector.broadcast %364 : vector<1x32xf32> to vector<16x32xf32>
    %366 = arith.addf %363, %365 : vector<16x32xf32>
    %367 = arith.addf %341, %366 : vector<16x32xf32>
    %cst_121 = arith.constant dense<0.000000e+00> : vector<16xf32>
    %368 = vector.multi_reduction <add>, %367, %cst_121 [1] : vector<16x32xf32> to vector<16xf32>
    %369 = vector.shape_cast %368 : vector<16xf32> to vector<16x1xf32>
    %cst_122 = arith.constant 3.200000e+01 : f32
    %370 = vector.broadcast %cst_122 : f32 to vector<16x1xf32>
    %371 = arith.divf %369, %370 : vector<16x1xf32>
    %372 = vector.broadcast %371 : vector<16x1xf32> to vector<16x32xf32>
    %373 = arith.subf %367, %372 : vector<16x32xf32>
    %374 = arith.mulf %373, %373 : vector<16x32xf32>
    %cst_123 = arith.constant dense<0.000000e+00> : vector<16xf32>
    %375 = vector.multi_reduction <add>, %374, %cst_123 [1] : vector<16x32xf32> to vector<16xf32>
    %376 = vector.shape_cast %375 : vector<16xf32> to vector<16x1xf32>
    %cst_124 = arith.constant 3.200000e+01 : f32
    %377 = vector.broadcast %cst_124 : f32 to vector<16x1xf32>
    %378 = arith.divf %376, %377 : vector<16x1xf32>
    %379 = vector.broadcast %371 : vector<16x1xf32> to vector<16x32xf32>
    %380 = arith.subf %367, %379 : vector<16x32xf32>
    %cst_125 = arith.constant 9.99999996E-13 : f32
    %381 = vector.broadcast %cst_125 : f32 to vector<16x1xf32>
    %382 = arith.addf %378, %381 : vector<16x1xf32>
    %383 = math.rsqrt %382 : vector<16x1xf32>
    %384 = vector.broadcast %383 : vector<16x1xf32> to vector<16x32xf32>
    %385 = arith.mulf %380, %384 : vector<16x32xf32>
    %c12_126 = arith.constant 12 : index
    %c0_127 = arith.constant 0 : index
    %386 = vector.load %arg5[%c12_126, %c0_127] : memref<35x128xf32, #tpu.memory_space<vmem>>, vector<1x32xf32>
    %387 = vector.broadcast %386 : vector<1x32xf32> to vector<16x32xf32>
    %388 = arith.mulf %385, %387 : vector<16x32xf32>
    %c13_128 = arith.constant 13 : index
    %c0_129 = arith.constant 0 : index
    %389 = vector.load %arg5[%c13_128, %c0_129] : memref<35x128xf32, #tpu.memory_space<vmem>>, vector<1x32xf32>
    %390 = vector.broadcast %389 : vector<1x32xf32> to vector<16x32xf32>
    %391 = arith.addf %388, %390 : vector<16x32xf32>
    %c0_130 = arith.constant 0 : index
    %c640 = arith.constant 640 : index
    %392 = vector.load %arg3[%c0_130, %c640] : memref<32x2176xbf16, #tpu.memory_space<vmem>>, vector<32x96xbf16>
    %393 = arith.truncf %391 : vector<16x32xf32> to vector<16x32xbf16>
    %cst_131 = arith.constant dense<0.000000e+00> : vector<16x96xf32>
    %394 = tpu.matmul %393, %392, %cst_131 {dimension_numbers = #tpu.dot_dimension_numbers<[1], [0], [0], [1], [0, 0, 1, 1], [], []>} : vector<16x32xbf16>, vector<32x96xbf16>, vector<16x96xf32> -> vector<16x96xf32>
    %c14 = arith.constant 14 : index
    %c0_132 = arith.constant 0 : index
    %395 = vector.load %arg5[%c14, %c0_132] : memref<35x128xf32, #tpu.memory_space<vmem>>, vector<1x96xf32>
    %396 = vector.broadcast %395 : vector<1x96xf32> to vector<16x96xf32>
    %397 = arith.addf %394, %396 : vector<16x96xf32>
    %398 = vector.extract_strided_slice %397 {offsets = [0, 0], sizes = [16, 8], strides = [1, 1]} : vector<16x96xf32> to vector<16x8xf32>
    %399 = arith.truncf %398 : vector<16x8xf32> to vector<16x8xbf16>
    %400 = vector.extract_strided_slice %397 {offsets = [0, 32], sizes = [16, 8], strides = [1, 1]} : vector<16x96xf32> to vector<16x8xf32>
    %401 = arith.truncf %400 : vector<16x8xf32> to vector<16x8xbf16>
    %402 = vector.extract_strided_slice %397 {offsets = [0, 64], sizes = [16, 8], strides = [1, 1]} : vector<16x96xf32> to vector<16x8xf32>
    %403 = arith.truncf %402 : vector<16x8xf32> to vector<16x8xbf16>
    %cst_133 = arith.constant dense<0.000000e+00> : vector<16x16xf32>
    %404 = tpu.matmul %399, %401, %cst_133 {dimension_numbers = #tpu.dot_dimension_numbers<[1], [1], [0], [0], [0, 0, 1, 0], [], []>} : vector<16x8xbf16>, vector<16x8xbf16>, vector<16x16xf32> -> vector<16x16xf32>
    %405 = arith.addf %404, %0 : vector<16x16xf32>
    %cst_134 = arith.constant dense<0xFF800000> : vector<16xf32>
    %406 = vector.multi_reduction <maximumf>, %405, %cst_134 [1] : vector<16x16xf32> to vector<16xf32>
    %407 = vector.shape_cast %406 : vector<16xf32> to vector<16x1xf32>
    %408 = vector.broadcast %407 : vector<16x1xf32> to vector<16x16xf32>
    %409 = arith.subf %405, %408 : vector<16x16xf32>
    %410 = math.exp %409 : vector<16x16xf32>
    %cst_135 = arith.constant dense<0.000000e+00> : vector<16xf32>
    %411 = vector.multi_reduction <add>, %410, %cst_135 [1] : vector<16x16xf32> to vector<16xf32>
    %412 = vector.shape_cast %411 : vector<16xf32> to vector<16x1xf32>
    %413 = vector.broadcast %412 : vector<16x1xf32> to vector<16x16xf32>
    %414 = arith.divf %410, %413 : vector<16x16xf32>
    %415 = arith.truncf %414 : vector<16x16xf32> to vector<16x16xbf16>
    %cst_136 = arith.constant dense<0.000000e+00> : vector<16x8xf32>
    %416 = tpu.matmul %415, %403, %cst_136 {dimension_numbers = #tpu.dot_dimension_numbers<[1], [0], [0], [1], [0, 0, 1, 1], [], []>} : vector<16x16xbf16>, vector<16x8xbf16>, vector<16x8xf32> -> vector<16x8xf32>
    %417 = vector.extract_strided_slice %397 {offsets = [0, 8], sizes = [16, 8], strides = [1, 1]} : vector<16x96xf32> to vector<16x8xf32>
    %418 = arith.truncf %417 : vector<16x8xf32> to vector<16x8xbf16>
    %419 = vector.extract_strided_slice %397 {offsets = [0, 40], sizes = [16, 8], strides = [1, 1]} : vector<16x96xf32> to vector<16x8xf32>
    %420 = arith.truncf %419 : vector<16x8xf32> to vector<16x8xbf16>
    %421 = vector.extract_strided_slice %397 {offsets = [0, 72], sizes = [16, 8], strides = [1, 1]} : vector<16x96xf32> to vector<16x8xf32>
    %422 = arith.truncf %421 : vector<16x8xf32> to vector<16x8xbf16>
    %cst_137 = arith.constant dense<0.000000e+00> : vector<16x16xf32>
    %423 = tpu.matmul %418, %420, %cst_137 {dimension_numbers = #tpu.dot_dimension_numbers<[1], [1], [0], [0], [0, 0, 1, 0], [], []>} : vector<16x8xbf16>, vector<16x8xbf16>, vector<16x16xf32> -> vector<16x16xf32>
    %424 = arith.addf %423, %0 : vector<16x16xf32>
    %cst_138 = arith.constant dense<0xFF800000> : vector<16xf32>
    %425 = vector.multi_reduction <maximumf>, %424, %cst_138 [1] : vector<16x16xf32> to vector<16xf32>
    %426 = vector.shape_cast %425 : vector<16xf32> to vector<16x1xf32>
    %427 = vector.broadcast %426 : vector<16x1xf32> to vector<16x16xf32>
    %428 = arith.subf %424, %427 : vector<16x16xf32>
    %429 = math.exp %428 : vector<16x16xf32>
    %cst_139 = arith.constant dense<0.000000e+00> : vector<16xf32>
    %430 = vector.multi_reduction <add>, %429, %cst_139 [1] : vector<16x16xf32> to vector<16xf32>
    %431 = vector.shape_cast %430 : vector<16xf32> to vector<16x1xf32>
    %432 = vector.broadcast %431 : vector<16x1xf32> to vector<16x16xf32>
    %433 = arith.divf %429, %432 : vector<16x16xf32>
    %434 = arith.truncf %433 : vector<16x16xf32> to vector<16x16xbf16>
    %cst_140 = arith.constant dense<0.000000e+00> : vector<16x8xf32>
    %435 = tpu.matmul %434, %422, %cst_140 {dimension_numbers = #tpu.dot_dimension_numbers<[1], [0], [0], [1], [0, 0, 1, 1], [], []>} : vector<16x16xbf16>, vector<16x8xbf16>, vector<16x8xf32> -> vector<16x8xf32>
    %436 = vector.extract_strided_slice %397 {offsets = [0, 16], sizes = [16, 8], strides = [1, 1]} : vector<16x96xf32> to vector<16x8xf32>
    %437 = arith.truncf %436 : vector<16x8xf32> to vector<16x8xbf16>
    %438 = vector.extract_strided_slice %397 {offsets = [0, 48], sizes = [16, 8], strides = [1, 1]} : vector<16x96xf32> to vector<16x8xf32>
    %439 = arith.truncf %438 : vector<16x8xf32> to vector<16x8xbf16>
    %440 = vector.extract_strided_slice %397 {offsets = [0, 80], sizes = [16, 8], strides = [1, 1]} : vector<16x96xf32> to vector<16x8xf32>
    %441 = arith.truncf %440 : vector<16x8xf32> to vector<16x8xbf16>
    %cst_141 = arith.constant dense<0.000000e+00> : vector<16x16xf32>
    %442 = tpu.matmul %437, %439, %cst_141 {dimension_numbers = #tpu.dot_dimension_numbers<[1], [1], [0], [0], [0, 0, 1, 0], [], []>} : vector<16x8xbf16>, vector<16x8xbf16>, vector<16x16xf32> -> vector<16x16xf32>
    %443 = arith.addf %442, %0 : vector<16x16xf32>
    %cst_142 = arith.constant dense<0xFF800000> : vector<16xf32>
    %444 = vector.multi_reduction <maximumf>, %443, %cst_142 [1] : vector<16x16xf32> to vector<16xf32>
    %445 = vector.shape_cast %444 : vector<16xf32> to vector<16x1xf32>
    %446 = vector.broadcast %445 : vector<16x1xf32> to vector<16x16xf32>
    %447 = arith.subf %443, %446 : vector<16x16xf32>
    %448 = math.exp %447 : vector<16x16xf32>
    %cst_143 = arith.constant dense<0.000000e+00> : vector<16xf32>
    %449 = vector.multi_reduction <add>, %448, %cst_143 [1] : vector<16x16xf32> to vector<16xf32>
    %450 = vector.shape_cast %449 : vector<16xf32> to vector<16x1xf32>
    %451 = vector.broadcast %450 : vector<16x1xf32> to vector<16x16xf32>
    %452 = arith.divf %448, %451 : vector<16x16xf32>
    %453 = arith.truncf %452 : vector<16x16xf32> to vector<16x16xbf16>
    %cst_144 = arith.constant dense<0.000000e+00> : vector<16x8xf32>
    %454 = tpu.matmul %453, %441, %cst_144 {dimension_numbers = #tpu.dot_dimension_numbers<[1], [0], [0], [1], [0, 0, 1, 1], [], []>} : vector<16x16xbf16>, vector<16x8xbf16>, vector<16x8xf32> -> vector<16x8xf32>
    %455 = vector.extract_strided_slice %397 {offsets = [0, 24], sizes = [16, 8], strides = [1, 1]} : vector<16x96xf32> to vector<16x8xf32>
    %456 = arith.truncf %455 : vector<16x8xf32> to vector<16x8xbf16>
    %457 = vector.extract_strided_slice %397 {offsets = [0, 56], sizes = [16, 8], strides = [1, 1]} : vector<16x96xf32> to vector<16x8xf32>
    %458 = arith.truncf %457 : vector<16x8xf32> to vector<16x8xbf16>
    %459 = vector.extract_strided_slice %397 {offsets = [0, 88], sizes = [16, 8], strides = [1, 1]} : vector<16x96xf32> to vector<16x8xf32>
    %460 = arith.truncf %459 : vector<16x8xf32> to vector<16x8xbf16>
    %cst_145 = arith.constant dense<0.000000e+00> : vector<16x16xf32>
    %461 = tpu.matmul %456, %458, %cst_145 {dimension_numbers = #tpu.dot_dimension_numbers<[1], [1], [0], [0], [0, 0, 1, 0], [], []>} : vector<16x8xbf16>, vector<16x8xbf16>, vector<16x16xf32> -> vector<16x16xf32>
    %462 = arith.addf %461, %0 : vector<16x16xf32>
    %cst_146 = arith.constant dense<0xFF800000> : vector<16xf32>
    %463 = vector.multi_reduction <maximumf>, %462, %cst_146 [1] : vector<16x16xf32> to vector<16xf32>
    %464 = vector.shape_cast %463 : vector<16xf32> to vector<16x1xf32>
    %465 = vector.broadcast %464 : vector<16x1xf32> to vector<16x16xf32>
    %466 = arith.subf %462, %465 : vector<16x16xf32>
    %467 = math.exp %466 : vector<16x16xf32>
    %cst_147 = arith.constant dense<0.000000e+00> : vector<16xf32>
    %468 = vector.multi_reduction <add>, %467, %cst_147 [1] : vector<16x16xf32> to vector<16xf32>
    %469 = vector.shape_cast %468 : vector<16xf32> to vector<16x1xf32>
    %470 = vector.broadcast %469 : vector<16x1xf32> to vector<16x16xf32>
    %471 = arith.divf %467, %470 : vector<16x16xf32>
    %472 = arith.truncf %471 : vector<16x16xf32> to vector<16x16xbf16>
    %cst_148 = arith.constant dense<0.000000e+00> : vector<16x8xf32>
    %473 = tpu.matmul %472, %460, %cst_148 {dimension_numbers = #tpu.dot_dimension_numbers<[1], [0], [0], [1], [0, 0, 1, 1], [], []>} : vector<16x16xbf16>, vector<16x8xbf16>, vector<16x8xf32> -> vector<16x8xf32>
    %474 = tpu.concatenate %416, %435, %454, %473 in 1 : vector<16x8xf32>, vector<16x8xf32>, vector<16x8xf32>, vector<16x8xf32> -> vector<16x32xf32>
    %c0_149 = arith.constant 0 : index
    %c768 = arith.constant 768 : index
    %475 = vector.load %arg3[%c0_149, %c768] : memref<32x2176xbf16, #tpu.memory_space<vmem>>, vector<32x32xbf16>
    %476 = arith.truncf %474 : vector<16x32xf32> to vector<16x32xbf16>
    %cst_150 = arith.constant dense<0.000000e+00> : vector<16x32xf32>
    %477 = tpu.matmul %476, %475, %cst_150 {dimension_numbers = #tpu.dot_dimension_numbers<[1], [0], [0], [1], [0, 0, 1, 1], [], []>} : vector<16x32xbf16>, vector<32x32xbf16>, vector<16x32xf32> -> vector<16x32xf32>
    %c15 = arith.constant 15 : index
    %c0_151 = arith.constant 0 : index
    %478 = vector.load %arg5[%c15, %c0_151] : memref<35x128xf32, #tpu.memory_space<vmem>>, vector<1x32xf32>
    %479 = vector.broadcast %478 : vector<1x32xf32> to vector<16x32xf32>
    %480 = arith.addf %477, %479 : vector<16x32xf32>
    %481 = arith.addf %391, %480 : vector<16x32xf32>
    %cst_152 = arith.constant dense<0.000000e+00> : vector<16xf32>
    %482 = vector.multi_reduction <add>, %481, %cst_152 [1] : vector<16x32xf32> to vector<16xf32>
    %483 = vector.shape_cast %482 : vector<16xf32> to vector<16x1xf32>
    %cst_153 = arith.constant 3.200000e+01 : f32
    %484 = vector.broadcast %cst_153 : f32 to vector<16x1xf32>
    %485 = arith.divf %483, %484 : vector<16x1xf32>
    %486 = vector.broadcast %485 : vector<16x1xf32> to vector<16x32xf32>
    %487 = arith.subf %481, %486 : vector<16x32xf32>
    %488 = arith.mulf %487, %487 : vector<16x32xf32>
    %cst_154 = arith.constant dense<0.000000e+00> : vector<16xf32>
    %489 = vector.multi_reduction <add>, %488, %cst_154 [1] : vector<16x32xf32> to vector<16xf32>
    %490 = vector.shape_cast %489 : vector<16xf32> to vector<16x1xf32>
    %cst_155 = arith.constant 3.200000e+01 : f32
    %491 = vector.broadcast %cst_155 : f32 to vector<16x1xf32>
    %492 = arith.divf %490, %491 : vector<16x1xf32>
    %493 = vector.broadcast %485 : vector<16x1xf32> to vector<16x32xf32>
    %494 = arith.subf %481, %493 : vector<16x32xf32>
    %cst_156 = arith.constant 9.99999996E-13 : f32
    %495 = vector.broadcast %cst_156 : f32 to vector<16x1xf32>
    %496 = arith.addf %492, %495 : vector<16x1xf32>
    %497 = math.rsqrt %496 : vector<16x1xf32>
    %498 = vector.broadcast %497 : vector<16x1xf32> to vector<16x32xf32>
    %499 = arith.mulf %494, %498 : vector<16x32xf32>
    %c16 = arith.constant 16 : index
    %c0_157 = arith.constant 0 : index
    %500 = vector.load %arg5[%c16, %c0_157] : memref<35x128xf32, #tpu.memory_space<vmem>>, vector<1x32xf32>
    %501 = vector.broadcast %500 : vector<1x32xf32> to vector<16x32xf32>
    %502 = arith.mulf %499, %501 : vector<16x32xf32>
    %c17 = arith.constant 17 : index
    %c0_158 = arith.constant 0 : index
    %503 = vector.load %arg5[%c17, %c0_158] : memref<35x128xf32, #tpu.memory_space<vmem>>, vector<1x32xf32>
    %504 = vector.broadcast %503 : vector<1x32xf32> to vector<16x32xf32>
    %505 = arith.addf %502, %504 : vector<16x32xf32>
    %c0_159 = arith.constant 0 : index
    %c896 = arith.constant 896 : index
    %506 = vector.load %arg3[%c0_159, %c896] : memref<32x2176xbf16, #tpu.memory_space<vmem>>, vector<32x64xbf16>
    %507 = arith.truncf %505 : vector<16x32xf32> to vector<16x32xbf16>
    %cst_160 = arith.constant dense<0.000000e+00> : vector<16x64xf32>
    %508 = tpu.matmul %507, %506, %cst_160 {dimension_numbers = #tpu.dot_dimension_numbers<[1], [0], [0], [1], [0, 0, 1, 1], [], []>} : vector<16x32xbf16>, vector<32x64xbf16>, vector<16x64xf32> -> vector<16x64xf32>
    %c18 = arith.constant 18 : index
    %c0_161 = arith.constant 0 : index
    %509 = vector.load %arg5[%c18, %c0_161] : memref<35x128xf32, #tpu.memory_space<vmem>>, vector<1x64xf32>
    %510 = vector.broadcast %509 : vector<1x64xf32> to vector<16x64xf32>
    %511 = arith.addf %508, %510 : vector<16x64xf32>
    %cst_162 = arith.constant 5.000000e-01 : f32
    %512 = vector.broadcast %cst_162 : f32 to vector<16x64xf32>
    %513 = arith.mulf %512, %511 : vector<16x64xf32>
    %cst_163 = arith.constant 4.471500e-02 : f32
    %514 = vector.broadcast %cst_163 : f32 to vector<16x64xf32>
    %515 = arith.mulf %514, %511 : vector<16x64xf32>
    %516 = arith.mulf %515, %511 : vector<16x64xf32>
    %517 = arith.mulf %516, %511 : vector<16x64xf32>
    %518 = arith.addf %511, %517 : vector<16x64xf32>
    %cst_164 = arith.constant 0.797884583 : f32
    %519 = vector.broadcast %cst_164 : f32 to vector<16x64xf32>
    %520 = arith.mulf %519, %518 : vector<16x64xf32>
    %521 = math.tanh %520 : vector<16x64xf32>
    %cst_165 = arith.constant 1.000000e+00 : f32
    %522 = vector.broadcast %cst_165 : f32 to vector<16x64xf32>
    %523 = arith.addf %522, %521 : vector<16x64xf32>
    %524 = arith.mulf %513, %523 : vector<16x64xf32>
    %c0_166 = arith.constant 0 : index
    %c128_167 = arith.constant 128 : index
    %525 = vector.load %arg4[%c0_166, %c128_167] : memref<64x256xbf16, #tpu.memory_space<vmem>>, vector<64x32xbf16>
    %526 = arith.truncf %524 : vector<16x64xf32> to vector<16x64xbf16>
    %cst_168 = arith.constant dense<0.000000e+00> : vector<16x32xf32>
    %527 = tpu.matmul %526, %525, %cst_168 {dimension_numbers = #tpu.dot_dimension_numbers<[1], [0], [0], [1], [0, 0, 1, 1], [], []>} : vector<16x64xbf16>, vector<64x32xbf16>, vector<16x32xf32> -> vector<16x32xf32>
    %c19 = arith.constant 19 : index
    %c0_169 = arith.constant 0 : index
    %528 = vector.load %arg5[%c19, %c0_169] : memref<35x128xf32, #tpu.memory_space<vmem>>, vector<1x32xf32>
    %529 = vector.broadcast %528 : vector<1x32xf32> to vector<16x32xf32>
    %530 = arith.addf %527, %529 : vector<16x32xf32>
    %531 = arith.addf %505, %530 : vector<16x32xf32>
    %cst_170 = arith.constant dense<0.000000e+00> : vector<16xf32>
    %532 = vector.multi_reduction <add>, %531, %cst_170 [1] : vector<16x32xf32> to vector<16xf32>
    %533 = vector.shape_cast %532 : vector<16xf32> to vector<16x1xf32>
    %cst_171 = arith.constant 3.200000e+01 : f32
    %534 = vector.broadcast %cst_171 : f32 to vector<16x1xf32>
    %535 = arith.divf %533, %534 : vector<16x1xf32>
    %536 = vector.broadcast %535 : vector<16x1xf32> to vector<16x32xf32>
    %537 = arith.subf %531, %536 : vector<16x32xf32>
    %538 = arith.mulf %537, %537 : vector<16x32xf32>
    %cst_172 = arith.constant dense<0.000000e+00> : vector<16xf32>
    %539 = vector.multi_reduction <add>, %538, %cst_172 [1] : vector<16x32xf32> to vector<16xf32>
    %540 = vector.shape_cast %539 : vector<16xf32> to vector<16x1xf32>
    %cst_173 = arith.constant 3.200000e+01 : f32
    %541 = vector.broadcast %cst_173 : f32 to vector<16x1xf32>
    %542 = arith.divf %540, %541 : vector<16x1xf32>
    %543 = vector.broadcast %535 : vector<16x1xf32> to vector<16x32xf32>
    %544 = arith.subf %531, %543 : vector<16x32xf32>
    %cst_174 = arith.constant 9.99999996E-13 : f32
    %545 = vector.broadcast %cst_174 : f32 to vector<16x1xf32>
    %546 = arith.addf %542, %545 : vector<16x1xf32>
    %547 = math.rsqrt %546 : vector<16x1xf32>
    %548 = vector.broadcast %547 : vector<16x1xf32> to vector<16x32xf32>
    %549 = arith.mulf %544, %548 : vector<16x32xf32>
    %c20 = arith.constant 20 : index
    %c0_175 = arith.constant 0 : index
    %550 = vector.load %arg5[%c20, %c0_175] : memref<35x128xf32, #tpu.memory_space<vmem>>, vector<1x32xf32>
    %551 = vector.broadcast %550 : vector<1x32xf32> to vector<16x32xf32>
    %552 = arith.mulf %549, %551 : vector<16x32xf32>
    %c21 = arith.constant 21 : index
    %c0_176 = arith.constant 0 : index
    %553 = vector.load %arg5[%c21, %c0_176] : memref<35x128xf32, #tpu.memory_space<vmem>>, vector<1x32xf32>
    %554 = vector.broadcast %553 : vector<1x32xf32> to vector<16x32xf32>
    %555 = arith.addf %552, %554 : vector<16x32xf32>
    %c0_177 = arith.constant 0 : index
    %c640_178 = arith.constant 640 : index
    %556 = vector.load %arg3[%c0_177, %c640_178] : memref<32x2176xbf16, #tpu.memory_space<vmem>>, vector<32x96xbf16>
    %557 = arith.truncf %555 : vector<16x32xf32> to vector<16x32xbf16>
    %cst_179 = arith.constant dense<0.000000e+00> : vector<16x96xf32>
    %558 = tpu.matmul %557, %556, %cst_179 {dimension_numbers = #tpu.dot_dimension_numbers<[1], [0], [0], [1], [0, 0, 1, 1], [], []>} : vector<16x32xbf16>, vector<32x96xbf16>, vector<16x96xf32> -> vector<16x96xf32>
    %c14_180 = arith.constant 14 : index
    %c0_181 = arith.constant 0 : index
    %559 = vector.load %arg5[%c14_180, %c0_181] : memref<35x128xf32, #tpu.memory_space<vmem>>, vector<1x96xf32>
    %560 = vector.broadcast %559 : vector<1x96xf32> to vector<16x96xf32>
    %561 = arith.addf %558, %560 : vector<16x96xf32>
    %562 = vector.extract_strided_slice %561 {offsets = [0, 0], sizes = [16, 8], strides = [1, 1]} : vector<16x96xf32> to vector<16x8xf32>
    %563 = arith.truncf %562 : vector<16x8xf32> to vector<16x8xbf16>
    %564 = vector.extract_strided_slice %561 {offsets = [0, 32], sizes = [16, 8], strides = [1, 1]} : vector<16x96xf32> to vector<16x8xf32>
    %565 = arith.truncf %564 : vector<16x8xf32> to vector<16x8xbf16>
    %566 = vector.extract_strided_slice %561 {offsets = [0, 64], sizes = [16, 8], strides = [1, 1]} : vector<16x96xf32> to vector<16x8xf32>
    %567 = arith.truncf %566 : vector<16x8xf32> to vector<16x8xbf16>
    %cst_182 = arith.constant dense<0.000000e+00> : vector<16x16xf32>
    %568 = tpu.matmul %563, %565, %cst_182 {dimension_numbers = #tpu.dot_dimension_numbers<[1], [1], [0], [0], [0, 0, 1, 0], [], []>} : vector<16x8xbf16>, vector<16x8xbf16>, vector<16x16xf32> -> vector<16x16xf32>
    %569 = arith.addf %568, %0 : vector<16x16xf32>
    %cst_183 = arith.constant dense<0xFF800000> : vector<16xf32>
    %570 = vector.multi_reduction <maximumf>, %569, %cst_183 [1] : vector<16x16xf32> to vector<16xf32>
    %571 = vector.shape_cast %570 : vector<16xf32> to vector<16x1xf32>
    %572 = vector.broadcast %571 : vector<16x1xf32> to vector<16x16xf32>
    %573 = arith.subf %569, %572 : vector<16x16xf32>
    %574 = math.exp %573 : vector<16x16xf32>
    %cst_184 = arith.constant dense<0.000000e+00> : vector<16xf32>
    %575 = vector.multi_reduction <add>, %574, %cst_184 [1] : vector<16x16xf32> to vector<16xf32>
    %576 = vector.shape_cast %575 : vector<16xf32> to vector<16x1xf32>
    %577 = vector.broadcast %576 : vector<16x1xf32> to vector<16x16xf32>
    %578 = arith.divf %574, %577 : vector<16x16xf32>
    %579 = arith.truncf %578 : vector<16x16xf32> to vector<16x16xbf16>
    %cst_185 = arith.constant dense<0.000000e+00> : vector<16x8xf32>
    %580 = tpu.matmul %579, %567, %cst_185 {dimension_numbers = #tpu.dot_dimension_numbers<[1], [0], [0], [1], [0, 0, 1, 1], [], []>} : vector<16x16xbf16>, vector<16x8xbf16>, vector<16x8xf32> -> vector<16x8xf32>
    %581 = vector.extract_strided_slice %561 {offsets = [0, 8], sizes = [16, 8], strides = [1, 1]} : vector<16x96xf32> to vector<16x8xf32>
    %582 = arith.truncf %581 : vector<16x8xf32> to vector<16x8xbf16>
    %583 = vector.extract_strided_slice %561 {offsets = [0, 40], sizes = [16, 8], strides = [1, 1]} : vector<16x96xf32> to vector<16x8xf32>
    %584 = arith.truncf %583 : vector<16x8xf32> to vector<16x8xbf16>
    %585 = vector.extract_strided_slice %561 {offsets = [0, 72], sizes = [16, 8], strides = [1, 1]} : vector<16x96xf32> to vector<16x8xf32>
    %586 = arith.truncf %585 : vector<16x8xf32> to vector<16x8xbf16>
    %cst_186 = arith.constant dense<0.000000e+00> : vector<16x16xf32>
    %587 = tpu.matmul %582, %584, %cst_186 {dimension_numbers = #tpu.dot_dimension_numbers<[1], [1], [0], [0], [0, 0, 1, 0], [], []>} : vector<16x8xbf16>, vector<16x8xbf16>, vector<16x16xf32> -> vector<16x16xf32>
    %588 = arith.addf %587, %0 : vector<16x16xf32>
    %cst_187 = arith.constant dense<0xFF800000> : vector<16xf32>
    %589 = vector.multi_reduction <maximumf>, %588, %cst_187 [1] : vector<16x16xf32> to vector<16xf32>
    %590 = vector.shape_cast %589 : vector<16xf32> to vector<16x1xf32>
    %591 = vector.broadcast %590 : vector<16x1xf32> to vector<16x16xf32>
    %592 = arith.subf %588, %591 : vector<16x16xf32>
    %593 = math.exp %592 : vector<16x16xf32>
    %cst_188 = arith.constant dense<0.000000e+00> : vector<16xf32>
    %594 = vector.multi_reduction <add>, %593, %cst_188 [1] : vector<16x16xf32> to vector<16xf32>
    %595 = vector.shape_cast %594 : vector<16xf32> to vector<16x1xf32>
    %596 = vector.broadcast %595 : vector<16x1xf32> to vector<16x16xf32>
    %597 = arith.divf %593, %596 : vector<16x16xf32>
    %598 = arith.truncf %597 : vector<16x16xf32> to vector<16x16xbf16>
    %cst_189 = arith.constant dense<0.000000e+00> : vector<16x8xf32>
    %599 = tpu.matmul %598, %586, %cst_189 {dimension_numbers = #tpu.dot_dimension_numbers<[1], [0], [0], [1], [0, 0, 1, 1], [], []>} : vector<16x16xbf16>, vector<16x8xbf16>, vector<16x8xf32> -> vector<16x8xf32>
    %600 = vector.extract_strided_slice %561 {offsets = [0, 16], sizes = [16, 8], strides = [1, 1]} : vector<16x96xf32> to vector<16x8xf32>
    %601 = arith.truncf %600 : vector<16x8xf32> to vector<16x8xbf16>
    %602 = vector.extract_strided_slice %561 {offsets = [0, 48], sizes = [16, 8], strides = [1, 1]} : vector<16x96xf32> to vector<16x8xf32>
    %603 = arith.truncf %602 : vector<16x8xf32> to vector<16x8xbf16>
    %604 = vector.extract_strided_slice %561 {offsets = [0, 80], sizes = [16, 8], strides = [1, 1]} : vector<16x96xf32> to vector<16x8xf32>
    %605 = arith.truncf %604 : vector<16x8xf32> to vector<16x8xbf16>
    %cst_190 = arith.constant dense<0.000000e+00> : vector<16x16xf32>
    %606 = tpu.matmul %601, %603, %cst_190 {dimension_numbers = #tpu.dot_dimension_numbers<[1], [1], [0], [0], [0, 0, 1, 0], [], []>} : vector<16x8xbf16>, vector<16x8xbf16>, vector<16x16xf32> -> vector<16x16xf32>
    %607 = arith.addf %606, %0 : vector<16x16xf32>
    %cst_191 = arith.constant dense<0xFF800000> : vector<16xf32>
    %608 = vector.multi_reduction <maximumf>, %607, %cst_191 [1] : vector<16x16xf32> to vector<16xf32>
    %609 = vector.shape_cast %608 : vector<16xf32> to vector<16x1xf32>
    %610 = vector.broadcast %609 : vector<16x1xf32> to vector<16x16xf32>
    %611 = arith.subf %607, %610 : vector<16x16xf32>
    %612 = math.exp %611 : vector<16x16xf32>
    %cst_192 = arith.constant dense<0.000000e+00> : vector<16xf32>
    %613 = vector.multi_reduction <add>, %612, %cst_192 [1] : vector<16x16xf32> to vector<16xf32>
    %614 = vector.shape_cast %613 : vector<16xf32> to vector<16x1xf32>
    %615 = vector.broadcast %614 : vector<16x1xf32> to vector<16x16xf32>
    %616 = arith.divf %612, %615 : vector<16x16xf32>
    %617 = arith.truncf %616 : vector<16x16xf32> to vector<16x16xbf16>
    %cst_193 = arith.constant dense<0.000000e+00> : vector<16x8xf32>
    %618 = tpu.matmul %617, %605, %cst_193 {dimension_numbers = #tpu.dot_dimension_numbers<[1], [0], [0], [1], [0, 0, 1, 1], [], []>} : vector<16x16xbf16>, vector<16x8xbf16>, vector<16x8xf32> -> vector<16x8xf32>
    %619 = vector.extract_strided_slice %561 {offsets = [0, 24], sizes = [16, 8], strides = [1, 1]} : vector<16x96xf32> to vector<16x8xf32>
    %620 = arith.truncf %619 : vector<16x8xf32> to vector<16x8xbf16>
    %621 = vector.extract_strided_slice %561 {offsets = [0, 56], sizes = [16, 8], strides = [1, 1]} : vector<16x96xf32> to vector<16x8xf32>
    %622 = arith.truncf %621 : vector<16x8xf32> to vector<16x8xbf16>
    %623 = vector.extract_strided_slice %561 {offsets = [0, 88], sizes = [16, 8], strides = [1, 1]} : vector<16x96xf32> to vector<16x8xf32>
    %624 = arith.truncf %623 : vector<16x8xf32> to vector<16x8xbf16>
    %cst_194 = arith.constant dense<0.000000e+00> : vector<16x16xf32>
    %625 = tpu.matmul %620, %622, %cst_194 {dimension_numbers = #tpu.dot_dimension_numbers<[1], [1], [0], [0], [0, 0, 1, 0], [], []>} : vector<16x8xbf16>, vector<16x8xbf16>, vector<16x16xf32> -> vector<16x16xf32>
    %626 = arith.addf %625, %0 : vector<16x16xf32>
    %cst_195 = arith.constant dense<0xFF800000> : vector<16xf32>
    %627 = vector.multi_reduction <maximumf>, %626, %cst_195 [1] : vector<16x16xf32> to vector<16xf32>
    %628 = vector.shape_cast %627 : vector<16xf32> to vector<16x1xf32>
    %629 = vector.broadcast %628 : vector<16x1xf32> to vector<16x16xf32>
    %630 = arith.subf %626, %629 : vector<16x16xf32>
    %631 = math.exp %630 : vector<16x16xf32>
    %cst_196 = arith.constant dense<0.000000e+00> : vector<16xf32>
    %632 = vector.multi_reduction <add>, %631, %cst_196 [1] : vector<16x16xf32> to vector<16xf32>
    %633 = vector.shape_cast %632 : vector<16xf32> to vector<16x1xf32>
    %634 = vector.broadcast %633 : vector<16x1xf32> to vector<16x16xf32>
    %635 = arith.divf %631, %634 : vector<16x16xf32>
    %636 = arith.truncf %635 : vector<16x16xf32> to vector<16x16xbf16>
    %cst_197 = arith.constant dense<0.000000e+00> : vector<16x8xf32>
    %637 = tpu.matmul %636, %624, %cst_197 {dimension_numbers = #tpu.dot_dimension_numbers<[1], [0], [0], [1], [0, 0, 1, 1], [], []>} : vector<16x16xbf16>, vector<16x8xbf16>, vector<16x8xf32> -> vector<16x8xf32>
    %638 = tpu.concatenate %580, %599, %618, %637 in 1 : vector<16x8xf32>, vector<16x8xf32>, vector<16x8xf32>, vector<16x8xf32> -> vector<16x32xf32>
    %c0_198 = arith.constant 0 : index
    %c768_199 = arith.constant 768 : index
    %639 = vector.load %arg3[%c0_198, %c768_199] : memref<32x2176xbf16, #tpu.memory_space<vmem>>, vector<32x32xbf16>
    %640 = arith.truncf %638 : vector<16x32xf32> to vector<16x32xbf16>
    %cst_200 = arith.constant dense<0.000000e+00> : vector<16x32xf32>
    %641 = tpu.matmul %640, %639, %cst_200 {dimension_numbers = #tpu.dot_dimension_numbers<[1], [0], [0], [1], [0, 0, 1, 1], [], []>} : vector<16x32xbf16>, vector<32x32xbf16>, vector<16x32xf32> -> vector<16x32xf32>
    %c15_201 = arith.constant 15 : index
    %c0_202 = arith.constant 0 : index
    %642 = vector.load %arg5[%c15_201, %c0_202] : memref<35x128xf32, #tpu.memory_space<vmem>>, vector<1x32xf32>
    %643 = vector.broadcast %642 : vector<1x32xf32> to vector<16x32xf32>
    %644 = arith.addf %641, %643 : vector<16x32xf32>
    %645 = arith.addf %555, %644 : vector<16x32xf32>
    %cst_203 = arith.constant dense<0.000000e+00> : vector<16xf32>
    %646 = vector.multi_reduction <add>, %645, %cst_203 [1] : vector<16x32xf32> to vector<16xf32>
    %647 = vector.shape_cast %646 : vector<16xf32> to vector<16x1xf32>
    %cst_204 = arith.constant 3.200000e+01 : f32
    %648 = vector.broadcast %cst_204 : f32 to vector<16x1xf32>
    %649 = arith.divf %647, %648 : vector<16x1xf32>
    %650 = vector.broadcast %649 : vector<16x1xf32> to vector<16x32xf32>
    %651 = arith.subf %645, %650 : vector<16x32xf32>
    %652 = arith.mulf %651, %651 : vector<16x32xf32>
    %cst_205 = arith.constant dense<0.000000e+00> : vector<16xf32>
    %653 = vector.multi_reduction <add>, %652, %cst_205 [1] : vector<16x32xf32> to vector<16xf32>
    %654 = vector.shape_cast %653 : vector<16xf32> to vector<16x1xf32>
    %cst_206 = arith.constant 3.200000e+01 : f32
    %655 = vector.broadcast %cst_206 : f32 to vector<16x1xf32>
    %656 = arith.divf %654, %655 : vector<16x1xf32>
    %657 = vector.broadcast %649 : vector<16x1xf32> to vector<16x32xf32>
    %658 = arith.subf %645, %657 : vector<16x32xf32>
    %cst_207 = arith.constant 9.99999996E-13 : f32
    %659 = vector.broadcast %cst_207 : f32 to vector<16x1xf32>
    %660 = arith.addf %656, %659 : vector<16x1xf32>
    %661 = math.rsqrt %660 : vector<16x1xf32>
    %662 = vector.broadcast %661 : vector<16x1xf32> to vector<16x32xf32>
    %663 = arith.mulf %658, %662 : vector<16x32xf32>
    %c16_208 = arith.constant 16 : index
    %c0_209 = arith.constant 0 : index
    %664 = vector.load %arg5[%c16_208, %c0_209] : memref<35x128xf32, #tpu.memory_space<vmem>>, vector<1x32xf32>
    %665 = vector.broadcast %664 : vector<1x32xf32> to vector<16x32xf32>
    %666 = arith.mulf %663, %665 : vector<16x32xf32>
    %c17_210 = arith.constant 17 : index
    %c0_211 = arith.constant 0 : index
    %667 = vector.load %arg5[%c17_210, %c0_211] : memref<35x128xf32, #tpu.memory_space<vmem>>, vector<1x32xf32>
    %668 = vector.broadcast %667 : vector<1x32xf32> to vector<16x32xf32>
    %669 = arith.addf %666, %668 : vector<16x32xf32>
    %c0_212 = arith.constant 0 : index
    %c896_213 = arith.constant 896 : index
    %670 = vector.load %arg3[%c0_212, %c896_213] : memref<32x2176xbf16, #tpu.memory_space<vmem>>, vector<32x64xbf16>
    %671 = arith.truncf %669 : vector<16x32xf32> to vector<16x32xbf16>
    %cst_214 = arith.constant dense<0.000000e+00> : vector<16x64xf32>
    %672 = tpu.matmul %671, %670, %cst_214 {dimension_numbers = #tpu.dot_dimension_numbers<[1], [0], [0], [1], [0, 0, 1, 1], [], []>} : vector<16x32xbf16>, vector<32x64xbf16>, vector<16x64xf32> -> vector<16x64xf32>
    %c18_215 = arith.constant 18 : index
    %c0_216 = arith.constant 0 : index
    %673 = vector.load %arg5[%c18_215, %c0_216] : memref<35x128xf32, #tpu.memory_space<vmem>>, vector<1x64xf32>
    %674 = vector.broadcast %673 : vector<1x64xf32> to vector<16x64xf32>
    %675 = arith.addf %672, %674 : vector<16x64xf32>
    %cst_217 = arith.constant 5.000000e-01 : f32
    %676 = vector.broadcast %cst_217 : f32 to vector<16x64xf32>
    %677 = arith.mulf %676, %675 : vector<16x64xf32>
    %cst_218 = arith.constant 4.471500e-02 : f32
    %678 = vector.broadcast %cst_218 : f32 to vector<16x64xf32>
    %679 = arith.mulf %678, %675 : vector<16x64xf32>
    %680 = arith.mulf %679, %675 : vector<16x64xf32>
    %681 = arith.mulf %680, %675 : vector<16x64xf32>
    %682 = arith.addf %675, %681 : vector<16x64xf32>
    %cst_219 = arith.constant 0.797884583 : f32
    %683 = vector.broadcast %cst_219 : f32 to vector<16x64xf32>
    %684 = arith.mulf %683, %682 : vector<16x64xf32>
    %685 = math.tanh %684 : vector<16x64xf32>
    %cst_220 = arith.constant 1.000000e+00 : f32
    %686 = vector.broadcast %cst_220 : f32 to vector<16x64xf32>
    %687 = arith.addf %686, %685 : vector<16x64xf32>
    %688 = arith.mulf %677, %687 : vector<16x64xf32>
    %c0_221 = arith.constant 0 : index
    %c128_222 = arith.constant 128 : index
    %689 = vector.load %arg4[%c0_221, %c128_222] : memref<64x256xbf16, #tpu.memory_space<vmem>>, vector<64x32xbf16>
    %690 = arith.truncf %688 : vector<16x64xf32> to vector<16x64xbf16>
    %cst_223 = arith.constant dense<0.000000e+00> : vector<16x32xf32>
    %691 = tpu.matmul %690, %689, %cst_223 {dimension_numbers = #tpu.dot_dimension_numbers<[1], [0], [0], [1], [0, 0, 1, 1], [], []>} : vector<16x64xbf16>, vector<64x32xbf16>, vector<16x32xf32> -> vector<16x32xf32>
    %c19_224 = arith.constant 19 : index
    %c0_225 = arith.constant 0 : index
    %692 = vector.load %arg5[%c19_224, %c0_225] : memref<35x128xf32, #tpu.memory_space<vmem>>, vector<1x32xf32>
    %693 = vector.broadcast %692 : vector<1x32xf32> to vector<16x32xf32>
    %694 = arith.addf %691, %693 : vector<16x32xf32>
    %695 = arith.addf %669, %694 : vector<16x32xf32>
    %cst_226 = arith.constant dense<0.000000e+00> : vector<16xf32>
    %696 = vector.multi_reduction <add>, %695, %cst_226 [1] : vector<16x32xf32> to vector<16xf32>
    %697 = vector.shape_cast %696 : vector<16xf32> to vector<16x1xf32>
    %cst_227 = arith.constant 3.200000e+01 : f32
    %698 = vector.broadcast %cst_227 : f32 to vector<16x1xf32>
    %699 = arith.divf %697, %698 : vector<16x1xf32>
    %700 = vector.broadcast %699 : vector<16x1xf32> to vector<16x32xf32>
    %701 = arith.subf %695, %700 : vector<16x32xf32>
    %702 = arith.mulf %701, %701 : vector<16x32xf32>
    %cst_228 = arith.constant dense<0.000000e+00> : vector<16xf32>
    %703 = vector.multi_reduction <add>, %702, %cst_228 [1] : vector<16x32xf32> to vector<16xf32>
    %704 = vector.shape_cast %703 : vector<16xf32> to vector<16x1xf32>
    %cst_229 = arith.constant 3.200000e+01 : f32
    %705 = vector.broadcast %cst_229 : f32 to vector<16x1xf32>
    %706 = arith.divf %704, %705 : vector<16x1xf32>
    %707 = vector.broadcast %699 : vector<16x1xf32> to vector<16x32xf32>
    %708 = arith.subf %695, %707 : vector<16x32xf32>
    %cst_230 = arith.constant 9.99999996E-13 : f32
    %709 = vector.broadcast %cst_230 : f32 to vector<16x1xf32>
    %710 = arith.addf %706, %709 : vector<16x1xf32>
    %711 = math.rsqrt %710 : vector<16x1xf32>
    %712 = vector.broadcast %711 : vector<16x1xf32> to vector<16x32xf32>
    %713 = arith.mulf %708, %712 : vector<16x32xf32>
    %c20_231 = arith.constant 20 : index
    %c0_232 = arith.constant 0 : index
    %714 = vector.load %arg5[%c20_231, %c0_232] : memref<35x128xf32, #tpu.memory_space<vmem>>, vector<1x32xf32>
    %715 = vector.broadcast %714 : vector<1x32xf32> to vector<16x32xf32>
    %716 = arith.mulf %713, %715 : vector<16x32xf32>
    %c21_233 = arith.constant 21 : index
    %c0_234 = arith.constant 0 : index
    %717 = vector.load %arg5[%c21_233, %c0_234] : memref<35x128xf32, #tpu.memory_space<vmem>>, vector<1x32xf32>
    %718 = vector.broadcast %717 : vector<1x32xf32> to vector<16x32xf32>
    %719 = arith.addf %716, %718 : vector<16x32xf32>
    %c0_235 = arith.constant 0 : index
    %c1024 = arith.constant 1024 : index
    %720 = vector.load %arg3[%c0_235, %c1024] : memref<32x2176xbf16, #tpu.memory_space<vmem>>, vector<32x32xbf16>
    %721 = arith.truncf %719 : vector<16x32xf32> to vector<16x32xbf16>
    %cst_236 = arith.constant dense<0.000000e+00> : vector<16x32xf32>
    %722 = tpu.matmul %721, %720, %cst_236 {dimension_numbers = #tpu.dot_dimension_numbers<[1], [0], [0], [1], [0, 0, 1, 1], [], []>} : vector<16x32xbf16>, vector<32x32xbf16>, vector<16x32xf32> -> vector<16x32xf32>
    %c22 = arith.constant 22 : index
    %c0_237 = arith.constant 0 : index
    %723 = vector.load %arg5[%c22, %c0_237] : memref<35x128xf32, #tpu.memory_space<vmem>>, vector<1x32xf32>
    %724 = vector.broadcast %723 : vector<1x32xf32> to vector<16x32xf32>
    %725 = arith.addf %722, %724 : vector<16x32xf32>
    %cst_238 = arith.constant 5.000000e-01 : f32
    %726 = vector.broadcast %cst_238 : f32 to vector<16x32xf32>
    %727 = arith.mulf %726, %725 : vector<16x32xf32>
    %cst_239 = arith.constant 4.471500e-02 : f32
    %728 = vector.broadcast %cst_239 : f32 to vector<16x32xf32>
    %729 = arith.mulf %728, %725 : vector<16x32xf32>
    %730 = arith.mulf %729, %725 : vector<16x32xf32>
    %731 = arith.mulf %730, %725 : vector<16x32xf32>
    %732 = arith.addf %725, %731 : vector<16x32xf32>
    %cst_240 = arith.constant 0.797884583 : f32
    %733 = vector.broadcast %cst_240 : f32 to vector<16x32xf32>
    %734 = arith.mulf %733, %732 : vector<16x32xf32>
    %735 = math.tanh %734 : vector<16x32xf32>
    %cst_241 = arith.constant 1.000000e+00 : f32
    %736 = vector.broadcast %cst_241 : f32 to vector<16x32xf32>
    %737 = arith.addf %736, %735 : vector<16x32xf32>
    %738 = arith.mulf %727, %737 : vector<16x32xf32>
    %cst_242 = arith.constant dense<0.000000e+00> : vector<32xf32>
    %739 = vector.multi_reduction <add>, %738, %cst_242 [0] : vector<16x32xf32> to vector<32xf32>
    %740 = vector.shape_cast %739 : vector<32xf32> to vector<1x32xf32>
    %cst_243 = arith.constant 1.600000e+01 : f32
    %741 = vector.broadcast %cst_243 : f32 to vector<1x32xf32>
    %742 = arith.divf %740, %741 : vector<1x32xf32>
    %743 = vector.broadcast %742 : vector<1x32xf32> to vector<16x32xf32>
    %744 = arith.subf %738, %743 : vector<16x32xf32>
    %745 = arith.mulf %744, %744 : vector<16x32xf32>
    %cst_244 = arith.constant dense<0.000000e+00> : vector<32xf32>
    %746 = vector.multi_reduction <add>, %745, %cst_244 [0] : vector<16x32xf32> to vector<32xf32>
    %747 = vector.shape_cast %746 : vector<32xf32> to vector<1x32xf32>
    %cst_245 = arith.constant 1.600000e+01 : f32
    %748 = vector.broadcast %cst_245 : f32 to vector<1x32xf32>
    %749 = arith.divf %747, %748 : vector<1x32xf32>
    %750 = vector.broadcast %742 : vector<1x32xf32> to vector<16x32xf32>
    %751 = arith.subf %738, %750 : vector<16x32xf32>
    %cst_246 = arith.constant 9.99999974E-6 : f32
    %752 = vector.broadcast %cst_246 : f32 to vector<1x32xf32>
    %753 = arith.addf %749, %752 : vector<1x32xf32>
    %754 = math.rsqrt %753 : vector<1x32xf32>
    %755 = vector.broadcast %754 : vector<1x32xf32> to vector<16x32xf32>
    %756 = arith.mulf %751, %755 : vector<16x32xf32>
    %c23 = arith.constant 23 : index
    %c0_247 = arith.constant 0 : index
    %757 = vector.load %arg5[%c23, %c0_247] : memref<35x128xf32, #tpu.memory_space<vmem>>, vector<1x32xf32>
    %758 = vector.broadcast %757 : vector<1x32xf32> to vector<16x32xf32>
    %759 = arith.mulf %756, %758 : vector<16x32xf32>
    %c24 = arith.constant 24 : index
    %c0_248 = arith.constant 0 : index
    %760 = vector.load %arg5[%c24, %c0_248] : memref<35x128xf32, #tpu.memory_space<vmem>>, vector<1x32xf32>
    %761 = vector.broadcast %760 : vector<1x32xf32> to vector<16x32xf32>
    %762 = arith.addf %759, %761 : vector<16x32xf32>
    %c0_249 = arith.constant 0 : index
    %c1152 = arith.constant 1152 : index
    %763 = vector.load %arg3[%c0_249, %c1152] : memref<32x2176xbf16, #tpu.memory_space<vmem>>, vector<32x32xbf16>
    %764 = arith.truncf %762 : vector<16x32xf32> to vector<16x32xbf16>
    %cst_250 = arith.constant dense<0.000000e+00> : vector<16x32xf32>
    %765 = tpu.matmul %764, %763, %cst_250 {dimension_numbers = #tpu.dot_dimension_numbers<[1], [0], [0], [1], [0, 0, 1, 1], [], []>} : vector<16x32xbf16>, vector<32x32xbf16>, vector<16x32xf32> -> vector<16x32xf32>
    %c25 = arith.constant 25 : index
    %c0_251 = arith.constant 0 : index
    %766 = vector.load %arg5[%c25, %c0_251] : memref<35x128xf32, #tpu.memory_space<vmem>>, vector<1x32xf32>
    %767 = vector.broadcast %766 : vector<1x32xf32> to vector<16x32xf32>
    %768 = arith.addf %765, %767 : vector<16x32xf32>
    %cst_252 = arith.constant 5.000000e-01 : f32
    %769 = vector.broadcast %cst_252 : f32 to vector<16x32xf32>
    %770 = arith.mulf %769, %768 : vector<16x32xf32>
    %cst_253 = arith.constant 4.471500e-02 : f32
    %771 = vector.broadcast %cst_253 : f32 to vector<16x32xf32>
    %772 = arith.mulf %771, %768 : vector<16x32xf32>
    %773 = arith.mulf %772, %768 : vector<16x32xf32>
    %774 = arith.mulf %773, %768 : vector<16x32xf32>
    %775 = arith.addf %768, %774 : vector<16x32xf32>
    %cst_254 = arith.constant 0.797884583 : f32
    %776 = vector.broadcast %cst_254 : f32 to vector<16x32xf32>
    %777 = arith.mulf %776, %775 : vector<16x32xf32>
    %778 = math.tanh %777 : vector<16x32xf32>
    %cst_255 = arith.constant 1.000000e+00 : f32
    %779 = vector.broadcast %cst_255 : f32 to vector<16x32xf32>
    %780 = arith.addf %779, %778 : vector<16x32xf32>
    %781 = arith.mulf %770, %780 : vector<16x32xf32>
    %cst_256 = arith.constant dense<0.000000e+00> : vector<32xf32>
    %782 = vector.multi_reduction <add>, %781, %cst_256 [0] : vector<16x32xf32> to vector<32xf32>
    %783 = vector.shape_cast %782 : vector<32xf32> to vector<1x32xf32>
    %cst_257 = arith.constant 1.600000e+01 : f32
    %784 = vector.broadcast %cst_257 : f32 to vector<1x32xf32>
    %785 = arith.divf %783, %784 : vector<1x32xf32>
    %786 = vector.broadcast %785 : vector<1x32xf32> to vector<16x32xf32>
    %787 = arith.subf %781, %786 : vector<16x32xf32>
    %788 = arith.mulf %787, %787 : vector<16x32xf32>
    %cst_258 = arith.constant dense<0.000000e+00> : vector<32xf32>
    %789 = vector.multi_reduction <add>, %788, %cst_258 [0] : vector<16x32xf32> to vector<32xf32>
    %790 = vector.shape_cast %789 : vector<32xf32> to vector<1x32xf32>
    %cst_259 = arith.constant 1.600000e+01 : f32
    %791 = vector.broadcast %cst_259 : f32 to vector<1x32xf32>
    %792 = arith.divf %790, %791 : vector<1x32xf32>
    %793 = vector.broadcast %785 : vector<1x32xf32> to vector<16x32xf32>
    %794 = arith.subf %781, %793 : vector<16x32xf32>
    %cst_260 = arith.constant 9.99999974E-6 : f32
    %795 = vector.broadcast %cst_260 : f32 to vector<1x32xf32>
    %796 = arith.addf %792, %795 : vector<1x32xf32>
    %797 = math.rsqrt %796 : vector<1x32xf32>
    %798 = vector.broadcast %797 : vector<1x32xf32> to vector<16x32xf32>
    %799 = arith.mulf %794, %798 : vector<16x32xf32>
    %c26 = arith.constant 26 : index
    %c0_261 = arith.constant 0 : index
    %800 = vector.load %arg5[%c26, %c0_261] : memref<35x128xf32, #tpu.memory_space<vmem>>, vector<1x32xf32>
    %801 = vector.broadcast %800 : vector<1x32xf32> to vector<16x32xf32>
    %802 = arith.mulf %799, %801 : vector<16x32xf32>
    %c27 = arith.constant 27 : index
    %c0_262 = arith.constant 0 : index
    %803 = vector.load %arg5[%c27, %c0_262] : memref<35x128xf32, #tpu.memory_space<vmem>>, vector<1x32xf32>
    %804 = vector.broadcast %803 : vector<1x32xf32> to vector<16x32xf32>
    %805 = arith.addf %802, %804 : vector<16x32xf32>
    %c0_263 = arith.constant 0 : index
    %c1280 = arith.constant 1280 : index
    %806 = vector.load %arg3[%c0_263, %c1280] : memref<32x2176xbf16, #tpu.memory_space<vmem>>, vector<32x32xbf16>
    %807 = arith.truncf %805 : vector<16x32xf32> to vector<16x32xbf16>
    %cst_264 = arith.constant dense<0.000000e+00> : vector<16x32xf32>
    %808 = tpu.matmul %807, %806, %cst_264 {dimension_numbers = #tpu.dot_dimension_numbers<[1], [0], [0], [1], [0, 0, 1, 1], [], []>} : vector<16x32xbf16>, vector<32x32xbf16>, vector<16x32xf32> -> vector<16x32xf32>
    %c28 = arith.constant 28 : index
    %c0_265 = arith.constant 0 : index
    %809 = vector.load %arg5[%c28, %c0_265] : memref<35x128xf32, #tpu.memory_space<vmem>>, vector<1x32xf32>
    %810 = vector.broadcast %809 : vector<1x32xf32> to vector<16x32xf32>
    %811 = arith.addf %808, %810 : vector<16x32xf32>
    %c0_266 = arith.constant 0 : index
    %c0_267 = arith.constant 0 : index
    %812 = vector.load %arg2[%c0_266, %c0_267] : memref<2x16xf32, #tpu.memory_space<vmem>>, vector<2x16xf32>
    %813 = arith.truncf %812 : vector<2x16xf32> to vector<2x16xbf16>
    %814 = arith.truncf %811 : vector<16x32xf32> to vector<16x32xbf16>
    %cst_268 = arith.constant dense<0.000000e+00> : vector<2x32xf32>
    %815 = tpu.matmul %813, %814, %cst_268 {dimension_numbers = #tpu.dot_dimension_numbers<[1], [0], [0], [1], [0, 0, 1, 1], [], []>} : vector<2x16xbf16>, vector<16x32xbf16>, vector<2x32xf32> -> vector<2x32xf32>
    %c0_269 = arith.constant 0 : index
    %c1408 = arith.constant 1408 : index
    %816 = vector.load %arg3[%c0_269, %c1408] : memref<32x2176xbf16, #tpu.memory_space<vmem>>, vector<32x32xbf16>
    %817 = arith.truncf %815 : vector<2x32xf32> to vector<2x32xbf16>
    %cst_270 = arith.constant dense<0.000000e+00> : vector<2x32xf32>
    %818 = tpu.matmul %817, %816, %cst_270 {dimension_numbers = #tpu.dot_dimension_numbers<[1], [0], [0], [1], [0, 0, 1, 1], [], []>} : vector<2x32xbf16>, vector<32x32xbf16>, vector<2x32xf32> -> vector<2x32xf32>
    %c29 = arith.constant 29 : index
    %c0_271 = arith.constant 0 : index
    %819 = vector.load %arg5[%c29, %c0_271] : memref<35x128xf32, #tpu.memory_space<vmem>>, vector<1x32xf32>
    %820 = vector.broadcast %819 : vector<1x32xf32> to vector<2x32xf32>
    %821 = arith.addf %818, %820 : vector<2x32xf32>
    %cst_272 = arith.constant 0.000000e+00 : f32
    %822 = vector.broadcast %cst_272 : f32 to vector<2x32xf32>
    %823 = arith.maximumf %821, %822 : vector<2x32xf32>
    %c0_273 = arith.constant 0 : index
    %c1536 = arith.constant 1536 : index
    %824 = vector.load %arg3[%c0_273, %c1536] : memref<32x2176xbf16, #tpu.memory_space<vmem>>, vector<32x32xbf16>
    %825 = arith.truncf %823 : vector<2x32xf32> to vector<2x32xbf16>
    %cst_274 = arith.constant dense<0.000000e+00> : vector<2x32xf32>
    %826 = tpu.matmul %825, %824, %cst_274 {dimension_numbers = #tpu.dot_dimension_numbers<[1], [0], [0], [1], [0, 0, 1, 1], [], []>} : vector<2x32xbf16>, vector<32x32xbf16>, vector<2x32xf32> -> vector<2x32xf32>
    %c30 = arith.constant 30 : index
    %c0_275 = arith.constant 0 : index
    %827 = vector.load %arg5[%c30, %c0_275] : memref<35x128xf32, #tpu.memory_space<vmem>>, vector<1x32xf32>
    %828 = vector.broadcast %827 : vector<1x32xf32> to vector<2x32xf32>
    %829 = arith.addf %826, %828 : vector<2x32xf32>
    %c0_276 = arith.constant 0 : index
    %c1664 = arith.constant 1664 : index
    %830 = vector.load %arg3[%c0_276, %c1664] : memref<32x2176xbf16, #tpu.memory_space<vmem>>, vector<32x32xbf16>
    %831 = arith.truncf %829 : vector<2x32xf32> to vector<2x32xbf16>
    %cst_277 = arith.constant dense<0.000000e+00> : vector<2x32xf32>
    %832 = tpu.matmul %831, %830, %cst_277 {dimension_numbers = #tpu.dot_dimension_numbers<[1], [0], [0], [1], [0, 0, 1, 1], [], []>} : vector<2x32xbf16>, vector<32x32xbf16>, vector<2x32xf32> -> vector<2x32xf32>
    %c31 = arith.constant 31 : index
    %c0_278 = arith.constant 0 : index
    %833 = vector.load %arg5[%c31, %c0_278] : memref<35x128xf32, #tpu.memory_space<vmem>>, vector<1x32xf32>
    %834 = vector.broadcast %833 : vector<1x32xf32> to vector<2x32xf32>
    %835 = arith.addf %832, %834 : vector<2x32xf32>
    %cst_279 = arith.constant 0.000000e+00 : f32
    %836 = vector.broadcast %cst_279 : f32 to vector<2x32xf32>
    %837 = arith.maximumf %835, %836 : vector<2x32xf32>
    %c0_280 = arith.constant 0 : index
    %c1792 = arith.constant 1792 : index
    %838 = vector.load %arg3[%c0_280, %c1792] : memref<32x2176xbf16, #tpu.memory_space<vmem>>, vector<32x32xbf16>
    %839 = arith.truncf %837 : vector<2x32xf32> to vector<2x32xbf16>
    %cst_281 = arith.constant dense<0.000000e+00> : vector<2x32xf32>
    %840 = tpu.matmul %839, %838, %cst_281 {dimension_numbers = #tpu.dot_dimension_numbers<[1], [0], [0], [1], [0, 0, 1, 1], [], []>} : vector<2x32xbf16>, vector<32x32xbf16>, vector<2x32xf32> -> vector<2x32xf32>
    %c32 = arith.constant 32 : index
    %c0_282 = arith.constant 0 : index
    %841 = vector.load %arg5[%c32, %c0_282] : memref<35x128xf32, #tpu.memory_space<vmem>>, vector<1x32xf32>
    %842 = vector.broadcast %841 : vector<1x32xf32> to vector<2x32xf32>
    %843 = arith.addf %840, %842 : vector<2x32xf32>
    %cst_283 = arith.constant 0.000000e+00 : f32
    %844 = vector.broadcast %cst_283 : f32 to vector<2x32xf32>
    %845 = arith.maximumf %843, %844 : vector<2x32xf32>
    %c0_284 = arith.constant 0 : index
    %c1920 = arith.constant 1920 : index
    %846 = vector.load %arg3[%c0_284, %c1920] : memref<32x2176xbf16, #tpu.memory_space<vmem>>, vector<32x32xbf16>
    %847 = arith.truncf %845 : vector<2x32xf32> to vector<2x32xbf16>
    %cst_285 = arith.constant dense<0.000000e+00> : vector<2x32xf32>
    %848 = tpu.matmul %847, %846, %cst_285 {dimension_numbers = #tpu.dot_dimension_numbers<[1], [0], [0], [1], [0, 0, 1, 1], [], []>} : vector<2x32xbf16>, vector<32x32xbf16>, vector<2x32xf32> -> vector<2x32xf32>
    %c33 = arith.constant 33 : index
    %c0_286 = arith.constant 0 : index
    %849 = vector.load %arg5[%c33, %c0_286] : memref<35x128xf32, #tpu.memory_space<vmem>>, vector<1x32xf32>
    %850 = vector.broadcast %849 : vector<1x32xf32> to vector<2x32xf32>
    %851 = arith.addf %848, %850 : vector<2x32xf32>
    %cst_287 = arith.constant 0.000000e+00 : f32
    %852 = vector.broadcast %cst_287 : f32 to vector<2x32xf32>
    %853 = arith.maximumf %851, %852 : vector<2x32xf32>
    %c0_288 = arith.constant 0 : index
    %c2048 = arith.constant 2048 : index
    %854 = vector.load %arg3[%c0_288, %c2048] : memref<32x2176xbf16, #tpu.memory_space<vmem>>, vector<32x128xbf16>
    %855 = arith.truncf %853 : vector<2x32xf32> to vector<2x32xbf16>
    %cst_289 = arith.constant dense<0.000000e+00> : vector<2x128xf32>
    %856 = tpu.matmul %855, %854, %cst_289 {dimension_numbers = #tpu.dot_dimension_numbers<[1], [0], [0], [1], [0, 0, 1, 1], [], []>} : vector<2x32xbf16>, vector<32x128xbf16>, vector<2x128xf32> -> vector<2x128xf32>
    %c34 = arith.constant 34 : index
    %c0_290 = arith.constant 0 : index
    %857 = vector.load %arg5[%c34, %c0_290] : memref<35x128xf32, #tpu.memory_space<vmem>>, vector<1x128xf32>
    %858 = vector.broadcast %857 : vector<1x128xf32> to vector<2x128xf32>
    %859 = arith.addf %856, %858 : vector<2x128xf32>
    %c0_291 = arith.constant 0 : index
    %c0_292 = arith.constant 0 : index
    %860 = vector.load %arg6[%c0_291, %c0_292] : memref<2x128xf32, #tpu.memory_space<vmem>>, vector<2x128xf32>
    tpu.vector_store %arg6[%c0_291, %c0_292], %859 {strides = array<i32>} : memref<2x128xf32, #tpu.memory_space<vmem>>, vector<2x128xf32>,
    return
  }
}

</mosaic_0001>

<llo_original>
// kernel: _lambda_.1
$region0: #{_lambda_.1}
  #allocation0 [shape = 'u32[]', space=smem, size = 0x4, offset = 0x4, fixed_abs, tag = 'smem constant byte address 0x4 - core index']
  #allocation1 [shape = 'u32[144,128]{1,0:T(1,128)}', space=vmem, size = 0x12000, scoped, tag = 'internal scratch']
  %s0 = inlined_call_operand.vmem [shape: f32[16,32], index: 0, kind: input, shape index: {}]
  %s1 = inlined_call_operand.vmem [shape: f32[16,16], index: 1, kind: input, shape index: {}]
  %s2 = inlined_call_operand.vmem [shape: f32[2,16], index: 2, kind: input, shape index: {}]
  %s3 = inlined_call_operand.hbm [shape: bf16[32,2176], index: 3, kind: input, shape index: {}]
  %s4 = inlined_call_operand.hbm [shape: bf16[64,256], index: 4, kind: input, shape index: {}]
  %s5 = inlined_call_operand.hbm [shape: f32[35,128], index: 5, kind: input, shape index: {}]
  %s6 = inlined_call_operand.hbm [shape: f32[2,128], index: 6, kind: output, shape index: {}]
  %s7 = sld [smem:[#allocation0]]
  $region46: #{_lambda_.1} parent=0
    _
  %s9 = ssub.s32 1, %s7
  %s10 = scalar_select 0, %s9, %s7
  $region1: #{_lambda_.1} parent=0
    #allocation2 [shape = 'u8[139264]{0}', space=vmem, size = 0x22000, scoped, tag = 'input window, operand 3, single buffered']
    #allocation3 [shape = 's32[1]{0}', space=sflag, size = 0x4, scoped, tag = 'scoped memory for _lambda_.1']
    #allocation4 [shape = 's32[1]{0}', space=sflag, size = 0x4, scoped, tag = 'scoped memory for _lambda_.1']
    #allocation5 [shape = 'u8[32768]{0}', space=vmem, size = 0x8000, scoped, tag = 'input window, operand 4, single buffered']
    #allocation6 [shape = 's32[1]{0}', space=sflag, size = 0x4, scoped, tag = 'scoped memory for _lambda_.1']
    #allocation7 [shape = 'u8[20480]{0}', space=vmem, size = 0x5000, scoped, tag = 'input window, operand 5, single buffered']
    #allocation8 [shape = 'u8[1024]{0}', space=vmem, size = 0x400, scoped, tag = 'output window, operand 0, single buffered']
    %11 = vsyncpa [#allocation3], 0
    %12 = vsyncpa [#allocation6], 0
    %13 = vsyncpa [#allocation4], 0
    // Predicated region
    $region2: #{_lambda_.1} parent=1 // pred_check
      _
    $region3: #{_lambda_.1} parent=1 // pred_check_branch
      %15 = sbr.rel (0) target = $region5
    $region4: #{_lambda_.1} parent=1 // pred_region
      _
    $region5: #{_lambda_.1} parent=1 // pred_fallthru
      _
    // Predicated region
    $region6: #{_lambda_.1} parent=1 // pred_check
      _
    $region7: #{_lambda_.1} parent=1 // pred_check_branch
      %17 = sbr.rel (0) target = $region9
    $region8: #{_lambda_.1} parent=1 // pred_region
      _
    $region9: #{_lambda_.1} parent=1 // pred_fallthru
      _
    // Predicated region
    $region10: #{_lambda_.1} parent=1 // pred_check
      _
    $region11: #{_lambda_.1} parent=1 // pred_check_branch
      %19 = sbr.rel (0) target = $region13
    $region12: #{_lambda_.1} parent=1 // pred_region
      _
    $region13: #{_lambda_.1} parent=1 // pred_fallthru
      _
    // Predicated region
    $region14: #{_lambda_.1} parent=1 // pred_check
      _
    $region15: #{_lambda_.1} parent=1 // pred_check_branch
      %21 = sbr.rel (0) target = $region17
    $region16: #{_lambda_.1} parent=1 // pred_region
      %s23 = ssub.s32 4352, 4352
      %24 = vsyncadd [#allocation3], %s23
      %s25 = sshll.u32 [#allocation2], 4
      %s26 = int_to_ptr.vmem [resolvable:$true] %s25
      %31 = dma.hbm_to_vmem [thread:$0]  %s3, 4352, %s26, [#allocation3], 1088, 1088, 68
    $region17: #{_lambda_.1} parent=1 // pred_fallthru
      _
    // Predicated region
    $region18: #{_lambda_.1} parent=1 // pred_check
      _
    $region19: #{_lambda_.1} parent=1 // pred_check_branch
      %33 = sbr.rel (0) target = $region21
    $region20: #{_lambda_.1} parent=1 // pred_region
      %s35 = ssub.s32 1024, 1024
      %36 = vsyncadd [#allocation6], %s35
      %s37 = sshll.u32 [#allocation5], 4
      %s38 = int_to_ptr.vmem [resolvable:$true] %s37
      %43 = dma.hbm_to_vmem [thread:$0]  %s4, 1024, %s38, [#allocation6], 128, 128, 8
    $region21: #{_lambda_.1} parent=1 // pred_fallthru
      _
    // Predicated region
    $region22: #{_lambda_.1} parent=1 // pred_check
      _
    $region23: #{_lambda_.1} parent=1 // pred_check_branch
      %45 = sbr.rel (0) target = $region25
    $region24: #{_lambda_.1} parent=1 // pred_region
      %s47 = ssub.s32 640, 640
      %48 = vsyncadd [#allocation6], %s47
      %s49 = sshll.u32 [#allocation7], 4
      %s50 = int_to_ptr.vmem [resolvable:$true] %s49
      %55 = dma.hbm_to_vmem [thread:$0]  %s5, 640, %s50, [#allocation6], 128, 128, 8
    $region25: #{_lambda_.1} parent=1 // pred_fallthru
      _
    // Predicated region
    $region26: #{_lambda_.1} parent=1 // pred_check
      _
    $region27: #{_lambda_.1} parent=1 // pred_check_branch
      %57 = sbr.rel (0) target = $region29
    $region28: #{_lambda_.1} parent=1 // pred_region
      %58 = dma.done [#allocation3], 4352
    $region29: #{_lambda_.1} parent=1 // pred_fallthru
      _
    // Predicated region
    $region30: #{_lambda_.1} parent=1 // pred_check
      _
    $region31: #{_lambda_.1} parent=1 // pred_check_branch
      %60 = sbr.rel (0) target = $region33
    $region32: #{_lambda_.1} parent=1 // pred_region
      %61 = dma.done [#allocation6], 1024
    $region33: #{_lambda_.1} parent=1 // pred_fallthru
      _
    // Predicated region
    $region34: #{_lambda_.1} parent=1 // pred_check
      _
    $region35: #{_lambda_.1} parent=1 // pred_check_branch
      %63 = sbr.rel (0) target = $region37
    $region36: #{_lambda_.1} parent=1 // pred_region
      %64 = dma.done [#allocation6], 640
    $region37: #{_lambda_.1} parent=1 // pred_fallthru
      _
    %v66 = vld [vmem:[%s1] sm:$0xff]
    %v67 = vld [vmem:[%s1 + $0x8] sm:$0xff]
    %v68 = vld [vmem:[%s0] sm:$0xff]
    %v69 = vld [vmem:[%s0 + $0x8] sm:$0xff]
    %vm70 = vcmask 261120
    %v71 = vsel %vm70, %v68, 0.0
    %v72 = vsel %vm70, %v69, 0.0
    %v73 = vadd.f32 %v71, %v72
    %v74 = vrot.slane %v73, 4
    %v75 = vadd.f32 %v73, %v74
    %v76 = vrot.slane %v75, 2
    %v77 = vadd.f32 %v75, %v76
    %v78 = vrot.slane %v77, 1
    %v79 = vadd.f32 %v77, %v78
    %v80 = vrcp.pop 16.0
    %v81 = vmul.f32 %v79, %v80
    %v82 = vsub.f32 %v68, %v81
    %v83 = vsub.f32 %v69, %v81
    %v84 = vmul.f32 %v82, %v82
    %v85 = vmul.f32 %v83, %v83
    %v86 = vsel %vm70, %v84, 0.0
    %v87 = vsel %vm70, %v85, 0.0
    %v88 = vadd.f32 %v86, %v87
    %v89 = vrot.slane %v88, 4
    %v90 = vadd.f32 %v88, %v89
    %v91 = vrot.slane %v90, 2
    %v92 = vadd.f32 %v90, %v91
    %v93 = vrot.slane %v92, 1
    %v94 = vadd.f32 %v92, %v93
    %v95 = vmul.f32 %v94, %v80
    %v96 = vadd.f32 %v95, 1e-05
    %v97 = vrsqrt.pop %v96
    %v98 = vmul.f32 %v82, %v97
    %v99 = vmul.f32 %v83, %v97
    %v100 = vld [vmem:[#allocation7] sm:$0x1]
    %v101 = vlaneseq
    %v102 = vshrl.u32 %v101, 7
    %v103 = vsub.s32 0, %v102
    %v104 = vrot.slane %v100, %v103
    %v105 = vmul.f32 %v98, %v104
    %v106 = vmul.f32 %v99, %v104
    %v107 = vld [vmem:[#allocation7 + $0x1] sm:$0x1]
    %v108 = vlaneseq
    %v109 = vshrl.u32 %v108, 7
    %v110 = vsub.s32 0, %v109
    %v111 = vrot.slane %v107, %v110
    %v112 = vadd.f32 %v105, %v111
    %v113 = vadd.f32 %v106, %v111
    %v114 = vld [vmem:[#allocation2] sm:$0xf]
    %v115 = vld [vmem:[#allocation2 + $0x44] sm:$0xf]
    %v116 = vld [vmem:[#allocation2 + $0x88] sm:$0xf]
    %v117 = vld [vmem:[#allocation2 + $0xcc] sm:$0xf]
    %v118 = vpack.c.bf16 %v113, %v112
    %v119 = vld [vmem:[#allocation7 + $0x2] sm:$0x1]
    %v120 = vlaneseq
    %v121 = vshrl.u32 %v120, 7
    %v122 = vsub.s32 0, %v121
    %v123 = vrot.slane %v119, %v122
    %v128 = vunpack.c.l.b16 %v114
    %v129 = vunpack.c.l.b16 %v115
    %v130 = vunpack.c.l.b16 %v116
    %v131 = vunpack.c.l.b16 %v117
    %v132 = vpack.c.b16 %v129, %v128
    %v133 = vpack.c.b16 %v131, %v130
    %v137 = vsel %vm70, %v118, 0
    %139 = vmatprep.subr.bf16.mxu0 0
    %140 = vmatpush1.bf16.msra.mxu0 0
    %141 = vmatprep.subr.bf16.mxu0 0
    %142 = vmatpush1.bf16.msra.mxu0 0
    %143 = vmatprep.subr.bf16.mxu0 0
    %144 = vmatpush1.bf16.msra.mxu0 0
    %145 = vmatprep.subr.bf16.mxu0 0
    %146 = vmatpush1.bf16.msra.mxu0 0
    %147 = vmatprep.subr.bf16.mxu0 0
    %148 = vmatpush1.bf16.msra.mxu0 0
    %149 = vmatprep.subr.bf16.mxu0 0
    %150 = vmatpush1.bf16.msra.mxu0 0
    %151 = vmatprep.subr.bf16.mxu0 0
    %152 = vmatpush1.bf16.msra.mxu0 %v133
    %153 = vmatprep.subr.bf16.mxu0 0
    %154 = vmatpush1.bf16.msra.mxu0 %v132
    %155 = vmatprep.subr.bf16.mxu0 0
    %156 = vmatpush2.bf16.msra.mxu0 0
    %157 = vmatprep.subr.bf16.mxu0 0
    %158 = vmatpush2.bf16.msra.mxu0 0
    %159 = vmatprep.subr.bf16.mxu0 0
    %160 = vmatpush2.bf16.msra.mxu0 0
    %161 = vmatprep.subr.bf16.mxu0 0
    %162 = vmatpush2.bf16.msra.mxu0 0
    %163 = vmatprep.subr.bf16.mxu0 0
    %164 = vmatpush2.bf16.msra.mxu0 0
    %165 = vmatprep.subr.bf16.mxu0 0
    %166 = vmatpush2.bf16.msra.mxu0 0
    %167 = vmatprep.subr.bf16.mxu0 0
    %168 = vmatpush2.bf16.msra.mxu0 0
    %169 = vmatprep.subr.bf16.mxu0 0
    %170 = vmatpush2.bf16.msra.mxu0 0
    %171 = vmatprep.mubr.bf16.mxu0 0
    %172 = vmatmul.mubr.bf16.gmra.mxu0 %v137
    %v173 = vpop.f32.mrf.mxu0
    %v174 = vadd.f32 %v123, %v173
    %v175 = vpop.f32.mrf.mxu0
    %v176 = vpop.f32.mrf.mxu0
    %v177 = vadd.f32 %v123, %v176
    %v178 = vpop.f32.mrf.mxu0
    %179 = vdwg.mxu0
    %v180 = vmax.f32 %v174, 0.0
    %v181 = vmax.f32 %v177, 0.0
    %v182 = vsel %vm70, %v180, 0.0
    %v183 = vsel %vm70, %v181, 0.0
    %v184 = vadd.f32 %v182, %v183
    %v185 = vrot.slane %v184, 4
    %v186 = vadd.f32 %v184, %v185
    %v187 = vrot.slane %v186, 2
    %v188 = vadd.f32 %v186, %v187
    %v189 = vrot.slane %v188, 1
    %v190 = vadd.f32 %v188, %v189
    %v191 = vmul.f32 %v190, %v80
    %v192 = vsub.f32 %v180, %v191
    %v193 = vsub.f32 %v181, %v191
    %v194 = vmul.f32 %v192, %v192
    %v195 = vmul.f32 %v193, %v193
    %v196 = vsel %vm70, %v194, 0.0
    %v197 = vsel %vm70, %v195, 0.0
    %v198 = vadd.f32 %v196, %v197
    %v199 = vrot.slane %v198, 4
    %v200 = vadd.f32 %v198, %v199
    %v201 = vrot.slane %v200, 2
    %v202 = vadd.f32 %v200, %v201
    %v203 = vrot.slane %v202, 1
    %v204 = vadd.f32 %v202, %v203
    %v205 = vmul.f32 %v204, %v80
    %v206 = vadd.f32 %v205, 1e-05
    %v207 = vrsqrt.pop %v206
    %v208 = vmul.f32 %v192, %v207
    %v209 = vmul.f32 %v193, %v207
    %v210 = vld [vmem:[#allocation7 + $0x3] sm:$0x1]
    %v211 = vlaneseq
    %v212 = vshrl.u32 %v211, 7
    %v213 = vsub.s32 0, %v212
    %v214 = vrot.slane %v210, %v213
    %v215 = vmul.f32 %v208, %v214
    %v216 = vmul.f32 %v209, %v214
    %v217 = vld [vmem:[#allocation7 + $0x4] sm:$0x1]
    %v218 = vlaneseq
    %v219 = vshrl.u32 %v218, 7
    %v220 = vsub.s32 0, %v219
    %v221 = vrot.slane %v217, %v220
    %v222 = vadd.f32 %v215, %v221
    %v223 = vadd.f32 %v216, %v221
    %v224 = vld [vmem:[#allocation2 + $0x4] sm:$0xf]
    %v225 = vld [vmem:[#allocation2 + $0x48] sm:$0xf]
    %v226 = vld [vmem:[#allocation2 + $0x8c] sm:$0xf]
    %v227 = vld [vmem:[#allocation2 + $0xd0] sm:$0xf]
    %v228 = vpack.c.bf16 %v223, %v222
    %v229 = vld [vmem:[#allocation7 + $0x5] sm:$0x1]
    %v230 = vlaneseq
    %v231 = vshrl.u32 %v230, 7
    %v232 = vsub.s32 0, %v231
    %v233 = vrot.slane %v229, %v232
    %v238 = vunpack.c.l.b16 %v224
    %v239 = vunpack.c.l.b16 %v225
    %v240 = vunpack.c.l.b16 %v226
    %v241 = vunpack.c.l.b16 %v227
    %v242 = vpack.c.b16 %v239, %v238
    %v243 = vpack.c.b16 %v241, %v240
    %v247 = vsel %vm70, %v228, 0
    %249 = vmatprep.subr.bf16.mxu0 0
    %250 = vmatpush1.bf16.msra.mxu0 0
    %251 = vmatprep.subr.bf16.mxu0 0
    %252 = vmatpush1.bf16.msra.mxu0 0
    %253 = vmatprep.subr.bf16.mxu0 0
    %254 = vmatpush1.bf16.msra.mxu0 0
    %255 = vmatprep.subr.bf16.mxu0 0
    %256 = vmatpush1.bf16.msra.mxu0 0
    %257 = vmatprep.subr.bf16.mxu0 0
    %258 = vmatpush1.bf16.msra.mxu0 0
    %259 = vmatprep.subr.bf16.mxu0 0
    %260 = vmatpush1.bf16.msra.mxu0 0
    %261 = vmatprep.subr.bf16.mxu0 0
    %262 = vmatpush1.bf16.msra.mxu0 %v243
    %263 = vmatprep.subr.bf16.mxu0 0
    %264 = vmatpush1.bf16.msra.mxu0 %v242
    %265 = vmatprep.subr.bf16.mxu0 0
    %266 = vmatpush2.bf16.msra.mxu0 0
    %267 = vmatprep.subr.bf16.mxu0 0
    %268 = vmatpush2.bf16.msra.mxu0 0
    %269 = vmatprep.subr.bf16.mxu0 0
    %270 = vmatpush2.bf16.msra.mxu0 0
    %271 = vmatprep.subr.bf16.mxu0 0
    %272 = vmatpush2.bf16.msra.mxu0 0
    %273 = vmatprep.subr.bf16.mxu0 0
    %274 = vmatpush2.bf16.msra.mxu0 0
    %275 = vmatprep.subr.bf16.mxu0 0
    %276 = vmatpush2.bf16.msra.mxu0 0
    %277 = vmatprep.subr.bf16.mxu0 0
    %278 = vmatpush2.bf16.msra.mxu0 0
    %279 = vmatprep.subr.bf16.mxu0 0
    %280 = vmatpush2.bf16.msra.mxu0 0
    %281 = vmatprep.mubr.bf16.mxu0 0
    %282 = vmatmul.mubr.bf16.gmra.mxu0 %v247
    %v283 = vpop.f32.mrf.mxu0
    %v284 = vadd.f32 %v233, %v283
    %v285 = vpop.f32.mrf.mxu0
    %v286 = vpop.f32.mrf.mxu0
    %v287 = vadd.f32 %v233, %v286
    %v288 = vpop.f32.mrf.mxu0
    %289 = vdwg.mxu0
    %v290 = vld [vmem:[#allocation2 + $0x8] sm:$0xf]
    %v291 = vld [vmem:[#allocation2 + $0x4c] sm:$0xf]
    %v292 = vld [vmem:[#allocation2 + $0x90] sm:$0xf]
    %v293 = vld [vmem:[#allocation2 + $0xd4] sm:$0xf]
    %v294 = vpack.c.bf16 %v287, %v284
    %v295 = vld [vmem:[#allocation7 + $0x6] sm:$0x1]
    %v296 = vlaneseq
    %v297 = vshrl.u32 %v296, 7
    %v298 = vsub.s32 0, %v297
    %v299 = vrot.slane %v295, %v298
    %v304 = vunpack.c.l.b16 %v290
    %v305 = vunpack.c.l.b16 %v291
    %v306 = vunpack.c.l.b16 %v292
    %v307 = vunpack.c.l.b16 %v293
    %v308 = vpack.c.b16 %v305, %v304
    %v309 = vpack.c.b16 %v307, %v306
    %v313 = vsel %vm70, %v294, 0
    %315 = vmatprep.subr.bf16.mxu0 0
    %316 = vmatpush1.bf16.msra.mxu0 0
    %317 = vmatprep.subr.bf16.mxu0 0
    %318 = vmatpush1.bf16.msra.mxu0 0
    %319 = vmatprep.subr.bf16.mxu0 0
    %320 = vmatpush1.bf16.msra.mxu0 0
    %321 = vmatprep.subr.bf16.mxu0 0
    %322 = vmatpush1.bf16.msra.mxu0 0
    %323 = vmatprep.subr.bf16.mxu0 0
    %324 = vmatpush1.bf16.msra.mxu0 0
    %325 = vmatprep.subr.bf16.mxu0 0
    %326 = vmatpush1.bf16.msra.mxu0 0
    %327 = vmatprep.subr.bf16.mxu0 0
    %328 = vmatpush1.bf16.msra.mxu0 %v309
    %329 = vmatprep.subr.bf16.mxu0 0
    %330 = vmatpush1.bf16.msra.mxu0 %v308
    %331 = vmatprep.subr.bf16.mxu0 0
    %332 = vmatpush2.bf16.msra.mxu0 0
    %333 = vmatprep.subr.bf16.mxu0 0
    %334 = vmatpush2.bf16.msra.mxu0 0
    %335 = vmatprep.subr.bf16.mxu0 0
    %336 = vmatpush2.bf16.msra.mxu0 0
    %337 = vmatprep.subr.bf16.mxu0 0
    %338 = vmatpush2.bf16.msra.mxu0 0
    %339 = vmatprep.subr.bf16.mxu0 0
    %340 = vmatpush2.bf16.msra.mxu0 0
    %341 = vmatprep.subr.bf16.mxu0 0
    %342 = vmatpush2.bf16.msra.mxu0 0
    %343 = vmatprep.subr.bf16.mxu0 0
    %344 = vmatpush2.bf16.msra.mxu0 0
    %345 = vmatprep.subr.bf16.mxu0 0
    %346 = vmatpush2.bf16.msra.mxu0 0
    %347 = vmatprep.mubr.bf16.mxu0 0
    %348 = vmatmul.mubr.bf16.gmra.mxu0 %v313
    %v349 = vpop.f32.mrf.mxu0
    %v350 = vadd.f32 %v299, %v349
    %v351 = vpop.f32.mrf.mxu0
    %v352 = vpop.f32.mrf.mxu0
    %v353 = vadd.f32 %v299, %v352
    %v354 = vpop.f32.mrf.mxu0
    %355 = vdwg.mxu0
    %v356 = vpack.c.bf16 %v353, %v350
    %358 = vrot.lane.b32.xlu0 %v356, 96
    %v359 = vpop.permute.xlu0 %358
    %vm360 = vcmask 64512
    %v362 = vsel %vm360, %v356, 0
    %v365 = vsel %vm360, %v359, 0
    %367 = vmatprep.subr.bf16.mxu0 0
    %368 = vmatpush1.bf16.xpose.msra.mxu0 0
    %369 = vmatprep.subr.bf16.mxu0 0
    %370 = vmatpush1.bf16.xpose.msra.mxu0 0
    %371 = vmatprep.subr.bf16.mxu0 0
    %372 = vmatpush1.bf16.xpose.msra.mxu0 0
    %373 = vmatprep.subr.bf16.mxu0 0
    %374 = vmatpush1.bf16.xpose.msra.mxu0 0
    %375 = vmatprep.subr.bf16.mxu0 0
    %376 = vmatpush1.bf16.xpose.msra.mxu0 0
    %377 = vmatprep.subr.bf16.mxu0 0
    %378 = vmatpush1.bf16.xpose.msra.mxu0 0
    %379 = vmatprep.subr.bf16.mxu0 0
    %380 = vmatpush1.bf16.xpose.msra.mxu0 0
    %381 = vmatprep.subr.bf16.mxu0 0
    %382 = vmatpush1.bf16.xpose.msra.mxu0 %v365
    %383 = vmatprep.subr.bf16.mxu0 0
    %384 = vmatpush2.bf16.xpose.msra.mxu0 0
    %385 = vmatprep.subr.bf16.mxu0 0
    %386 = vmatpush2.bf16.xpose.msra.mxu0 0
    %387 = vmatprep.subr.bf16.mxu0 0
    %388 = vmatpush2.bf16.xpose.msra.mxu0 0
    %389 = vmatprep.subr.bf16.mxu0 0
    %390 = vmatpush2.bf16.xpose.msra.mxu0 0
    %391 = vmatprep.subr.bf16.mxu0 0
    %392 = vmatpush2.bf16.xpose.msra.mxu0 0
    %393 = vmatprep.subr.bf16.mxu0 0
    %394 = vmatpush2.bf16.xpose.msra.mxu0 0
    %395 = vmatprep.subr.bf16.mxu0 0
    %396 = vmatpush2.bf16.xpose.msra.mxu0 0
    %397 = vmatprep.subr.bf16.mxu0 0
    %398 = vmatpush2.bf16.xpose.msra.mxu0 0
    %399 = vmatprep.mubr.bf16.mxu0 0
    %400 = vmatmul.mubr.bf16.gmra.mxu0 %v362
    %v401 = vpop.f32.mrf.mxu0
    %v402 = vadd.f32 %v66, %v401
    %v403 = vpop.f32.mrf.mxu0
    %v404 = vpop.f32.mrf.mxu0
    %v405 = vadd.f32 %v67, %v404
    %v406 = vpop.f32.mrf.mxu0
    %407 = vdwg.mxu0
    %vm408 = vcmask 130048
    %v409 = vsel %vm408, %v402, -inf
    %410 = vmax.xlane.f32.xlu0 %v409
    %v411 = vpop.xlane.xlu0 %410
    %v412 = vsel %vm408, %v405, -inf
    %413 = vmax.xlane.f32.xlu0 %v412
    %v414 = vpop.xlane.xlu0 %413
    %v415 = vsub.f32 %v402, %v411
    %v416 = vsub.f32 %v405, %v414
    %v417 = vmul.f32 %v415, 1.442695
    %v418 = vpow.pop %v417
    %v419 = vmul.f32 %v416, 1.442695
    %v420 = vpow.pop %v419
    %v421 = vsel %vm408, %v418, 0.0
    %422 = vadd.xlane.f32.xlu0 %v421
    %v423 = vpop.xlane.xlu0 %422
    %v424 = vsel %vm408, %v420, 0.0
    %425 = vadd.xlane.f32.xlu0 %v424
    %v426 = vpop.xlane.xlu0 %425
    %v427 = vrcp.pop %v423
    %v428 = vmul.f32 %v418, %v427
    %v429 = vrcp.pop %v426
    %v430 = vmul.f32 %v420, %v429
    %v431 = vpack.c.bf16 %v430, %v428
    %432 = vrot.lane.b32.xlu0 %v356, 64
    %v433 = vpop.permute.xlu0 %432
    %v436 = vsel %vm408, %v431, 0
    %438 = vmatprep.subr.bf16.mxu0 0
    %439 = vmatpush1.bf16.msra.mxu0 0
    %440 = vmatprep.subr.bf16.mxu0 0
    %441 = vmatpush1.bf16.msra.mxu0 0
    %442 = vmatprep.subr.bf16.mxu0 0
    %443 = vmatpush1.bf16.msra.mxu0 0
    %444 = vmatprep.subr.bf16.mxu0 0
    %445 = vmatpush1.bf16.msra.mxu0 0
    %446 = vmatprep.subr.bf16.mxu0 0
    %447 = vmatpush1.bf16.msra.mxu0 0
    %448 = vmatprep.subr.bf16.mxu0 0
    %449 = vmatpush1.bf16.msra.mxu0 0
    %450 = vmatprep.subr.bf16.mxu0 0
    %451 = vmatpush1.bf16.msra.mxu0 0
    %452 = vmatprep.subr.bf16.mxu0 0
    %453 = vmatpush1.bf16.msra.mxu0 %v433
    %454 = vmatprep.subr.bf16.mxu0 0
    %455 = vmatpush2.bf16.msra.mxu0 0
    %456 = vmatprep.subr.bf16.mxu0 0
    %457 = vmatpush2.bf16.msra.mxu0 0
    %458 = vmatprep.subr.bf16.mxu0 0
    %459 = vmatpush2.bf16.msra.mxu0 0
    %460 = vmatprep.subr.bf16.mxu0 0
    %461 = vmatpush2.bf16.msra.mxu0 0
    %462 = vmatprep.subr.bf16.mxu0 0
    %463 = vmatpush2.bf16.msra.mxu0 0
    %464 = vmatprep.subr.bf16.mxu0 0
    %465 = vmatpush2.bf16.msra.mxu0 0
    %466 = vmatprep.subr.bf16.mxu0 0
    %467 = vmatpush2.bf16.msra.mxu0 0
    %468 = vmatprep.subr.bf16.mxu0 0
    %469 = vmatpush2.bf16.msra.mxu0 0
    %470 = vmatprep.mubr.bf16.mxu0 0
    %471 = vmatmul.mubr.bf16.gmra.mxu0 %v436
    %v472 = vpop.f32.mrf.mxu0
    %v473 = vadd.f32 0.0, %v472
    %v474 = vpop.f32.mrf.mxu0
    %v475 = vpop.f32.mrf.mxu0
    %v476 = vadd.f32 0.0, %v475
    %v477 = vpop.f32.mrf.mxu0
    %478 = vdwg.mxu0
    %479 = vrot.lane.b32.xlu0 %v356, 120
    %v480 = vpop.permute.xlu0 %479
    %481 = vrot.lane.b32.xlu0 %v356, 88
    %v482 = vpop.permute.xlu0 %481
    %v484 = vsel %vm360, %v480, 0
    %v487 = vsel %vm360, %v482, 0
    %489 = vmatprep.subr.bf16.mxu0 0
    %490 = vmatpush1.bf16.xpose.msra.mxu0 0
    %491 = vmatprep.subr.bf16.mxu0 0
    %492 = vmatpush1.bf16.xpose.msra.mxu0 0
    %493 = vmatprep.subr.bf16.mxu0 0
    %494 = vmatpush1.bf16.xpose.msra.mxu0 0
    %495 = vmatprep.subr.bf16.mxu0 0
    %496 = vmatpush1.bf16.xpose.msra.mxu0 0
    %497 = vmatprep.subr.bf16.mxu0 0
    %498 = vmatpush1.bf16.xpose.msra.mxu0 0
    %499 = vmatprep.subr.bf16.mxu0 0
    %500 = vmatpush1.bf16.xpose.msra.mxu0 0
    %501 = vmatprep.subr.bf16.mxu0 0
    %502 = vmatpush1.bf16.xpose.msra.mxu0 0
    %503 = vmatprep.subr.bf16.mxu0 0
    %504 = vmatpush1.bf16.xpose.msra.mxu0 %v487
    %505 = vmatprep.subr.bf16.mxu0 0
    %506 = vmatpush2.bf16.xpose.msra.mxu0 0
    %507 = vmatprep.subr.bf16.mxu0 0
    %508 = vmatpush2.bf16.xpose.msra.mxu0 0
    %509 = vmatprep.subr.bf16.mxu0 0
    %510 = vmatpush2.bf16.xpose.msra.mxu0 0
    %511 = vmatprep.subr.bf16.mxu0 0
    %512 = vmatpush2.bf16.xpose.msra.mxu0 0
    %513 = vmatprep.subr.bf16.mxu0 0
    %514 = vmatpush2.bf16.xpose.msra.mxu0 0
    %515 = vmatprep.subr.bf16.mxu0 0
    %516 = vmatpush2.bf16.xpose.msra.mxu0 0
    %517 = vmatprep.subr.bf16.mxu0 0
    %518 = vmatpush2.bf16.xpose.msra.mxu0 0
    %519 = vmatprep.subr.bf16.mxu0 0
    %520 = vmatpush2.bf16.xpose.msra.mxu0 0
    %521 = vmatprep.mubr.bf16.mxu0 0
    %522 = vmatmul.mubr.bf16.gmra.mxu0 %v484
    %v523 = vpop.f32.mrf.mxu0
    %v524 = vadd.f32 %v66, %v523
    %v525 = vpop.f32.mrf.mxu0
    %v526 = vpop.f32.mrf.mxu0
    %v527 = vadd.f32 %v67, %v526
    %v528 = vpop.f32.mrf.mxu0
    %529 = vdwg.mxu0
    %v530 = vsel %vm408, %v524, -inf
    %531 = vmax.xlane.f32.xlu0 %v530
    %v532 = vpop.xlane.xlu0 %531
    %v533 = vsel %vm408, %v527, -inf
    %534 = vmax.xlane.f32.xlu0 %v533
    %v535 = vpop.xlane.xlu0 %534
    %v536 = vsub.f32 %v524, %v532
    %v537 = vsub.f32 %v527, %v535
    %v538 = vmul.f32 %v536, 1.442695
    %v539 = vpow.pop %v538
    %v540 = vmul.f32 %v537, 1.442695
    %v541 = vpow.pop %v540
    %v542 = vsel %vm408, %v539, 0.0
    %543 = vadd.xlane.f32.xlu0 %v542
    %v544 = vpop.xlane.xlu0 %543
    %v545 = vsel %vm408, %v541, 0.0
    %546 = vadd.xlane.f32.xlu0 %v545
    %v547 = vpop.xlane.xlu0 %546
    %v548 = vrcp.pop %v544
    %v549 = vmul.f32 %v539, %v548
    %v550 = vrcp.pop %v547
    %v551 = vmul.f32 %v541, %v550
    %v552 = vpack.c.bf16 %v551, %v549
    %553 = vrot.lane.b32.xlu0 %v356, 56
    %v554 = vpop.permute.xlu0 %553
    %v557 = vsel %vm408, %v552, 0
    %559 = vmatprep.subr.bf16.mxu0 0
    %560 = vmatpush1.bf16.msra.mxu0 0
    %561 = vmatprep.subr.bf16.mxu0 0
    %562 = vmatpush1.bf16.msra.mxu0 0
    %563 = vmatprep.subr.bf16.mxu0 0
    %564 = vmatpush1.bf16.msra.mxu0 0
    %565 = vmatprep.subr.bf16.mxu0 0
    %566 = vmatpush1.bf16.msra.mxu0 0
    %567 = vmatprep.subr.bf16.mxu0 0
    %568 = vmatpush1.bf16.msra.mxu0 0
    %569 = vmatprep.subr.bf16.mxu0 0
    %570 = vmatpush1.bf16.msra.mxu0 0
    %571 = vmatprep.subr.bf16.mxu0 0
    %572 = vmatpush1.bf16.msra.mxu0 0
    %573 = vmatprep.subr.bf16.mxu0 0
    %574 = vmatpush1.bf16.msra.mxu0 %v554
    %575 = vmatprep.subr.bf16.mxu0 0
    %576 = vmatpush2.bf16.msra.mxu0 0
    %577 = vmatprep.subr.bf16.mxu0 0
    %578 = vmatpush2.bf16.msra.mxu0 0
    %579 = vmatprep.subr.bf16.mxu0 0
    %580 = vmatpush2.bf16.msra.mxu0 0
    %581 = vmatprep.subr.bf16.mxu0 0
    %582 = vmatpush2.bf16.msra.mxu0 0
    %583 = vmatprep.subr.bf16.mxu0 0
    %584 = vmatpush2.bf16.msra.mxu0 0
    %585 = vmatprep.subr.bf16.mxu0 0
    %586 = vmatpush2.bf16.msra.mxu0 0
    %587 = vmatprep.subr.bf16.mxu0 0
    %588 = vmatpush2.bf16.msra.mxu0 0
    %589 = vmatprep.subr.bf16.mxu0 0
    %590 = vmatpush2.bf16.msra.mxu0 0
    %591 = vmatprep.mubr.bf16.mxu0 0
    %592 = vmatmul.mubr.bf16.gmra.mxu0 %v557
    %v593 = vpop.f32.mrf.mxu0
    %v594 = vadd.f32 0.0, %v593
    %v595 = vpop.f32.mrf.mxu0
    %v596 = vpop.f32.mrf.mxu0
    %v597 = vadd.f32 0.0, %v596
    %v598 = vpop.f32.mrf.mxu0
    %599 = vdwg.mxu0
    %600 = vrot.lane.b32.xlu0 %v356, 112
    %v601 = vpop.permute.xlu0 %600
    %602 = vrot.lane.b32.xlu0 %v356, 80
    %v603 = vpop.permute.xlu0 %602
    %v605 = vsel %vm360, %v601, 0
    %v608 = vsel %vm360, %v603, 0
    %610 = vmatprep.subr.bf16.mxu0 0
    %611 = vmatpush1.bf16.xpose.msra.mxu0 0
    %612 = vmatprep.subr.bf16.mxu0 0
    %613 = vmatpush1.bf16.xpose.msra.mxu0 0
    %614 = vmatprep.subr.bf16.mxu0 0
    %615 = vmatpush1.bf16.xpose.msra.mxu0 0
    %616 = vmatprep.subr.bf16.mxu0 0
    %617 = vmatpush1.bf16.xpose.msra.mxu0 0
    %618 = vmatprep.subr.bf16.mxu0 0
    %619 = vmatpush1.bf16.xpose.msra.mxu0 0
    %620 = vmatprep.subr.bf16.mxu0 0
    %621 = vmatpush1.bf16.xpose.msra.mxu0 0
    %622 = vmatprep.subr.bf16.mxu0 0
    %623 = vmatpush1.bf16.xpose.msra.mxu0 0
    %624 = vmatprep.subr.bf16.mxu0 0
    %625 = vmatpush1.bf16.xpose.msra.mxu0 %v608
    %626 = vmatprep.subr.bf16.mxu0 0
    %627 = vmatpush2.bf16.xpose.msra.mxu0 0
    %628 = vmatprep.subr.bf16.mxu0 0
    %629 = vmatpush2.bf16.xpose.msra.mxu0 0
    %630 = vmatprep.subr.bf16.mxu0 0
    %631 = vmatpush2.bf16.xpose.msra.mxu0 0
    %632 = vmatprep.subr.bf16.mxu0 0
    %633 = vmatpush2.bf16.xpose.msra.mxu0 0
    %634 = vmatprep.subr.bf16.mxu0 0
    %635 = vmatpush2.bf16.xpose.msra.mxu0 0
    %636 = vmatprep.subr.bf16.mxu0 0
    %637 = vmatpush2.bf16.xpose.msra.mxu0 0
    %638 = vmatprep.subr.bf16.mxu0 0
    %639 = vmatpush2.bf16.xpose.msra.mxu0 0
    %640 = vmatprep.subr.bf16.mxu0 0
    %641 = vmatpush2.bf16.xpose.msra.mxu0 0
    %642 = vmatprep.mubr.bf16.mxu0 0
    %643 = vmatmul.mubr.bf16.gmra.mxu0 %v605
    %v644 = vpop.f32.mrf.mxu0
    %v645 = vadd.f32 %v66, %v644
    %v646 = vpop.f32.mrf.mxu0
    %v647 = vpop.f32.mrf.mxu0
    %v648 = vadd.f32 %v67, %v647
    %v649 = vpop.f32.mrf.mxu0
    %650 = vdwg.mxu0
    %v651 = vsel %vm408, %v645, -inf
    %652 = vmax.xlane.f32.xlu0 %v651
    %v653 = vpop.xlane.xlu0 %652
    %v654 = vsel %vm408, %v648, -inf
    %655 = vmax.xlane.f32.xlu0 %v654
    %v656 = vpop.xlane.xlu0 %655
    %v657 = vsub.f32 %v645, %v653
    %v658 = vsub.f32 %v648, %v656
    %v659 = vmul.f32 %v657, 1.442695
    %v660 = vpow.pop %v659
    %v661 = vmul.f32 %v658, 1.442695
    %v662 = vpow.pop %v661
    %v663 = vsel %vm408, %v660, 0.0
    %664 = vadd.xlane.f32.xlu0 %v663
    %v665 = vpop.xlane.xlu0 %664
    %v666 = vsel %vm408, %v662, 0.0
    %667 = vadd.xlane.f32.xlu0 %v666
    %v668 = vpop.xlane.xlu0 %667
    %v669 = vrcp.pop %v665
    %v670 = vmul.f32 %v660, %v669
    %v671 = vrcp.pop %v668
    %v672 = vmul.f32 %v662, %v671
    %v673 = vpack.c.bf16 %v672, %v670
    %674 = vrot.lane.b32.xlu0 %v356, 48
    %v675 = vpop.permute.xlu0 %674
    %v678 = vsel %vm408, %v673, 0
    %680 = vmatprep.subr.bf16.mxu0 0
    %681 = vmatpush1.bf16.msra.mxu0 0
    %682 = vmatprep.subr.bf16.mxu0 0
    %683 = vmatpush1.bf16.msra.mxu0 0
    %684 = vmatprep.subr.bf16.mxu0 0
    %685 = vmatpush1.bf16.msra.mxu0 0
    %686 = vmatprep.subr.bf16.mxu0 0
    %687 = vmatpush1.bf16.msra.mxu0 0
    %688 = vmatprep.subr.bf16.mxu0 0
    %689 = vmatpush1.bf16.msra.mxu0 0
    %690 = vmatprep.subr.bf16.mxu0 0
    %691 = vmatpush1.bf16.msra.mxu0 0
    %692 = vmatprep.subr.bf16.mxu0 0
    %693 = vmatpush1.bf16.msra.mxu0 0
    %694 = vmatprep.subr.bf16.mxu0 0
    %695 = vmatpush1.bf16.msra.mxu0 %v675
    %696 = vmatprep.subr.bf16.mxu0 0
    %697 = vmatpush2.bf16.msra.mxu0 0
    %698 = vmatprep.subr.bf16.mxu0 0
    %699 = vmatpush2.bf16.msra.mxu0 0
    %700 = vmatprep.subr.bf16.mxu0 0
    %701 = vmatpush2.bf16.msra.mxu0 0
    %702 = vmatprep.subr.bf16.mxu0 0
    %703 = vmatpush2.bf16.msra.mxu0 0
    %704 = vmatprep.subr.bf16.mxu0 0
    %705 = vmatpush2.bf16.msra.mxu0 0
    %706 = vmatprep.subr.bf16.mxu0 0
    %707 = vmatpush2.bf16.msra.mxu0 0
    %708 = vmatprep.subr.bf16.mxu0 0
    %709 = vmatpush2.bf16.msra.mxu0 0
    %710 = vmatprep.subr.bf16.mxu0 0
    %711 = vmatpush2.bf16.msra.mxu0 0
    %712 = vmatprep.mubr.bf16.mxu0 0
    %713 = vmatmul.mubr.bf16.gmra.mxu0 %v678
    %v714 = vpop.f32.mrf.mxu0
    %v715 = vadd.f32 0.0, %v714
    %v716 = vpop.f32.mrf.mxu0
    %v717 = vpop.f32.mrf.mxu0
    %v718 = vadd.f32 0.0, %v717
    %v719 = vpop.f32.mrf.mxu0
    %720 = vdwg.mxu0
    %721 = vrot.lane.b32.xlu0 %v356, 104
    %v722 = vpop.permute.xlu0 %721
    %723 = vrot.lane.b32.xlu0 %v356, 72
    %v724 = vpop.permute.xlu0 %723
    %v726 = vsel %vm360, %v722, 0
    %v729 = vsel %vm360, %v724, 0
    %731 = vmatprep.subr.bf16.mxu0 0
    %732 = vmatpush1.bf16.xpose.msra.mxu0 0
    %733 = vmatprep.subr.bf16.mxu0 0
    %734 = vmatpush1.bf16.xpose.msra.mxu0 0
    %735 = vmatprep.subr.bf16.mxu0 0
    %736 = vmatpush1.bf16.xpose.msra.mxu0 0
    %737 = vmatprep.subr.bf16.mxu0 0
    %738 = vmatpush1.bf16.xpose.msra.mxu0 0
    %739 = vmatprep.subr.bf16.mxu0 0
    %740 = vmatpush1.bf16.xpose.msra.mxu0 0
    %741 = vmatprep.subr.bf16.mxu0 0
    %742 = vmatpush1.bf16.xpose.msra.mxu0 0
    %743 = vmatprep.subr.bf16.mxu0 0
    %744 = vmatpush1.bf16.xpose.msra.mxu0 0
    %745 = vmatprep.subr.bf16.mxu0 0
    %746 = vmatpush1.bf16.xpose.msra.mxu0 %v729
    %747 = vmatprep.subr.bf16.mxu0 0
    %748 = vmatpush2.bf16.xpose.msra.mxu0 0
    %749 = vmatprep.subr.bf16.mxu0 0
    %750 = vmatpush2.bf16.xpose.msra.mxu0 0
    %751 = vmatprep.subr.bf16.mxu0 0
    %752 = vmatpush2.bf16.xpose.msra.mxu0 0
    %753 = vmatprep.subr.bf16.mxu0 0
    %754 = vmatpush2.bf16.xpose.msra.mxu0 0
    %755 = vmatprep.subr.bf16.mxu0 0
    %756 = vmatpush2.bf16.xpose.msra.mxu0 0
    %757 = vmatprep.subr.bf16.mxu0 0
    %758 = vmatpush2.bf16.xpose.msra.mxu0 0
    %759 = vmatprep.subr.bf16.mxu0 0
    %760 = vmatpush2.bf16.xpose.msra.mxu0 0
    %761 = vmatprep.subr.bf16.mxu0 0
    %762 = vmatpush2.bf16.xpose.msra.mxu0 0
    %763 = vmatprep.mubr.bf16.mxu0 0
    %764 = vmatmul.mubr.bf16.gmra.mxu0 %v726
    %v765 = vpop.f32.mrf.mxu0
    %v766 = vadd.f32 %v66, %v765
    %v767 = vpop.f32.mrf.mxu0
    %v768 = vpop.f32.mrf.mxu0
    %v769 = vadd.f32 %v67, %v768
    %v770 = vpop.f32.mrf.mxu0
    %771 = vdwg.mxu0
    %v772 = vsel %vm408, %v766, -inf
    %773 = vmax.xlane.f32.xlu0 %v772
    %v774 = vpop.xlane.xlu0 %773
    %v775 = vsel %vm408, %v769, -inf
    %776 = vmax.xlane.f32.xlu0 %v775
    %v777 = vpop.xlane.xlu0 %776
    %v778 = vsub.f32 %v766, %v774
    %v779 = vsub.f32 %v769, %v777
    %v780 = vmul.f32 %v778, 1.442695
    %v781 = vpow.pop %v780
    %v782 = vmul.f32 %v779, 1.442695
    %v783 = vpow.pop %v782
    %v784 = vsel %vm408, %v781, 0.0
    %785 = vadd.xlane.f32.xlu0 %v784
    %v786 = vpop.xlane.xlu0 %785
    %v787 = vsel %vm408, %v783, 0.0
    %788 = vadd.xlane.f32.xlu0 %v787
    %v789 = vpop.xlane.xlu0 %788
    %v790 = vrcp.pop %v786
    %v791 = vmul.f32 %v781, %v790
    %v792 = vrcp.pop %v789
    %v793 = vmul.f32 %v783, %v792
    %v794 = vpack.c.bf16 %v793, %v791
    %795 = vrot.lane.b32.xlu0 %v356, 40
    %v796 = vpop.permute.xlu0 %795
    %v799 = vsel %vm408, %v794, 0
    %801 = vmatprep.subr.bf16.mxu0 0
    %802 = vmatpush1.bf16.msra.mxu0 0
    %803 = vmatprep.subr.bf16.mxu0 0
    %804 = vmatpush1.bf16.msra.mxu0 0
    %805 = vmatprep.subr.bf16.mxu0 0
    %806 = vmatpush1.bf16.msra.mxu0 0
    %807 = vmatprep.subr.bf16.mxu0 0
    %808 = vmatpush1.bf16.msra.mxu0 0
    %809 = vmatprep.subr.bf16.mxu0 0
    %810 = vmatpush1.bf16.msra.mxu0 0
    %811 = vmatprep.subr.bf16.mxu0 0
    %812 = vmatpush1.bf16.msra.mxu0 0
    %813 = vmatprep.subr.bf16.mxu0 0
    %814 = vmatpush1.bf16.msra.mxu0 0
    %815 = vmatprep.subr.bf16.mxu0 0
    %816 = vmatpush1.bf16.msra.mxu0 %v796
    %817 = vmatprep.subr.bf16.mxu0 0
    %818 = vmatpush2.bf16.msra.mxu0 0
    %819 = vmatprep.subr.bf16.mxu0 0
    %820 = vmatpush2.bf16.msra.mxu0 0
    %821 = vmatprep.subr.bf16.mxu0 0
    %822 = vmatpush2.bf16.msra.mxu0 0
    %823 = vmatprep.subr.bf16.mxu0 0
    %824 = vmatpush2.bf16.msra.mxu0 0
    %825 = vmatprep.subr.bf16.mxu0 0
    %826 = vmatpush2.bf16.msra.mxu0 0
    %827 = vmatprep.subr.bf16.mxu0 0
    %828 = vmatpush2.bf16.msra.mxu0 0
    %829 = vmatprep.subr.bf16.mxu0 0
    %830 = vmatpush2.bf16.msra.mxu0 0
    %831 = vmatprep.subr.bf16.mxu0 0
    %832 = vmatpush2.bf16.msra.mxu0 0
    %833 = vmatprep.mubr.bf16.mxu0 0
    %834 = vmatmul.mubr.bf16.gmra.mxu0 %v799
    %v835 = vpop.f32.mrf.mxu0
    %v836 = vadd.f32 0.0, %v835
    %v837 = vpop.f32.mrf.mxu0
    %v838 = vpop.f32.mrf.mxu0
    %v839 = vadd.f32 0.0, %v838
    %v840 = vpop.f32.mrf.mxu0
    %841 = vdwg.mxu0
    %844 = vrot.lane.b32.xlu0 %v594, 8
    %v845 = vpop.permute.xlu0 %844
    %846 = vrot.lane.b32.xlu0 %v597, 8
    %v847 = vpop.permute.xlu0 %846
    %852 = vrot.lane.b32.xlu0 %v715, 16
    %v853 = vpop.permute.xlu0 %852
    %854 = vrot.lane.b32.xlu0 %v718, 16
    %v855 = vpop.permute.xlu0 %854
    %860 = vrot.lane.b32.xlu0 %v836, 24
    %v861 = vpop.permute.xlu0 %860
    %862 = vrot.lane.b32.xlu0 %v839, 24
    %v863 = vpop.permute.xlu0 %862
    %v866 = vsel %vm360, %v473, %v845
    %v867 = vsel %vm360, %v476, %v847
    %v868 = vsel %vm408, %v866, %v853
    %v869 = vsel %vm408, %v867, %v855
    %vm870 = vcmask 195584
    %v871 = vsel %vm870, %v868, %v861
    %v872 = vsel %vm870, %v869, %v863
    %v873 = vld [vmem:[#allocation2 + $0xc] sm:$0xf]
    %v874 = vld [vmem:[#allocation2 + $0x50] sm:$0xf]
    %v875 = vld [vmem:[#allocation2 + $0x94] sm:$0xf]
    %v876 = vld [vmem:[#allocation2 + $0xd8] sm:$0xf]
    %v877 = vpack.c.bf16 %v872, %v871
    %v878 = vld [vmem:[#allocation7 + $0x7] sm:$0x1]
    %v879 = vlaneseq
    %v880 = vshrl.u32 %v879, 7
    %v881 = vsub.s32 0, %v880
    %v882 = vrot.slane %v878, %v881
    %v887 = vunpack.c.l.b16 %v873
    %v888 = vunpack.c.l.b16 %v874
    %v889 = vunpack.c.l.b16 %v875
    %v890 = vunpack.c.l.b16 %v876
    %v891 = vpack.c.b16 %v888, %v887
    %v892 = vpack.c.b16 %v890, %v889
    %v896 = vsel %vm70, %v877, 0
    %898 = vmatprep.subr.bf16.mxu0 0
    %899 = vmatpush1.bf16.msra.mxu0 0
    %900 = vmatprep.subr.bf16.mxu0 0
    %901 = vmatpush1.bf16.msra.mxu0 0
    %902 = vmatprep.subr.bf16.mxu0 0
    %903 = vmatpush1.bf16.msra.mxu0 0
    %904 = vmatprep.subr.bf16.mxu0 0
    %905 = vmatpush1.bf16.msra.mxu0 0
    %906 = vmatprep.subr.bf16.mxu0 0
    %907 = vmatpush1.bf16.msra.mxu0 0
    %908 = vmatprep.subr.bf16.mxu0 0
    %909 = vmatpush1.bf16.msra.mxu0 0
    %910 = vmatprep.subr.bf16.mxu0 0
    %911 = vmatpush1.bf16.msra.mxu0 %v892
    %912 = vmatprep.subr.bf16.mxu0 0
    %913 = vmatpush1.bf16.msra.mxu0 %v891
    %914 = vmatprep.subr.bf16.mxu0 0
    %915 = vmatpush2.bf16.msra.mxu0 0
    %916 = vmatprep.subr.bf16.mxu0 0
    %917 = vmatpush2.bf16.msra.mxu0 0
    %918 = vmatprep.subr.bf16.mxu0 0
    %919 = vmatpush2.bf16.msra.mxu0 0
    %920 = vmatprep.subr.bf16.mxu0 0
    %921 = vmatpush2.bf16.msra.mxu0 0
    %922 = vmatprep.subr.bf16.mxu0 0
    %923 = vmatpush2.bf16.msra.mxu0 0
    %924 = vmatprep.subr.bf16.mxu0 0
    %925 = vmatpush2.bf16.msra.mxu0 0
    %926 = vmatprep.subr.bf16.mxu0 0
    %927 = vmatpush2.bf16.msra.mxu0 0
    %928 = vmatprep.subr.bf16.mxu0 0
    %929 = vmatpush2.bf16.msra.mxu0 0
    %930 = vmatprep.mubr.bf16.mxu0 0
    %931 = vmatmul.mubr.bf16.gmra.mxu0 %v896
    %v932 = vpop.f32.mrf.mxu0
    %v933 = vadd.f32 %v882, %v932
    %v934 = vpop.f32.mrf.mxu0
    %v935 = vpop.f32.mrf.mxu0
    %v936 = vadd.f32 %v882, %v935
    %v937 = vpop.f32.mrf.mxu0
    %938 = vdwg.mxu0
    %v939 = vadd.f32 %v284, %v933
    %v940 = vadd.f32 %v287, %v936
    %v941 = vsel %vm70, %v939, 0.0
    %942 = vadd.xlane.f32.xlu0 %v941
    %v943 = vpop.xlane.xlu0 %942
    %v944 = vsel %vm70, %v940, 0.0
    %945 = vadd.xlane.f32.xlu0 %v944
    %v946 = vpop.xlane.xlu0 %945
    %v947 = vrcp.pop 32.0
    %v948 = vmul.f32 %v943, %v947
    %v949 = vmul.f32 %v946, %v947
    %v950 = vsub.f32 %v939, %v948
    %v951 = vsub.f32 %v940, %v949
    %v952 = vmul.f32 %v950, %v950
    %v953 = vmul.f32 %v951, %v951
    %v954 = vsel %vm70, %v952, 0.0
    %955 = vadd.xlane.f32.xlu0 %v954
    %v956 = vpop.xlane.xlu0 %955
    %v957 = vsel %vm70, %v953, 0.0
    %958 = vadd.xlane.f32.xlu0 %v957
    %v959 = vpop.xlane.xlu0 %958
    %v960 = vmul.f32 %v956, %v947
    %v961 = vmul.f32 %v959, %v947
    %v962 = vadd.f32 %v960, 1e-12
    %v963 = vadd.f32 %v961, 1e-12
    %v964 = vrsqrt.pop %v962
    %v965 = vrsqrt.pop %v963
    %v966 = vmul.f32 %v950, %v964
    %v967 = vmul.f32 %v951, %v965
    %v968 = vld [vmem:[#allocation7 + $0x8] sm:$0x1]
    %v969 = vlaneseq
    %v970 = vshrl.u32 %v969, 7
    %v971 = vsub.s32 0, %v970
    %v972 = vrot.slane %v968, %v971
    %v973 = vmul.f32 %v966, %v972
    %v974 = vmul.f32 %v967, %v972
    %v975 = vld [vmem:[#allocation7 + $0x9] sm:$0x1]
    %v976 = vlaneseq
    %v977 = vshrl.u32 %v976, 7
    %v978 = vsub.s32 0, %v977
    %v979 = vrot.slane %v975, %v978
    %v980 = vadd.f32 %v973, %v979
    %v981 = vadd.f32 %v974, %v979
    %v982 = vld [vmem:[#allocation2 + $0x10] sm:$0xf]
    %v983 = vld [vmem:[#allocation2 + $0x54] sm:$0xf]
    %v984 = vld [vmem:[#allocation2 + $0x98] sm:$0xf]
    %v985 = vld [vmem:[#allocation2 + $0xdc] sm:$0xf]
    %v986 = vpack.c.bf16 %v981, %v980
    %v987 = vld [vmem:[#allocation7 + $0xa] sm:$0x1]
    %v988 = vlaneseq
    %v989 = vshrl.u32 %v988, 7
    %v990 = vsub.s32 0, %v989
    %v991 = vrot.slane %v987, %v990
    %v996 = vunpack.c.l.b16 %v982
    %v997 = vunpack.c.l.b16 %v983
    %v998 = vunpack.c.l.b16 %v984
    %v999 = vunpack.c.l.b16 %v985
    %v1000 = vpack.c.b16 %v997, %v996
    %v1001 = vpack.c.b16 %v999, %v998
    %v1005 = vsel %vm70, %v986, 0
    %1007 = vmatprep.subr.bf16.mxu0 0
    %1008 = vmatpush1.bf16.msra.mxu0 0
    %1009 = vmatprep.subr.bf16.mxu0 0
    %1010 = vmatpush1.bf16.msra.mxu0 0
    %1011 = vmatprep.subr.bf16.mxu0 0
    %1012 = vmatpush1.bf16.msra.mxu0 0
    %1013 = vmatprep.subr.bf16.mxu0 0
    %1014 = vmatpush1.bf16.msra.mxu0 0
    %1015 = vmatprep.subr.bf16.mxu0 0
    %1016 = vmatpush1.bf16.msra.mxu0 0
    %1017 = vmatprep.subr.bf16.mxu0 0
    %1018 = vmatpush1.bf16.msra.mxu0 0
    %1019 = vmatprep.subr.bf16.mxu0 0
    %1020 = vmatpush1.bf16.msra.mxu0 %v1001
    %1021 = vmatprep.subr.bf16.mxu0 0
    %1022 = vmatpush1.bf16.msra.mxu0 %v1000
    %1023 = vmatprep.subr.bf16.mxu0 0
    %1024 = vmatpush2.bf16.msra.mxu0 0
    %1025 = vmatprep.subr.bf16.mxu0 0
    %1026 = vmatpush2.bf16.msra.mxu0 0
    %1027 = vmatprep.subr.bf16.mxu0 0
    %1028 = vmatpush2.bf16.msra.mxu0 0
    %1029 = vmatprep.subr.bf16.mxu0 0
    %1030 = vmatpush2.bf16.msra.mxu0 0
    %1031 = vmatprep.subr.bf16.mxu0 0
    %1032 = vmatpush2.bf16.msra.mxu0 0
    %1033 = vmatprep.subr.bf16.mxu0 0
    %1034 = vmatpush2.bf16.msra.mxu0 0
    %1035 = vmatprep.subr.bf16.mxu0 0
    %1036 = vmatpush2.bf16.msra.mxu0 0
    %1037 = vmatprep.subr.bf16.mxu0 0
    %1038 = vmatpush2.bf16.msra.mxu0 0
    %1039 = vmatprep.mubr.bf16.mxu0 0
    %1040 = vmatmul.mubr.bf16.gmra.mxu0 %v1005
    %v1041 = vpop.f32.mrf.mxu0
    %v1042 = vadd.f32 %v991, %v1041
    %v1043 = vpop.f32.mrf.mxu0
    %v1044 = vpop.f32.mrf.mxu0
    %v1045 = vadd.f32 %v991, %v1044
    %v1046 = vpop.f32.mrf.mxu0
    %1047 = vdwg.mxu0
    %v1048 = vmul.f32 %v1042, 0.5
    %v1049 = vmul.f32 %v1045, 0.5
    %v1050 = vmul.f32 %v1042, 0.044715
    %v1051 = vmul.f32 %v1045, 0.044715
    %v1052 = vmul.f32 %v1050, %v1042
    %v1053 = vmul.f32 %v1051, %v1045
    %v1054 = vmul.f32 %v1052, %v1042
    %v1055 = vmul.f32 %v1053, %v1045
    %v1056 = vadd.f32 %v1042, %v1054
    %v1057 = vadd.f32 %v1045, %v1055
    %v1058 = vmul.f32 %v1056, 0.7978846
    %v1059 = vmul.f32 %v1057, 0.7978846
    %v1060 = vtanh.pop %v1058
    %v1061 = vtanh.pop %v1059
    %v1062 = vadd.f32 %v1060, 1.0
    %v1063 = vadd.f32 %v1061, 1.0
    %v1064 = vmul.f32 %v1048, %v1062
    %v1065 = vmul.f32 %v1049, %v1063
    %v1066 = vld [vmem:[#allocation5] sm:$0xf]
    %v1067 = vld [vmem:[#allocation5 + $0x8] sm:$0xf]
    %v1068 = vld [vmem:[#allocation5 + $0x10] sm:$0xf]
    %v1069 = vld [vmem:[#allocation5 + $0x18] sm:$0xf]
    %v1070 = vld [vmem:[#allocation5 + $0x20] sm:$0xf]
    %v1071 = vld [vmem:[#allocation5 + $0x28] sm:$0xf]
    %v1072 = vld [vmem:[#allocation5 + $0x30] sm:$0xf]
    %v1073 = vld [vmem:[#allocation5 + $0x38] sm:$0xf]
    %v1074 = vpack.c.bf16 %v1065, %v1064
    %v1075 = vld [vmem:[#allocation7 + $0xb] sm:$0x1]
    %v1076 = vlaneseq
    %v1077 = vshrl.u32 %v1076, 7
    %v1078 = vsub.s32 0, %v1077
    %v1079 = vrot.slane %v1075, %v1078
    %v1088 = vunpack.c.l.b16 %v1066
    %v1089 = vunpack.c.l.b16 %v1067
    %v1090 = vunpack.c.l.b16 %v1068
    %v1091 = vunpack.c.l.b16 %v1069
    %v1092 = vunpack.c.l.b16 %v1070
    %v1093 = vunpack.c.l.b16 %v1071
    %v1094 = vunpack.c.l.b16 %v1072
    %v1095 = vunpack.c.l.b16 %v1073
    %v1096 = vpack.c.b16 %v1089, %v1088
    %v1097 = vpack.c.b16 %v1091, %v1090
    %v1098 = vpack.c.b16 %v1093, %v1092
    %v1099 = vpack.c.b16 %v1095, %v1094
    %vm1104 = vcmask 523264
    %v1106 = vsel %vm1104, %v1074, 0
    %1108 = vmatprep.subr.bf16.mxu0 0
    %1109 = vmatpush1.bf16.msra.mxu0 0
    %1110 = vmatprep.subr.bf16.mxu0 0
    %1111 = vmatpush1.bf16.msra.mxu0 0
    %1112 = vmatprep.subr.bf16.mxu0 0
    %1113 = vmatpush1.bf16.msra.mxu0 0
    %1114 = vmatprep.subr.bf16.mxu0 0
    %1115 = vmatpush1.bf16.msra.mxu0 0
    %1116 = vmatprep.subr.bf16.mxu0 0
    %1117 = vmatpush1.bf16.msra.mxu0 %v1099
    %1118 = vmatprep.subr.bf16.mxu0 0
    %1119 = vmatpush1.bf16.msra.mxu0 %v1098
    %1120 = vmatprep.subr.bf16.mxu0 0
    %1121 = vmatpush1.bf16.msra.mxu0 %v1097
    %1122 = vmatprep.subr.bf16.mxu0 0
    %1123 = vmatpush1.bf16.msra.mxu0 %v1096
    %1124 = vmatprep.subr.bf16.mxu0 0
    %1125 = vmatpush2.bf16.msra.mxu0 0
    %1126 = vmatprep.subr.bf16.mxu0 0
    %1127 = vmatpush2.bf16.msra.mxu0 0
    %1128 = vmatprep.subr.bf16.mxu0 0
    %1129 = vmatpush2.bf16.msra.mxu0 0
    %1130 = vmatprep.subr.bf16.mxu0 0
    %1131 = vmatpush2.bf16.msra.mxu0 0
    %1132 = vmatprep.subr.bf16.mxu0 0
    %1133 = vmatpush2.bf16.msra.mxu0 0
    %1134 = vmatprep.subr.bf16.mxu0 0
    %1135 = vmatpush2.bf16.msra.mxu0 0
    %1136 = vmatprep.subr.bf16.mxu0 0
    %1137 = vmatpush2.bf16.msra.mxu0 0
    %1138 = vmatprep.subr.bf16.mxu0 0
    %1139 = vmatpush2.bf16.msra.mxu0 0
    %1140 = vmatprep.mubr.bf16.mxu0 0
    %1141 = vmatmul.mubr.bf16.gmra.mxu0 %v1106
    %v1142 = vpop.f32.mrf.mxu0
    %v1143 = vadd.f32 %v1079, %v1142
    %v1144 = vpop.f32.mrf.mxu0
    %v1145 = vpop.f32.mrf.mxu0
    %v1146 = vadd.f32 %v1079, %v1145
    %v1147 = vpop.f32.mrf.mxu0
    %1148 = vdwg.mxu0
    %v1149 = vadd.f32 %v980, %v1143
    %v1150 = vadd.f32 %v981, %v1146
    %v1151 = vsel %vm70, %v1149, 0.0
    %1152 = vadd.xlane.f32.xlu0 %v1151
    %v1153 = vpop.xlane.xlu0 %1152
    %v1154 = vsel %vm70, %v1150, 0.0
    %1155 = vadd.xlane.f32.xlu0 %v1154
    %v1156 = vpop.xlane.xlu0 %1155
    %v1157 = vmul.f32 %v1153, %v947
    %v1158 = vmul.f32 %v1156, %v947
    %v1159 = vsub.f32 %v1149, %v1157
    %v1160 = vsub.f32 %v1150, %v1158
    %v1161 = vmul.f32 %v1159, %v1159
    %v1162 = vmul.f32 %v1160, %v1160
    %v1163 = vsel %vm70, %v1161, 0.0
    %1164 = vadd.xlane.f32.xlu0 %v1163
    %v1165 = vpop.xlane.xlu0 %1164
    %v1166 = vsel %vm70, %v1162, 0.0
    %1167 = vadd.xlane.f32.xlu0 %v1166
    %v1168 = vpop.xlane.xlu0 %1167
    %v1169 = vmul.f32 %v1165, %v947
    %v1170 = vmul.f32 %v1168, %v947
    %v1171 = vadd.f32 %v1169, 1e-12
    %v1172 = vadd.f32 %v1170, 1e-12
    %v1173 = vrsqrt.pop %v1171
    %v1174 = vrsqrt.pop %v1172
    %v1175 = vmul.f32 %v1159, %v1173
    %v1176 = vmul.f32 %v1160, %v1174
    %v1177 = vld [vmem:[#allocation7 + $0xc] sm:$0x1]
    %v1178 = vlaneseq
    %v1179 = vshrl.u32 %v1178, 7
    %v1180 = vsub.s32 0, %v1179
    %v1181 = vrot.slane %v1177, %v1180
    %v1182 = vmul.f32 %v1175, %v1181
    %v1183 = vmul.f32 %v1176, %v1181
    %v1184 = vld [vmem:[#allocation7 + $0xd] sm:$0x1]
    %v1185 = vlaneseq
    %v1186 = vshrl.u32 %v1185, 7
    %v1187 = vsub.s32 0, %v1186
    %v1188 = vrot.slane %v1184, %v1187
    %v1189 = vadd.f32 %v1182, %v1188
    %v1190 = vadd.f32 %v1183, %v1188
    %v1191 = vpack.c.bf16 %v1190, %v1189
    %v1193 = vsel %vm70, %v1191, 0
    %1195 = vmatprep.subr.bf16.mxu0 0
    %1196 = vmatpush1.bf16.msra.mxu0 0
    %1197 = vmatprep.subr.bf16.mxu0 0
    %1198 = vmatpush1.bf16.msra.mxu0 0
    %1199 = vmatprep.subr.bf16.mxu0 0
    %1200 = vmatpush1.bf16.msra.mxu0 0
    %1201 = vmatprep.subr.bf16.mxu0 0
    %1202 = vmatpush1.bf16.msra.mxu0 0
    %1203 = vmatprep.subr.bf16.mxu0 0
    %1204 = vmatpush1.bf16.msra.mxu0 0
    %1205 = vmatprep.subr.bf16.mxu0 0
    %1206 = vmatpush1.bf16.msra.mxu0 0
    %1207 = vmatprep.subr.bf16.mxu0 0
    %1208 = vmatpush1.bf16.msra.mxu0 %v309
    %1209 = vmatprep.subr.bf16.mxu0 0
    %1210 = vmatpush1.bf16.msra.mxu0 %v308
    %1211 = vmatprep.subr.bf16.mxu0 0
    %1212 = vmatpush2.bf16.msra.mxu0 0
    %1213 = vmatprep.subr.bf16.mxu0 0
    %1214 = vmatpush2.bf16.msra.mxu0 0
    %1215 = vmatprep.subr.bf16.mxu0 0
    %1216 = vmatpush2.bf16.msra.mxu0 0
    %1217 = vmatprep.subr.bf16.mxu0 0
    %1218 = vmatpush2.bf16.msra.mxu0 0
    %1219 = vmatprep.subr.bf16.mxu0 0
    %1220 = vmatpush2.bf16.msra.mxu0 0
    %1221 = vmatprep.subr.bf16.mxu0 0
    %1222 = vmatpush2.bf16.msra.mxu0 0
    %1223 = vmatprep.subr.bf16.mxu0 0
    %1224 = vmatpush2.bf16.msra.mxu0 0
    %1225 = vmatprep.subr.bf16.mxu0 0
    %1226 = vmatpush2.bf16.msra.mxu0 0
    %1227 = vmatprep.mubr.bf16.mxu0 0
    %1228 = vmatmul.mubr.bf16.gmra.mxu0 %v1193
    %v1229 = vpop.f32.mrf.mxu0
    %v1230 = vadd.f32 %v299, %v1229
    %v1231 = vpop.f32.mrf.mxu0
    %v1232 = vpop.f32.mrf.mxu0
    %v1233 = vadd.f32 %v299, %v1232
    %v1234 = vpop.f32.mrf.mxu0
    %1235 = vdwg.mxu0
    %v1236 = vpack.c.bf16 %v1233, %v1230
    %1238 = vrot.lane.b32.xlu0 %v1236, 96
    %v1239 = vpop.permute.xlu0 %1238
    %v1241 = vsel %vm360, %v1236, 0
    %v1244 = vsel %vm360, %v1239, 0
    %1246 = vmatprep.subr.bf16.mxu0 0
    %1247 = vmatpush1.bf16.xpose.msra.mxu0 0
    %1248 = vmatprep.subr.bf16.mxu0 0
    %1249 = vmatpush1.bf16.xpose.msra.mxu0 0
    %1250 = vmatprep.subr.bf16.mxu0 0
    %1251 = vmatpush1.bf16.xpose.msra.mxu0 0
    %1252 = vmatprep.subr.bf16.mxu0 0
    %1253 = vmatpush1.bf16.xpose.msra.mxu0 0
    %1254 = vmatprep.subr.bf16.mxu0 0
    %1255 = vmatpush1.bf16.xpose.msra.mxu0 0
    %1256 = vmatprep.subr.bf16.mxu0 0
    %1257 = vmatpush1.bf16.xpose.msra.mxu0 0
    %1258 = vmatprep.subr.bf16.mxu0 0
    %1259 = vmatpush1.bf16.xpose.msra.mxu0 0
    %1260 = vmatprep.subr.bf16.mxu0 0
    %1261 = vmatpush1.bf16.xpose.msra.mxu0 %v1244
    %1262 = vmatprep.subr.bf16.mxu0 0
    %1263 = vmatpush2.bf16.xpose.msra.mxu0 0
    %1264 = vmatprep.subr.bf16.mxu0 0
    %1265 = vmatpush2.bf16.xpose.msra.mxu0 0
    %1266 = vmatprep.subr.bf16.mxu0 0
    %1267 = vmatpush2.bf16.xpose.msra.mxu0 0
    %1268 = vmatprep.subr.bf16.mxu0 0
    %1269 = vmatpush2.bf16.xpose.msra.mxu0 0
    %1270 = vmatprep.subr.bf16.mxu0 0
    %1271 = vmatpush2.bf16.xpose.msra.mxu0 0
    %1272 = vmatprep.subr.bf16.mxu0 0
    %1273 = vmatpush2.bf16.xpose.msra.mxu0 0
    %1274 = vmatprep.subr.bf16.mxu0 0
    %1275 = vmatpush2.bf16.xpose.msra.mxu0 0
    %1276 = vmatprep.subr.bf16.mxu0 0
    %1277 = vmatpush2.bf16.xpose.msra.mxu0 0
    %1278 = vmatprep.mubr.bf16.mxu0 0
    %1279 = vmatmul.mubr.bf16.gmra.mxu0 %v1241
    %v1280 = vpop.f32.mrf.mxu0
    %v1281 = vadd.f32 %v66, %v1280
    %v1282 = vpop.f32.mrf.mxu0
    %v1283 = vpop.f32.mrf.mxu0
    %v1284 = vadd.f32 %v67, %v1283
    %v1285 = vpop.f32.mrf.mxu0
    %1286 = vdwg.mxu0
    %v1287 = vsel %vm408, %v1281, -inf
    %1288 = vmax.xlane.f32.xlu0 %v1287
    %v1289 = vpop.xlane.xlu0 %1288
    %v1290 = vsel %vm408, %v1284, -inf
    %1291 = vmax.xlane.f32.xlu0 %v1290
    %v1292 = vpop.xlane.xlu0 %1291
    %v1293 = vsub.f32 %v1281, %v1289
    %v1294 = vsub.f32 %v1284, %v1292
    %v1295 = vmul.f32 %v1293, 1.442695
    %v1296 = vpow.pop %v1295
    %v1297 = vmul.f32 %v1294, 1.442695
    %v1298 = vpow.pop %v1297
    %v1299 = vsel %vm408, %v1296, 0.0
    %1300 = vadd.xlane.f32.xlu0 %v1299
    %v1301 = vpop.xlane.xlu0 %1300
    %v1302 = vsel %vm408, %v1298, 0.0
    %1303 = vadd.xlane.f32.xlu0 %v1302
    %v1304 = vpop.xlane.xlu0 %1303
    %v1305 = vrcp.pop %v1301
    %v1306 = vmul.f32 %v1296, %v1305
    %v1307 = vrcp.pop %v1304
    %v1308 = vmul.f32 %v1298, %v1307
    %v1309 = vpack.c.bf16 %v1308, %v1306
    %1310 = vrot.lane.b32.xlu0 %v1236, 64
    %v1311 = vpop.permute.xlu0 %1310
    %v1314 = vsel %vm408, %v1309, 0
    %1316 = vmatprep.subr.bf16.mxu0 0
    %1317 = vmatpush1.bf16.msra.mxu0 0
    %1318 = vmatprep.subr.bf16.mxu0 0
    %1319 = vmatpush1.bf16.msra.mxu0 0
    %1320 = vmatprep.subr.bf16.mxu0 0
    %1321 = vmatpush1.bf16.msra.mxu0 0
    %1322 = vmatprep.subr.bf16.mxu0 0
    %1323 = vmatpush1.bf16.msra.mxu0 0
    %1324 = vmatprep.subr.bf16.mxu0 0
    %1325 = vmatpush1.bf16.msra.mxu0 0
    %1326 = vmatprep.subr.bf16.mxu0 0
    %1327 = vmatpush1.bf16.msra.mxu0 0
    %1328 = vmatprep.subr.bf16.mxu0 0
    %1329 = vmatpush1.bf16.msra.mxu0 0
    %1330 = vmatprep.subr.bf16.mxu0 0
    %1331 = vmatpush1.bf16.msra.mxu0 %v1311
    %1332 = vmatprep.subr.bf16.mxu0 0
    %1333 = vmatpush2.bf16.msra.mxu0 0
    %1334 = vmatprep.subr.bf16.mxu0 0
    %1335 = vmatpush2.bf16.msra.mxu0 0
    %1336 = vmatprep.subr.bf16.mxu0 0
    %1337 = vmatpush2.bf16.msra.mxu0 0
    %1338 = vmatprep.subr.bf16.mxu0 0
    %1339 = vmatpush2.bf16.msra.mxu0 0
    %1340 = vmatprep.subr.bf16.mxu0 0
    %1341 = vmatpush2.bf16.msra.mxu0 0
    %1342 = vmatprep.subr.bf16.mxu0 0
    %1343 = vmatpush2.bf16.msra.mxu0 0
    %1344 = vmatprep.subr.bf16.mxu0 0
    %1345 = vmatpush2.bf16.msra.mxu0 0
    %1346 = vmatprep.subr.bf16.mxu0 0
    %1347 = vmatpush2.bf16.msra.mxu0 0
    %1348 = vmatprep.mubr.bf16.mxu0 0
    %1349 = vmatmul.mubr.bf16.gmra.mxu0 %v1314
    %v1350 = vpop.f32.mrf.mxu0
    %v1351 = vadd.f32 0.0, %v1350
    %v1352 = vpop.f32.mrf.mxu0
    %v1353 = vpop.f32.mrf.mxu0
    %v1354 = vadd.f32 0.0, %v1353
    %v1355 = vpop.f32.mrf.mxu0
    %1356 = vdwg.mxu0
    %1357 = vrot.lane.b32.xlu0 %v1236, 120
    %v1358 = vpop.permute.xlu0 %1357
    %1359 = vrot.lane.b32.xlu0 %v1236, 88
    %v1360 = vpop.permute.xlu0 %1359
    %v1362 = vsel %vm360, %v1358, 0
    %v1365 = vsel %vm360, %v1360, 0
    %1367 = vmatprep.subr.bf16.mxu0 0
    %1368 = vmatpush1.bf16.xpose.msra.mxu0 0
    %1369 = vmatprep.subr.bf16.mxu0 0
    %1370 = vmatpush1.bf16.xpose.msra.mxu0 0
    %1371 = vmatprep.subr.bf16.mxu0 0
    %1372 = vmatpush1.bf16.xpose.msra.mxu0 0
    %1373 = vmatprep.subr.bf16.mxu0 0
    %1374 = vmatpush1.bf16.xpose.msra.mxu0 0
    %1375 = vmatprep.subr.bf16.mxu0 0
    %1376 = vmatpush1.bf16.xpose.msra.mxu0 0
    %1377 = vmatprep.subr.bf16.mxu0 0
    %1378 = vmatpush1.bf16.xpose.msra.mxu0 0
    %1379 = vmatprep.subr.bf16.mxu0 0
    %1380 = vmatpush1.bf16.xpose.msra.mxu0 0
    %1381 = vmatprep.subr.bf16.mxu0 0
    %1382 = vmatpush1.bf16.xpose.msra.mxu0 %v1365
    %1383 = vmatprep.subr.bf16.mxu0 0
    %1384 = vmatpush2.bf16.xpose.msra.mxu0 0
    %1385 = vmatprep.subr.bf16.mxu0 0
    %1386 = vmatpush2.bf16.xpose.msra.mxu0 0
    %1387 = vmatprep.subr.bf16.mxu0 0
    %1388 = vmatpush2.bf16.xpose.msra.mxu0 0
    %1389 = vmatprep.subr.bf16.mxu0 0
    %1390 = vmatpush2.bf16.xpose.msra.mxu0 0
    %1391 = vmatprep.subr.bf16.mxu0 0
    %1392 = vmatpush2.bf16.xpose.msra.mxu0 0
    %1393 = vmatprep.subr.bf16.mxu0 0
    %1394 = vmatpush2.bf16.xpose.msra.mxu0 0
    %1395 = vmatprep.subr.bf16.mxu0 0
    %1396 = vmatpush2.bf16.xpose.msra.mxu0 0
    %1397 = vmatprep.subr.bf16.mxu0 0
    %1398 = vmatpush2.bf16.xpose.msra.mxu0 0
    %1399 = vmatprep.mubr.bf16.mxu0 0
    %1400 = vmatmul.mubr.bf16.gmra.mxu0 %v1362
    %v1401 = vpop.f32.mrf.mxu0
    %v1402 = vadd.f32 %v66, %v1401
    %v1403 = vpop.f32.mrf.mxu0
    %v1404 = vpop.f32.mrf.mxu0
    %v1405 = vadd.f32 %v67, %v1404
    %v1406 = vpop.f32.mrf.mxu0
    %1407 = vdwg.mxu0
    %v1408 = vsel %vm408, %v1402, -inf
    %1409 = vmax.xlane.f32.xlu0 %v1408
    %v1410 = vpop.xlane.xlu0 %1409
    %v1411 = vsel %vm408, %v1405, -inf
    %1412 = vmax.xlane.f32.xlu0 %v1411
    %v1413 = vpop.xlane.xlu0 %1412
    %v1414 = vsub.f32 %v1402, %v1410
    %v1415 = vsub.f32 %v1405, %v1413
    %v1416 = vmul.f32 %v1414, 1.442695
    %v1417 = vpow.pop %v1416
    %v1418 = vmul.f32 %v1415, 1.442695
    %v1419 = vpow.pop %v1418
    %v1420 = vsel %vm408, %v1417, 0.0
    %1421 = vadd.xlane.f32.xlu0 %v1420
    %v1422 = vpop.xlane.xlu0 %1421
    %v1423 = vsel %vm408, %v1419, 0.0
    %1424 = vadd.xlane.f32.xlu0 %v1423
    %v1425 = vpop.xlane.xlu0 %1424
    %v1426 = vrcp.pop %v1422
    %v1427 = vmul.f32 %v1417, %v1426
    %v1428 = vrcp.pop %v1425
    %v1429 = vmul.f32 %v1419, %v1428
    %v1430 = vpack.c.bf16 %v1429, %v1427
    %1431 = vrot.lane.b32.xlu0 %v1236, 56
    %v1432 = vpop.permute.xlu0 %1431
    %v1435 = vsel %vm408, %v1430, 0
    %1437 = vmatprep.subr.bf16.mxu0 0
    %1438 = vmatpush1.bf16.msra.mxu0 0
    %1439 = vmatprep.subr.bf16.mxu0 0
    %1440 = vmatpush1.bf16.msra.mxu0 0
    %1441 = vmatprep.subr.bf16.mxu0 0
    %1442 = vmatpush1.bf16.msra.mxu0 0
    %1443 = vmatprep.subr.bf16.mxu0 0
    %1444 = vmatpush1.bf16.msra.mxu0 0
    %1445 = vmatprep.subr.bf16.mxu0 0
    %1446 = vmatpush1.bf16.msra.mxu0 0
    %1447 = vmatprep.subr.bf16.mxu0 0
    %1448 = vmatpush1.bf16.msra.mxu0 0
    %1449 = vmatprep.subr.bf16.mxu0 0
    %1450 = vmatpush1.bf16.msra.mxu0 0
    %1451 = vmatprep.subr.bf16.mxu0 0
    %1452 = vmatpush1.bf16.msra.mxu0 %v1432
    %1453 = vmatprep.subr.bf16.mxu0 0
    %1454 = vmatpush2.bf16.msra.mxu0 0
    %1455 = vmatprep.subr.bf16.mxu0 0
    %1456 = vmatpush2.bf16.msra.mxu0 0
    %1457 = vmatprep.subr.bf16.mxu0 0
    %1458 = vmatpush2.bf16.msra.mxu0 0
    %1459 = vmatprep.subr.bf16.mxu0 0
    %1460 = vmatpush2.bf16.msra.mxu0 0
    %1461 = vmatprep.subr.bf16.mxu0 0
    %1462 = vmatpush2.bf16.msra.mxu0 0
    %1463 = vmatprep.subr.bf16.mxu0 0
    %1464 = vmatpush2.bf16.msra.mxu0 0
    %1465 = vmatprep.subr.bf16.mxu0 0
    %1466 = vmatpush2.bf16.msra.mxu0 0
    %1467 = vmatprep.subr.bf16.mxu0 0
    %1468 = vmatpush2.bf16.msra.mxu0 0
    %1469 = vmatprep.mubr.bf16.mxu0 0
    %1470 = vmatmul.mubr.bf16.gmra.mxu0 %v1435
    %v1471 = vpop.f32.mrf.mxu0
    %v1472 = vadd.f32 0.0, %v1471
    %v1473 = vpop.f32.mrf.mxu0
    %v1474 = vpop.f32.mrf.mxu0
    %v1475 = vadd.f32 0.0, %v1474
    %v1476 = vpop.f32.mrf.mxu0
    %1477 = vdwg.mxu0
    %1478 = vrot.lane.b32.xlu0 %v1236, 112
    %v1479 = vpop.permute.xlu0 %1478
    %1480 = vrot.lane.b32.xlu0 %v1236, 80
    %v1481 = vpop.permute.xlu0 %1480
    %v1483 = vsel %vm360, %v1479, 0
    %v1486 = vsel %vm360, %v1481, 0
    %1488 = vmatprep.subr.bf16.mxu0 0
    %1489 = vmatpush1.bf16.xpose.msra.mxu0 0
    %1490 = vmatprep.subr.bf16.mxu0 0
    %1491 = vmatpush1.bf16.xpose.msra.mxu0 0
    %1492 = vmatprep.subr.bf16.mxu0 0
    %1493 = vmatpush1.bf16.xpose.msra.mxu0 0
    %1494 = vmatprep.subr.bf16.mxu0 0
    %1495 = vmatpush1.bf16.xpose.msra.mxu0 0
    %1496 = vmatprep.subr.bf16.mxu0 0
    %1497 = vmatpush1.bf16.xpose.msra.mxu0 0
    %1498 = vmatprep.subr.bf16.mxu0 0
    %1499 = vmatpush1.bf16.xpose.msra.mxu0 0
    %1500 = vmatprep.subr.bf16.mxu0 0
    %1501 = vmatpush1.bf16.xpose.msra.mxu0 0
    %1502 = vmatprep.subr.bf16.mxu0 0
    %1503 = vmatpush1.bf16.xpose.msra.mxu0 %v1486
    %1504 = vmatprep.subr.bf16.mxu0 0
    %1505 = vmatpush2.bf16.xpose.msra.mxu0 0
    %1506 = vmatprep.subr.bf16.mxu0 0
    %1507 = vmatpush2.bf16.xpose.msra.mxu0 0
    %1508 = vmatprep.subr.bf16.mxu0 0
    %1509 = vmatpush2.bf16.xpose.msra.mxu0 0
    %1510 = vmatprep.subr.bf16.mxu0 0
    %1511 = vmatpush2.bf16.xpose.msra.mxu0 0
    %1512 = vmatprep.subr.bf16.mxu0 0
    %1513 = vmatpush2.bf16.xpose.msra.mxu0 0
    %1514 = vmatprep.subr.bf16.mxu0 0
    %1515 = vmatpush2.bf16.xpose.msra.mxu0 0
    %1516 = vmatprep.subr.bf16.mxu0 0
    %1517 = vmatpush2.bf16.xpose.msra.mxu0 0
    %1518 = vmatprep.subr.bf16.mxu0 0
    %1519 = vmatpush2.bf16.xpose.msra.mxu0 0
    %1520 = vmatprep.mubr.bf16.mxu0 0
    %1521 = vmatmul.mubr.bf16.gmra.mxu0 %v1483
    %v1522 = vpop.f32.mrf.mxu0
    %v1523 = vadd.f32 %v66, %v1522
    %v1524 = vpop.f32.mrf.mxu0
    %v1525 = vpop.f32.mrf.mxu0
    %v1526 = vadd.f32 %v67, %v1525
    %v1527 = vpop.f32.mrf.mxu0
    %1528 = vdwg.mxu0
    %v1529 = vsel %vm408, %v1523, -inf
    %1530 = vmax.xlane.f32.xlu0 %v1529
    %v1531 = vpop.xlane.xlu0 %1530
    %v1532 = vsel %vm408, %v1526, -inf
    %1533 = vmax.xlane.f32.xlu0 %v1532
    %v1534 = vpop.xlane.xlu0 %1533
    %v1535 = vsub.f32 %v1523, %v1531
    %v1536 = vsub.f32 %v1526, %v1534
    %v1537 = vmul.f32 %v1535, 1.442695
    %v1538 = vpow.pop %v1537
    %v1539 = vmul.f32 %v1536, 1.442695
    %v1540 = vpow.pop %v1539
    %v1541 = vsel %vm408, %v1538, 0.0
    %1542 = vadd.xlane.f32.xlu0 %v1541
    %v1543 = vpop.xlane.xlu0 %1542
    %v1544 = vsel %vm408, %v1540, 0.0
    %1545 = vadd.xlane.f32.xlu0 %v1544
    %v1546 = vpop.xlane.xlu0 %1545
    %v1547 = vrcp.pop %v1543
    %v1548 = vmul.f32 %v1538, %v1547
    %v1549 = vrcp.pop %v1546
    %v1550 = vmul.f32 %v1540, %v1549
    %v1551 = vpack.c.bf16 %v1550, %v1548
    %1552 = vrot.lane.b32.xlu0 %v1236, 48
    %v1553 = vpop.permute.xlu0 %1552
    %v1556 = vsel %vm408, %v1551, 0
    %1558 = vmatprep.subr.bf16.mxu0 0
    %1559 = vmatpush1.bf16.msra.mxu0 0
    %1560 = vmatprep.subr.bf16.mxu0 0
    %1561 = vmatpush1.bf16.msra.mxu0 0
    %1562 = vmatprep.subr.bf16.mxu0 0
    %1563 = vmatpush1.bf16.msra.mxu0 0
    %1564 = vmatprep.subr.bf16.mxu0 0
    %1565 = vmatpush1.bf16.msra.mxu0 0
    %1566 = vmatprep.subr.bf16.mxu0 0
    %1567 = vmatpush1.bf16.msra.mxu0 0
    %1568 = vmatprep.subr.bf16.mxu0 0
    %1569 = vmatpush1.bf16.msra.mxu0 0
    %1570 = vmatprep.subr.bf16.mxu0 0
    %1571 = vmatpush1.bf16.msra.mxu0 0
    %1572 = vmatprep.subr.bf16.mxu0 0
    %1573 = vmatpush1.bf16.msra.mxu0 %v1553
    %1574 = vmatprep.subr.bf16.mxu0 0
    %1575 = vmatpush2.bf16.msra.mxu0 0
    %1576 = vmatprep.subr.bf16.mxu0 0
    %1577 = vmatpush2.bf16.msra.mxu0 0
    %1578 = vmatprep.subr.bf16.mxu0 0
    %1579 = vmatpush2.bf16.msra.mxu0 0
    %1580 = vmatprep.subr.bf16.mxu0 0
    %1581 = vmatpush2.bf16.msra.mxu0 0
    %1582 = vmatprep.subr.bf16.mxu0 0
    %1583 = vmatpush2.bf16.msra.mxu0 0
    %1584 = vmatprep.subr.bf16.mxu0 0
    %1585 = vmatpush2.bf16.msra.mxu0 0
    %1586 = vmatprep.subr.bf16.mxu0 0
    %1587 = vmatpush2.bf16.msra.mxu0 0
    %1588 = vmatprep.subr.bf16.mxu0 0
    %1589 = vmatpush2.bf16.msra.mxu0 0
    %1590 = vmatprep.mubr.bf16.mxu0 0
    %1591 = vmatmul.mubr.bf16.gmra.mxu0 %v1556
    %v1592 = vpop.f32.mrf.mxu0
    %v1593 = vadd.f32 0.0, %v1592
    %v1594 = vpop.f32.mrf.mxu0
    %v1595 = vpop.f32.mrf.mxu0
    %v1596 = vadd.f32 0.0, %v1595
    %v1597 = vpop.f32.mrf.mxu0
    %1598 = vdwg.mxu0
    %1599 = vrot.lane.b32.xlu0 %v1236, 104
    %v1600 = vpop.permute.xlu0 %1599
    %1601 = vrot.lane.b32.xlu0 %v1236, 72
    %v1602 = vpop.permute.xlu0 %1601
    %v1604 = vsel %vm360, %v1600, 0
    %v1607 = vsel %vm360, %v1602, 0
    %1609 = vmatprep.subr.bf16.mxu0 0
    %1610 = vmatpush1.bf16.xpose.msra.mxu0 0
    %1611 = vmatprep.subr.bf16.mxu0 0
    %1612 = vmatpush1.bf16.xpose.msra.mxu0 0
    %1613 = vmatprep.subr.bf16.mxu0 0
    %1614 = vmatpush1.bf16.xpose.msra.mxu0 0
    %1615 = vmatprep.subr.bf16.mxu0 0
    %1616 = vmatpush1.bf16.xpose.msra.mxu0 0
    %1617 = vmatprep.subr.bf16.mxu0 0
    %1618 = vmatpush1.bf16.xpose.msra.mxu0 0
    %1619 = vmatprep.subr.bf16.mxu0 0
    %1620 = vmatpush1.bf16.xpose.msra.mxu0 0
    %1621 = vmatprep.subr.bf16.mxu0 0
    %1622 = vmatpush1.bf16.xpose.msra.mxu0 0
    %1623 = vmatprep.subr.bf16.mxu0 0
    %1624 = vmatpush1.bf16.xpose.msra.mxu0 %v1607
    %1625 = vmatprep.subr.bf16.mxu0 0
    %1626 = vmatpush2.bf16.xpose.msra.mxu0 0
    %1627 = vmatprep.subr.bf16.mxu0 0
    %1628 = vmatpush2.bf16.xpose.msra.mxu0 0
    %1629 = vmatprep.subr.bf16.mxu0 0
    %1630 = vmatpush2.bf16.xpose.msra.mxu0 0
    %1631 = vmatprep.subr.bf16.mxu0 0
    %1632 = vmatpush2.bf16.xpose.msra.mxu0 0
    %1633 = vmatprep.subr.bf16.mxu0 0
    %1634 = vmatpush2.bf16.xpose.msra.mxu0 0
    %1635 = vmatprep.subr.bf16.mxu0 0
    %1636 = vmatpush2.bf16.xpose.msra.mxu0 0
    %1637 = vmatprep.subr.bf16.mxu0 0
    %1638 = vmatpush2.bf16.xpose.msra.mxu0 0
    %1639 = vmatprep.subr.bf16.mxu0 0
    %1640 = vmatpush2.bf16.xpose.msra.mxu0 0
    %1641 = vmatprep.mubr.bf16.mxu0 0
    %1642 = vmatmul.mubr.bf16.gmra.mxu0 %v1604
    %v1643 = vpop.f32.mrf.mxu0
    %v1644 = vadd.f32 %v66, %v1643
    %v1645 = vpop.f32.mrf.mxu0
    %v1646 = vpop.f32.mrf.mxu0
    %v1647 = vadd.f32 %v67, %v1646
    %v1648 = vpop.f32.mrf.mxu0
    %1649 = vdwg.mxu0
    %v1650 = vsel %vm408, %v1644, -inf
    %1651 = vmax.xlane.f32.xlu0 %v1650
    %v1652 = vpop.xlane.xlu0 %1651
    %v1653 = vsel %vm408, %v1647, -inf
    %1654 = vmax.xlane.f32.xlu0 %v1653
    %v1655 = vpop.xlane.xlu0 %1654
    %v1656 = vsub.f32 %v1644, %v1652
    %v1657 = vsub.f32 %v1647, %v1655
    %v1658 = vmul.f32 %v1656, 1.442695
    %v1659 = vpow.pop %v1658
    %v1660 = vmul.f32 %v1657, 1.442695
    %v1661 = vpow.pop %v1660
    %v1662 = vsel %vm408, %v1659, 0.0
    %1663 = vadd.xlane.f32.xlu0 %v1662
    %v1664 = vpop.xlane.xlu0 %1663
    %v1665 = vsel %vm408, %v1661, 0.0
    %1666 = vadd.xlane.f32.xlu0 %v1665
    %v1667 = vpop.xlane.xlu0 %1666
    %v1668 = vrcp.pop %v1664
    %v1669 = vmul.f32 %v1659, %v1668
    %v1670 = vrcp.pop %v1667
    %v1671 = vmul.f32 %v1661, %v1670
    %v1672 = vpack.c.bf16 %v1671, %v1669
    %1673 = vrot.lane.b32.xlu0 %v1236, 40
    %v1674 = vpop.permute.xlu0 %1673
    %v1677 = vsel %vm408, %v1672, 0
    %1679 = vmatprep.subr.bf16.mxu0 0
    %1680 = vmatpush1.bf16.msra.mxu0 0
    %1681 = vmatprep.subr.bf16.mxu0 0
    %1682 = vmatpush1.bf16.msra.mxu0 0
    %1683 = vmatprep.subr.bf16.mxu0 0
    %1684 = vmatpush1.bf16.msra.mxu0 0
    %1685 = vmatprep.subr.bf16.mxu0 0
    %1686 = vmatpush1.bf16.msra.mxu0 0
    %1687 = vmatprep.subr.bf16.mxu0 0
    %1688 = vmatpush1.bf16.msra.mxu0 0
    %1689 = vmatprep.subr.bf16.mxu0 0
    %1690 = vmatpush1.bf16.msra.mxu0 0
    %1691 = vmatprep.subr.bf16.mxu0 0
    %1692 = vmatpush1.bf16.msra.mxu0 0
    %1693 = vmatprep.subr.bf16.mxu0 0
    %1694 = vmatpush1.bf16.msra.mxu0 %v1674
    %1695 = vmatprep.subr.bf16.mxu0 0
    %1696 = vmatpush2.bf16.msra.mxu0 0
    %1697 = vmatprep.subr.bf16.mxu0 0
    %1698 = vmatpush2.bf16.msra.mxu0 0
    %1699 = vmatprep.subr.bf16.mxu0 0
    %1700 = vmatpush2.bf16.msra.mxu0 0
    %1701 = vmatprep.subr.bf16.mxu0 0
    %1702 = vmatpush2.bf16.msra.mxu0 0
    %1703 = vmatprep.subr.bf16.mxu0 0
    %1704 = vmatpush2.bf16.msra.mxu0 0
    %1705 = vmatprep.subr.bf16.mxu0 0
    %1706 = vmatpush2.bf16.msra.mxu0 0
    %1707 = vmatprep.subr.bf16.mxu0 0
    %1708 = vmatpush2.bf16.msra.mxu0 0
    %1709 = vmatprep.subr.bf16.mxu0 0
    %1710 = vmatpush2.bf16.msra.mxu0 0
    %1711 = vmatprep.mubr.bf16.mxu0 0
    %1712 = vmatmul.mubr.bf16.gmra.mxu0 %v1677
    %v1713 = vpop.f32.mrf.mxu0
    %v1714 = vadd.f32 0.0, %v1713
    %v1715 = vpop.f32.mrf.mxu0
    %v1716 = vpop.f32.mrf.mxu0
    %v1717 = vadd.f32 0.0, %v1716
    %v1718 = vpop.f32.mrf.mxu0
    %1719 = vdwg.mxu0
    %1722 = vrot.lane.b32.xlu0 %v1472, 8
    %v1723 = vpop.permute.xlu0 %1722
    %1724 = vrot.lane.b32.xlu0 %v1475, 8
    %v1725 = vpop.permute.xlu0 %1724
    %1730 = vrot.lane.b32.xlu0 %v1593, 16
    %v1731 = vpop.permute.xlu0 %1730
    %1732 = vrot.lane.b32.xlu0 %v1596, 16
    %v1733 = vpop.permute.xlu0 %1732
    %1738 = vrot.lane.b32.xlu0 %v1714, 24
    %v1739 = vpop.permute.xlu0 %1738
    %1740 = vrot.lane.b32.xlu0 %v1717, 24
    %v1741 = vpop.permute.xlu0 %1740
    %v1744 = vsel %vm360, %v1351, %v1723
    %v1745 = vsel %vm360, %v1354, %v1725
    %v1746 = vsel %vm408, %v1744, %v1731
    %v1747 = vsel %vm408, %v1745, %v1733
    %v1748 = vsel %vm870, %v1746, %v1739
    %v1749 = vsel %vm870, %v1747, %v1741
    %v1750 = vpack.c.bf16 %v1749, %v1748
    %v1752 = vsel %vm70, %v1750, 0
    %1754 = vmatprep.subr.bf16.mxu0 0
    %1755 = vmatpush1.bf16.msra.mxu0 0
    %1756 = vmatprep.subr.bf16.mxu0 0
    %1757 = vmatpush1.bf16.msra.mxu0 0
    %1758 = vmatprep.subr.bf16.mxu0 0
    %1759 = vmatpush1.bf16.msra.mxu0 0
    %1760 = vmatprep.subr.bf16.mxu0 0
    %1761 = vmatpush1.bf16.msra.mxu0 0
    %1762 = vmatprep.subr.bf16.mxu0 0
    %1763 = vmatpush1.bf16.msra.mxu0 0
    %1764 = vmatprep.subr.bf16.mxu0 0
    %1765 = vmatpush1.bf16.msra.mxu0 0
    %1766 = vmatprep.subr.bf16.mxu0 0
    %1767 = vmatpush1.bf16.msra.mxu0 %v892
    %1768 = vmatprep.subr.bf16.mxu0 0
    %1769 = vmatpush1.bf16.msra.mxu0 %v891
    %1770 = vmatprep.subr.bf16.mxu0 0
    %1771 = vmatpush2.bf16.msra.mxu0 0
    %1772 = vmatprep.subr.bf16.mxu0 0
    %1773 = vmatpush2.bf16.msra.mxu0 0
    %1774 = vmatprep.subr.bf16.mxu0 0
    %1775 = vmatpush2.bf16.msra.mxu0 0
    %1776 = vmatprep.subr.bf16.mxu0 0
    %1777 = vmatpush2.bf16.msra.mxu0 0
    %1778 = vmatprep.subr.bf16.mxu0 0
    %1779 = vmatpush2.bf16.msra.mxu0 0
    %1780 = vmatprep.subr.bf16.mxu0 0
    %1781 = vmatpush2.bf16.msra.mxu0 0
    %1782 = vmatprep.subr.bf16.mxu0 0
    %1783 = vmatpush2.bf16.msra.mxu0 0
    %1784 = vmatprep.subr.bf16.mxu0 0
    %1785 = vmatpush2.bf16.msra.mxu0 0
    %1786 = vmatprep.mubr.bf16.mxu0 0
    %1787 = vmatmul.mubr.bf16.gmra.mxu0 %v1752
    %v1788 = vpop.f32.mrf.mxu0
    %v1789 = vadd.f32 %v882, %v1788
    %v1790 = vpop.f32.mrf.mxu0
    %v1791 = vpop.f32.mrf.mxu0
    %v1792 = vadd.f32 %v882, %v1791
    %v1793 = vpop.f32.mrf.mxu0
    %1794 = vdwg.mxu0
    %v1795 = vadd.f32 %v1189, %v1789
    %v1796 = vadd.f32 %v1190, %v1792
    %v1797 = vsel %vm70, %v1795, 0.0
    %1798 = vadd.xlane.f32.xlu0 %v1797
    %v1799 = vpop.xlane.xlu0 %1798
    %v1800 = vsel %vm70, %v1796, 0.0
    %1801 = vadd.xlane.f32.xlu0 %v1800
    %v1802 = vpop.xlane.xlu0 %1801
    %v1803 = vmul.f32 %v1799, %v947
    %v1804 = vmul.f32 %v1802, %v947
    %v1805 = vsub.f32 %v1795, %v1803
    %v1806 = vsub.f32 %v1796, %v1804
    %v1807 = vmul.f32 %v1805, %v1805
    %v1808 = vmul.f32 %v1806, %v1806
    %v1809 = vsel %vm70, %v1807, 0.0
    %1810 = vadd.xlane.f32.xlu0 %v1809
    %v1811 = vpop.xlane.xlu0 %1810
    %v1812 = vsel %vm70, %v1808, 0.0
    %1813 = vadd.xlane.f32.xlu0 %v1812
    %v1814 = vpop.xlane.xlu0 %1813
    %v1815 = vmul.f32 %v1811, %v947
    %v1816 = vmul.f32 %v1814, %v947
    %v1817 = vadd.f32 %v1815, 1e-12
    %v1818 = vadd.f32 %v1816, 1e-12
    %v1819 = vrsqrt.pop %v1817
    %v1820 = vrsqrt.pop %v1818
    %v1821 = vmul.f32 %v1805, %v1819
    %v1822 = vmul.f32 %v1806, %v1820
    %v1823 = vmul.f32 %v1821, %v972
    %v1824 = vmul.f32 %v1822, %v972
    %v1825 = vadd.f32 %v1823, %v979
    %v1826 = vadd.f32 %v1824, %v979
    %v1827 = vpack.c.bf16 %v1826, %v1825
    %v1829 = vsel %vm70, %v1827, 0
    %1831 = vmatprep.subr.bf16.mxu0 0
    %1832 = vmatpush1.bf16.msra.mxu0 0
    %1833 = vmatprep.subr.bf16.mxu0 0
    %1834 = vmatpush1.bf16.msra.mxu0 0
    %1835 = vmatprep.subr.bf16.mxu0 0
    %1836 = vmatpush1.bf16.msra.mxu0 0
    %1837 = vmatprep.subr.bf16.mxu0 0
    %1838 = vmatpush1.bf16.msra.mxu0 0
    %1839 = vmatprep.subr.bf16.mxu0 0
    %1840 = vmatpush1.bf16.msra.mxu0 0
    %1841 = vmatprep.subr.bf16.mxu0 0
    %1842 = vmatpush1.bf16.msra.mxu0 0
    %1843 = vmatprep.subr.bf16.mxu0 0
    %1844 = vmatpush1.bf16.msra.mxu0 %v1001
    %1845 = vmatprep.subr.bf16.mxu0 0
    %1846 = vmatpush1.bf16.msra.mxu0 %v1000
    %1847 = vmatprep.subr.bf16.mxu0 0
    %1848 = vmatpush2.bf16.msra.mxu0 0
    %1849 = vmatprep.subr.bf16.mxu0 0
    %1850 = vmatpush2.bf16.msra.mxu0 0
    %1851 = vmatprep.subr.bf16.mxu0 0
    %1852 = vmatpush2.bf16.msra.mxu0 0
    %1853 = vmatprep.subr.bf16.mxu0 0
    %1854 = vmatpush2.bf16.msra.mxu0 0
    %1855 = vmatprep.subr.bf16.mxu0 0
    %1856 = vmatpush2.bf16.msra.mxu0 0
    %1857 = vmatprep.subr.bf16.mxu0 0
    %1858 = vmatpush2.bf16.msra.mxu0 0
    %1859 = vmatprep.subr.bf16.mxu0 0
    %1860 = vmatpush2.bf16.msra.mxu0 0
    %1861 = vmatprep.subr.bf16.mxu0 0
    %1862 = vmatpush2.bf16.msra.mxu0 0
    %1863 = vmatprep.mubr.bf16.mxu0 0
    %1864 = vmatmul.mubr.bf16.gmra.mxu0 %v1829
    %v1865 = vpop.f32.mrf.mxu0
    %v1866 = vadd.f32 %v991, %v1865
    %v1867 = vpop.f32.mrf.mxu0
    %v1868 = vpop.f32.mrf.mxu0
    %v1869 = vadd.f32 %v991, %v1868
    %v1870 = vpop.f32.mrf.mxu0
    %1871 = vdwg.mxu0
    %v1872 = vmul.f32 %v1866, 0.5
    %v1873 = vmul.f32 %v1869, 0.5
    %v1874 = vmul.f32 %v1866, 0.044715
    %v1875 = vmul.f32 %v1869, 0.044715
    %v1876 = vmul.f32 %v1874, %v1866
    %v1877 = vmul.f32 %v1875, %v1869
    %v1878 = vmul.f32 %v1876, %v1866
    %v1879 = vmul.f32 %v1877, %v1869
    %v1880 = vadd.f32 %v1866, %v1878
    %v1881 = vadd.f32 %v1869, %v1879
    %v1882 = vmul.f32 %v1880, 0.7978846
    %v1883 = vmul.f32 %v1881, 0.7978846
    %v1884 = vtanh.pop %v1882
    %v1885 = vtanh.pop %v1883
    %v1886 = vadd.f32 %v1884, 1.0
    %v1887 = vadd.f32 %v1885, 1.0
    %v1888 = vmul.f32 %v1872, %v1886
    %v1889 = vmul.f32 %v1873, %v1887
    %v1890 = vpack.c.bf16 %v1889, %v1888
    %v1892 = vsel %vm1104, %v1890, 0
    %1894 = vmatprep.subr.bf16.mxu0 0
    %1895 = vmatpush1.bf16.msra.mxu0 0
    %1896 = vmatprep.subr.bf16.mxu0 0
    %1897 = vmatpush1.bf16.msra.mxu0 0
    %1898 = vmatprep.subr.bf16.mxu0 0
    %1899 = vmatpush1.bf16.msra.mxu0 0
    %1900 = vmatprep.subr.bf16.mxu0 0
    %1901 = vmatpush1.bf16.msra.mxu0 0
    %1902 = vmatprep.subr.bf16.mxu0 0
    %1903 = vmatpush1.bf16.msra.mxu0 %v1099
    %1904 = vmatprep.subr.bf16.mxu0 0
    %1905 = vmatpush1.bf16.msra.mxu0 %v1098
    %1906 = vmatprep.subr.bf16.mxu0 0
    %1907 = vmatpush1.bf16.msra.mxu0 %v1097
    %1908 = vmatprep.subr.bf16.mxu0 0
    %1909 = vmatpush1.bf16.msra.mxu0 %v1096
    %1910 = vmatprep.subr.bf16.mxu0 0
    %1911 = vmatpush2.bf16.msra.mxu0 0
    %1912 = vmatprep.subr.bf16.mxu0 0
    %1913 = vmatpush2.bf16.msra.mxu0 0
    %1914 = vmatprep.subr.bf16.mxu0 0
    %1915 = vmatpush2.bf16.msra.mxu0 0
    %1916 = vmatprep.subr.bf16.mxu0 0
    %1917 = vmatpush2.bf16.msra.mxu0 0
    %1918 = vmatprep.subr.bf16.mxu0 0
    %1919 = vmatpush2.bf16.msra.mxu0 0
    %1920 = vmatprep.subr.bf16.mxu0 0
    %1921 = vmatpush2.bf16.msra.mxu0 0
    %1922 = vmatprep.subr.bf16.mxu0 0
    %1923 = vmatpush2.bf16.msra.mxu0 0
    %1924 = vmatprep.subr.bf16.mxu0 0
    %1925 = vmatpush2.bf16.msra.mxu0 0
    %1926 = vmatprep.mubr.bf16.mxu0 0
    %1927 = vmatmul.mubr.bf16.gmra.mxu0 %v1892
    %v1928 = vpop.f32.mrf.mxu0
    %v1929 = vadd.f32 %v1079, %v1928
    %v1930 = vpop.f32.mrf.mxu0
    %v1931 = vpop.f32.mrf.mxu0
    %v1932 = vadd.f32 %v1079, %v1931
    %v1933 = vpop.f32.mrf.mxu0
    %1934 = vdwg.mxu0
    %v1935 = vadd.f32 %v1825, %v1929
    %v1936 = vadd.f32 %v1826, %v1932
    %v1937 = vsel %vm70, %v1935, 0.0
    %1938 = vadd.xlane.f32.xlu0 %v1937
    %v1939 = vpop.xlane.xlu0 %1938
    %v1940 = vsel %vm70, %v1936, 0.0
    %1941 = vadd.xlane.f32.xlu0 %v1940
    %v1942 = vpop.xlane.xlu0 %1941
    %v1943 = vmul.f32 %v1939, %v947
    %v1944 = vmul.f32 %v1942, %v947
    %v1945 = vsub.f32 %v1935, %v1943
    %v1946 = vsub.f32 %v1936, %v1944
    %v1947 = vmul.f32 %v1945, %v1945
    %v1948 = vmul.f32 %v1946, %v1946
    %v1949 = vsel %vm70, %v1947, 0.0
    %1950 = vadd.xlane.f32.xlu0 %v1949
    %v1951 = vpop.xlane.xlu0 %1950
    %v1952 = vsel %vm70, %v1948, 0.0
    %1953 = vadd.xlane.f32.xlu0 %v1952
    %v1954 = vpop.xlane.xlu0 %1953
    %v1955 = vmul.f32 %v1951, %v947
    %v1956 = vmul.f32 %v1954, %v947
    %v1957 = vadd.f32 %v1955, 1e-12
    %v1958 = vadd.f32 %v1956, 1e-12
    %v1959 = vrsqrt.pop %v1957
    %v1960 = vrsqrt.pop %v1958
    %v1961 = vmul.f32 %v1945, %v1959
    %v1962 = vmul.f32 %v1946, %v1960
    %v1963 = vmul.f32 %v1961, %v1181
    %v1964 = vmul.f32 %v1962, %v1181
    %v1965 = vadd.f32 %v1963, %v1188
    %v1966 = vadd.f32 %v1964, %v1188
    %v1967 = vld [vmem:[#allocation2 + $0x14] sm:$0xf]
    %v1968 = vld [vmem:[#allocation2 + $0x58] sm:$0xf]
    %v1969 = vld [vmem:[#allocation2 + $0x9c] sm:$0xf]
    %v1970 = vld [vmem:[#allocation2 + $0xe0] sm:$0xf]
    %v1971 = vpack.c.bf16 %v1966, %v1965
    %v1972 = vld [vmem:[#allocation7 + $0xe] sm:$0x1]
    %v1973 = vlaneseq
    %v1974 = vshrl.u32 %v1973, 7
    %v1975 = vsub.s32 0, %v1974
    %v1976 = vrot.slane %v1972, %v1975
    %v1981 = vunpack.c.l.b16 %v1967
    %v1982 = vunpack.c.l.b16 %v1968
    %v1983 = vunpack.c.l.b16 %v1969
    %v1984 = vunpack.c.l.b16 %v1970
    %v1985 = vpack.c.b16 %v1982, %v1981
    %v1986 = vpack.c.b16 %v1984, %v1983
    %v1990 = vsel %vm70, %v1971, 0
    %1992 = vmatprep.subr.bf16.mxu0 0
    %1993 = vmatpush1.bf16.msra.mxu0 0
    %1994 = vmatprep.subr.bf16.mxu0 0
    %1995 = vmatpush1.bf16.msra.mxu0 0
    %1996 = vmatprep.subr.bf16.mxu0 0
    %1997 = vmatpush1.bf16.msra.mxu0 0
    %1998 = vmatprep.subr.bf16.mxu0 0
    %1999 = vmatpush1.bf16.msra.mxu0 0
    %2000 = vmatprep.subr.bf16.mxu0 0
    %2001 = vmatpush1.bf16.msra.mxu0 0
    %2002 = vmatprep.subr.bf16.mxu0 0
    %2003 = vmatpush1.bf16.msra.mxu0 0
    %2004 = vmatprep.subr.bf16.mxu0 0
    %2005 = vmatpush1.bf16.msra.mxu0 %v1986
    %2006 = vmatprep.subr.bf16.mxu0 0
    %2007 = vmatpush1.bf16.msra.mxu0 %v1985
    %2008 = vmatprep.subr.bf16.mxu0 0
    %2009 = vmatpush2.bf16.msra.mxu0 0
    %2010 = vmatprep.subr.bf16.mxu0 0
    %2011 = vmatpush2.bf16.msra.mxu0 0
    %2012 = vmatprep.subr.bf16.mxu0 0
    %2013 = vmatpush2.bf16.msra.mxu0 0
    %2014 = vmatprep.subr.bf16.mxu0 0
    %2015 = vmatpush2.bf16.msra.mxu0 0
    %2016 = vmatprep.subr.bf16.mxu0 0
    %2017 = vmatpush2.bf16.msra.mxu0 0
    %2018 = vmatprep.subr.bf16.mxu0 0
    %2019 = vmatpush2.bf16.msra.mxu0 0
    %2020 = vmatprep.subr.bf16.mxu0 0
    %2021 = vmatpush2.bf16.msra.mxu0 0
    %2022 = vmatprep.subr.bf16.mxu0 0
    %2023 = vmatpush2.bf16.msra.mxu0 0
    %2024 = vmatprep.mubr.bf16.mxu0 0
    %2025 = vmatmul.mubr.bf16.gmra.mxu0 %v1990
    %v2026 = vpop.f32.mrf.mxu0
    %v2027 = vadd.f32 %v1976, %v2026
    %v2028 = vpop.f32.mrf.mxu0
    %v2029 = vpop.f32.mrf.mxu0
    %v2030 = vadd.f32 %v1976, %v2029
    %v2031 = vpop.f32.mrf.mxu0
    %2032 = vdwg.mxu0
    %v2033 = vpack.c.bf16 %v2030, %v2027
    %2035 = vrot.lane.b32.xlu0 %v2033, 96
    %v2036 = vpop.permute.xlu0 %2035
    %v2038 = vsel %vm360, %v2033, 0
    %v2041 = vsel %vm360, %v2036, 0
    %2043 = vmatprep.subr.bf16.mxu0 0
    %2044 = vmatpush1.bf16.xpose.msra.mxu0 0
    %2045 = vmatprep.subr.bf16.mxu0 0
    %2046 = vmatpush1.bf16.xpose.msra.mxu0 0
    %2047 = vmatprep.subr.bf16.mxu0 0
    %2048 = vmatpush1.bf16.xpose.msra.mxu0 0
    %2049 = vmatprep.subr.bf16.mxu0 0
    %2050 = vmatpush1.bf16.xpose.msra.mxu0 0
    %2051 = vmatprep.subr.bf16.mxu0 0
    %2052 = vmatpush1.bf16.xpose.msra.mxu0 0
    %2053 = vmatprep.subr.bf16.mxu0 0
    %2054 = vmatpush1.bf16.xpose.msra.mxu0 0
    %2055 = vmatprep.subr.bf16.mxu0 0
    %2056 = vmatpush1.bf16.xpose.msra.mxu0 0
    %2057 = vmatprep.subr.bf16.mxu0 0
    %2058 = vmatpush1.bf16.xpose.msra.mxu0 %v2041
    %2059 = vmatprep.subr.bf16.mxu0 0
    %2060 = vmatpush2.bf16.xpose.msra.mxu0 0
    %2061 = vmatprep.subr.bf16.mxu0 0
    %2062 = vmatpush2.bf16.xpose.msra.mxu0 0
    %2063 = vmatprep.subr.bf16.mxu0 0
    %2064 = vmatpush2.bf16.xpose.msra.mxu0 0
    %2065 = vmatprep.subr.bf16.mxu0 0
    %2066 = vmatpush2.bf16.xpose.msra.mxu0 0
    %2067 = vmatprep.subr.bf16.mxu0 0
    %2068 = vmatpush2.bf16.xpose.msra.mxu0 0
    %2069 = vmatprep.subr.bf16.mxu0 0
    %2070 = vmatpush2.bf16.xpose.msra.mxu0 0
    %2071 = vmatprep.subr.bf16.mxu0 0
    %2072 = vmatpush2.bf16.xpose.msra.mxu0 0
    %2073 = vmatprep.subr.bf16.mxu0 0
    %2074 = vmatpush2.bf16.xpose.msra.mxu0 0
    %2075 = vmatprep.mubr.bf16.mxu0 0
    %2076 = vmatmul.mubr.bf16.gmra.mxu0 %v2038
    %v2077 = vpop.f32.mrf.mxu0
    %v2078 = vadd.f32 %v66, %v2077
    %v2079 = vpop.f32.mrf.mxu0
    %v2080 = vpop.f32.mrf.mxu0
    %v2081 = vadd.f32 %v67, %v2080
    %v2082 = vpop.f32.mrf.mxu0
    %2083 = vdwg.mxu0
    %v2084 = vsel %vm408, %v2078, -inf
    %2085 = vmax.xlane.f32.xlu0 %v2084
    %v2086 = vpop.xlane.xlu0 %2085
    %v2087 = vsel %vm408, %v2081, -inf
    %2088 = vmax.xlane.f32.xlu0 %v2087
    %v2089 = vpop.xlane.xlu0 %2088
    %v2090 = vsub.f32 %v2078, %v2086
    %v2091 = vsub.f32 %v2081, %v2089
    %v2092 = vmul.f32 %v2090, 1.442695
    %v2093 = vpow.pop %v2092
    %v2094 = vmul.f32 %v2091, 1.442695
    %v2095 = vpow.pop %v2094
    %v2096 = vsel %vm408, %v2093, 0.0
    %2097 = vadd.xlane.f32.xlu0 %v2096
    %v2098 = vpop.xlane.xlu0 %2097
    %v2099 = vsel %vm408, %v2095, 0.0
    %2100 = vadd.xlane.f32.xlu0 %v2099
    %v2101 = vpop.xlane.xlu0 %2100
    %v2102 = vrcp.pop %v2098
    %v2103 = vmul.f32 %v2093, %v2102
    %v2104 = vrcp.pop %v2101
    %v2105 = vmul.f32 %v2095, %v2104
    %v2106 = vpack.c.bf16 %v2105, %v2103
    %2107 = vrot.lane.b32.xlu0 %v2033, 64
    %v2108 = vpop.permute.xlu0 %2107
    %v2111 = vsel %vm408, %v2106, 0
    %2113 = vmatprep.subr.bf16.mxu0 0
    %2114 = vmatpush1.bf16.msra.mxu0 0
    %2115 = vmatprep.subr.bf16.mxu0 0
    %2116 = vmatpush1.bf16.msra.mxu0 0
    %2117 = vmatprep.subr.bf16.mxu0 0
    %2118 = vmatpush1.bf16.msra.mxu0 0
    %2119 = vmatprep.subr.bf16.mxu0 0
    %2120 = vmatpush1.bf16.msra.mxu0 0
    %2121 = vmatprep.subr.bf16.mxu0 0
    %2122 = vmatpush1.bf16.msra.mxu0 0
    %2123 = vmatprep.subr.bf16.mxu0 0
    %2124 = vmatpush1.bf16.msra.mxu0 0
    %2125 = vmatprep.subr.bf16.mxu0 0
    %2126 = vmatpush1.bf16.msra.mxu0 0
    %2127 = vmatprep.subr.bf16.mxu0 0
    %2128 = vmatpush1.bf16.msra.mxu0 %v2108
    %2129 = vmatprep.subr.bf16.mxu0 0
    %2130 = vmatpush2.bf16.msra.mxu0 0
    %2131 = vmatprep.subr.bf16.mxu0 0
    %2132 = vmatpush2.bf16.msra.mxu0 0
    %2133 = vmatprep.subr.bf16.mxu0 0
    %2134 = vmatpush2.bf16.msra.mxu0 0
    %2135 = vmatprep.subr.bf16.mxu0 0
    %2136 = vmatpush2.bf16.msra.mxu0 0
    %2137 = vmatprep.subr.bf16.mxu0 0
    %2138 = vmatpush2.bf16.msra.mxu0 0
    %2139 = vmatprep.subr.bf16.mxu0 0
    %2140 = vmatpush2.bf16.msra.mxu0 0
    %2141 = vmatprep.subr.bf16.mxu0 0
    %2142 = vmatpush2.bf16.msra.mxu0 0
    %2143 = vmatprep.subr.bf16.mxu0 0
    %2144 = vmatpush2.bf16.msra.mxu0 0
    %2145 = vmatprep.mubr.bf16.mxu0 0
    %2146 = vmatmul.mubr.bf16.gmra.mxu0 %v2111
    %v2147 = vpop.f32.mrf.mxu0
    %v2148 = vadd.f32 0.0, %v2147
    %v2149 = vpop.f32.mrf.mxu0
    %v2150 = vpop.f32.mrf.mxu0
    %v2151 = vadd.f32 0.0, %v2150
    %v2152 = vpop.f32.mrf.mxu0
    %2153 = vdwg.mxu0
    %2154 = vrot.lane.b32.xlu0 %v2033, 120
    %v2155 = vpop.permute.xlu0 %2154
    %2156 = vrot.lane.b32.xlu0 %v2033, 88
    %v2157 = vpop.permute.xlu0 %2156
    %v2159 = vsel %vm360, %v2155, 0
    %v2162 = vsel %vm360, %v2157, 0
    %2164 = vmatprep.subr.bf16.mxu0 0
    %2165 = vmatpush1.bf16.xpose.msra.mxu0 0
    %2166 = vmatprep.subr.bf16.mxu0 0
    %2167 = vmatpush1.bf16.xpose.msra.mxu0 0
    %2168 = vmatprep.subr.bf16.mxu0 0
    %2169 = vmatpush1.bf16.xpose.msra.mxu0 0
    %2170 = vmatprep.subr.bf16.mxu0 0
    %2171 = vmatpush1.bf16.xpose.msra.mxu0 0
    %2172 = vmatprep.subr.bf16.mxu0 0
    %2173 = vmatpush1.bf16.xpose.msra.mxu0 0
    %2174 = vmatprep.subr.bf16.mxu0 0
    %2175 = vmatpush1.bf16.xpose.msra.mxu0 0
    %2176 = vmatprep.subr.bf16.mxu0 0
    %2177 = vmatpush1.bf16.xpose.msra.mxu0 0
    %2178 = vmatprep.subr.bf16.mxu0 0
    %2179 = vmatpush1.bf16.xpose.msra.mxu0 %v2162
    %2180 = vmatprep.subr.bf16.mxu0 0
    %2181 = vmatpush2.bf16.xpose.msra.mxu0 0
    %2182 = vmatprep.subr.bf16.mxu0 0
    %2183 = vmatpush2.bf16.xpose.msra.mxu0 0
    %2184 = vmatprep.subr.bf16.mxu0 0
    %2185 = vmatpush2.bf16.xpose.msra.mxu0 0
    %2186 = vmatprep.subr.bf16.mxu0 0
    %2187 = vmatpush2.bf16.xpose.msra.mxu0 0
    %2188 = vmatprep.subr.bf16.mxu0 0
    %2189 = vmatpush2.bf16.xpose.msra.mxu0 0
    %2190 = vmatprep.subr.bf16.mxu0 0
    %2191 = vmatpush2.bf16.xpose.msra.mxu0 0
    %2192 = vmatprep.subr.bf16.mxu0 0
    %2193 = vmatpush2.bf16.xpose.msra.mxu0 0
    %2194 = vmatprep.subr.bf16.mxu0 0
    %2195 = vmatpush2.bf16.xpose.msra.mxu0 0
    %2196 = vmatprep.mubr.bf16.mxu0 0
    %2197 = vmatmul.mubr.bf16.gmra.mxu0 %v2159
    %v2198 = vpop.f32.mrf.mxu0
    %v2199 = vadd.f32 %v66, %v2198
    %v2200 = vpop.f32.mrf.mxu0
    %v2201 = vpop.f32.mrf.mxu0
    %v2202 = vadd.f32 %v67, %v2201
    %v2203 = vpop.f32.mrf.mxu0
    %2204 = vdwg.mxu0
    %v2205 = vsel %vm408, %v2199, -inf
    %2206 = vmax.xlane.f32.xlu0 %v2205
    %v2207 = vpop.xlane.xlu0 %2206
    %v2208 = vsel %vm408, %v2202, -inf
    %2209 = vmax.xlane.f32.xlu0 %v2208
    %v2210 = vpop.xlane.xlu0 %2209
    %v2211 = vsub.f32 %v2199, %v2207
    %v2212 = vsub.f32 %v2202, %v2210
    %v2213 = vmul.f32 %v2211, 1.442695
    %v2214 = vpow.pop %v2213
    %v2215 = vmul.f32 %v2212, 1.442695
    %v2216 = vpow.pop %v2215
    %v2217 = vsel %vm408, %v2214, 0.0
    %2218 = vadd.xlane.f32.xlu0 %v2217
    %v2219 = vpop.xlane.xlu0 %2218
    %v2220 = vsel %vm408, %v2216, 0.0
    %2221 = vadd.xlane.f32.xlu0 %v2220
    %v2222 = vpop.xlane.xlu0 %2221
    %v2223 = vrcp.pop %v2219
    %v2224 = vmul.f32 %v2214, %v2223
    %v2225 = vrcp.pop %v2222
    %v2226 = vmul.f32 %v2216, %v2225
    %v2227 = vpack.c.bf16 %v2226, %v2224
    %2228 = vrot.lane.b32.xlu0 %v2033, 56
    %v2229 = vpop.permute.xlu0 %2228
    %v2232 = vsel %vm408, %v2227, 0
    %2234 = vmatprep.subr.bf16.mxu0 0
    %2235 = vmatpush1.bf16.msra.mxu0 0
    %2236 = vmatprep.subr.bf16.mxu0 0
    %2237 = vmatpush1.bf16.msra.mxu0 0
    %2238 = vmatprep.subr.bf16.mxu0 0
    %2239 = vmatpush1.bf16.msra.mxu0 0
    %2240 = vmatprep.subr.bf16.mxu0 0
    %2241 = vmatpush1.bf16.msra.mxu0 0
    %2242 = vmatprep.subr.bf16.mxu0 0
    %2243 = vmatpush1.bf16.msra.mxu0 0
    %2244 = vmatprep.subr.bf16.mxu0 0
    %2245 = vmatpush1.bf16.msra.mxu0 0
    %2246 = vmatprep.subr.bf16.mxu0 0
    %2247 = vmatpush1.bf16.msra.mxu0 0
    %2248 = vmatprep.subr.bf16.mxu0 0
    %2249 = vmatpush1.bf16.msra.mxu0 %v2229
    %2250 = vmatprep.subr.bf16.mxu0 0
    %2251 = vmatpush2.bf16.msra.mxu0 0
    %2252 = vmatprep.subr.bf16.mxu0 0
    %2253 = vmatpush2.bf16.msra.mxu0 0
    %2254 = vmatprep.subr.bf16.mxu0 0
    %2255 = vmatpush2.bf16.msra.mxu0 0
    %2256 = vmatprep.subr.bf16.mxu0 0
    %2257 = vmatpush2.bf16.msra.mxu0 0
    %2258 = vmatprep.subr.bf16.mxu0 0
    %2259 = vmatpush2.bf16.msra.mxu0 0
    %2260 = vmatprep.subr.bf16.mxu0 0
    %2261 = vmatpush2.bf16.msra.mxu0 0
    %2262 = vmatprep.subr.bf16.mxu0 0
    %2263 = vmatpush2.bf16.msra.mxu0 0
    %2264 = vmatprep.subr.bf16.mxu0 0
    %2265 = vmatpush2.bf16.msra.mxu0 0
    %2266 = vmatprep.mubr.bf16.mxu0 0
    %2267 = vmatmul.mubr.bf16.gmra.mxu0 %v2232
    %v2268 = vpop.f32.mrf.mxu0
    %v2269 = vadd.f32 0.0, %v2268
    %v2270 = vpop.f32.mrf.mxu0
    %v2271 = vpop.f32.mrf.mxu0
    %v2272 = vadd.f32 0.0, %v2271
    %v2273 = vpop.f32.mrf.mxu0
    %2274 = vdwg.mxu0
    %2275 = vrot.lane.b32.xlu0 %v2033, 112
    %v2276 = vpop.permute.xlu0 %2275
    %2277 = vrot.lane.b32.xlu0 %v2033, 80
    %v2278 = vpop.permute.xlu0 %2277
    %v2280 = vsel %vm360, %v2276, 0
    %v2283 = vsel %vm360, %v2278, 0
    %2285 = vmatprep.subr.bf16.mxu0 0
    %2286 = vmatpush1.bf16.xpose.msra.mxu0 0
    %2287 = vmatprep.subr.bf16.mxu0 0
    %2288 = vmatpush1.bf16.xpose.msra.mxu0 0
    %2289 = vmatprep.subr.bf16.mxu0 0
    %2290 = vmatpush1.bf16.xpose.msra.mxu0 0
    %2291 = vmatprep.subr.bf16.mxu0 0
    %2292 = vmatpush1.bf16.xpose.msra.mxu0 0
    %2293 = vmatprep.subr.bf16.mxu0 0
    %2294 = vmatpush1.bf16.xpose.msra.mxu0 0
    %2295 = vmatprep.subr.bf16.mxu0 0
    %2296 = vmatpush1.bf16.xpose.msra.mxu0 0
    %2297 = vmatprep.subr.bf16.mxu0 0
    %2298 = vmatpush1.bf16.xpose.msra.mxu0 0
    %2299 = vmatprep.subr.bf16.mxu0 0
    %2300 = vmatpush1.bf16.xpose.msra.mxu0 %v2283
    %2301 = vmatprep.subr.bf16.mxu0 0
    %2302 = vmatpush2.bf16.xpose.msra.mxu0 0
    %2303 = vmatprep.subr.bf16.mxu0 0
    %2304 = vmatpush2.bf16.xpose.msra.mxu0 0
    %2305 = vmatprep.subr.bf16.mxu0 0
    %2306 = vmatpush2.bf16.xpose.msra.mxu0 0
    %2307 = vmatprep.subr.bf16.mxu0 0
    %2308 = vmatpush2.bf16.xpose.msra.mxu0 0
    %2309 = vmatprep.subr.bf16.mxu0 0
    %2310 = vmatpush2.bf16.xpose.msra.mxu0 0
    %2311 = vmatprep.subr.bf16.mxu0 0
    %2312 = vmatpush2.bf16.xpose.msra.mxu0 0
    %2313 = vmatprep.subr.bf16.mxu0 0
    %2314 = vmatpush2.bf16.xpose.msra.mxu0 0
    %2315 = vmatprep.subr.bf16.mxu0 0
    %2316 = vmatpush2.bf16.xpose.msra.mxu0 0
    %2317 = vmatprep.mubr.bf16.mxu0 0
    %2318 = vmatmul.mubr.bf16.gmra.mxu0 %v2280
    %v2319 = vpop.f32.mrf.mxu0
    %v2320 = vadd.f32 %v66, %v2319
    %v2321 = vpop.f32.mrf.mxu0
    %v2322 = vpop.f32.mrf.mxu0
    %v2323 = vadd.f32 %v67, %v2322
    %v2324 = vpop.f32.mrf.mxu0
    %2325 = vdwg.mxu0
    %v2326 = vsel %vm408, %v2320, -inf
    %2327 = vmax.xlane.f32.xlu0 %v2326
    %v2328 = vpop.xlane.xlu0 %2327
    %v2329 = vsel %vm408, %v2323, -inf
    %2330 = vmax.xlane.f32.xlu0 %v2329
    %v2331 = vpop.xlane.xlu0 %2330
    %v2332 = vsub.f32 %v2320, %v2328
    %v2333 = vsub.f32 %v2323, %v2331
    %v2334 = vmul.f32 %v2332, 1.442695
    %v2335 = vpow.pop %v2334
    %v2336 = vmul.f32 %v2333, 1.442695
    %v2337 = vpow.pop %v2336
    %v2338 = vsel %vm408, %v2335, 0.0
    %2339 = vadd.xlane.f32.xlu0 %v2338
    %v2340 = vpop.xlane.xlu0 %2339
    %v2341 = vsel %vm408, %v2337, 0.0
    %2342 = vadd.xlane.f32.xlu0 %v2341
    %v2343 = vpop.xlane.xlu0 %2342
    %v2344 = vrcp.pop %v2340
    %v2345 = vmul.f32 %v2335, %v2344
    %v2346 = vrcp.pop %v2343
    %v2347 = vmul.f32 %v2337, %v2346
    %v2348 = vpack.c.bf16 %v2347, %v2345
    %2349 = vrot.lane.b32.xlu0 %v2033, 48
    %v2350 = vpop.permute.xlu0 %2349
    %v2353 = vsel %vm408, %v2348, 0
    %2355 = vmatprep.subr.bf16.mxu0 0
    %2356 = vmatpush1.bf16.msra.mxu0 0
    %2357 = vmatprep.subr.bf16.mxu0 0
    %2358 = vmatpush1.bf16.msra.mxu0 0
    %2359 = vmatprep.subr.bf16.mxu0 0
    %2360 = vmatpush1.bf16.msra.mxu0 0
    %2361 = vmatprep.subr.bf16.mxu0 0
    %2362 = vmatpush1.bf16.msra.mxu0 0
    %2363 = vmatprep.subr.bf16.mxu0 0
    %2364 = vmatpush1.bf16.msra.mxu0 0
    %2365 = vmatprep.subr.bf16.mxu0 0
    %2366 = vmatpush1.bf16.msra.mxu0 0
    %2367 = vmatprep.subr.bf16.mxu0 0
    %2368 = vmatpush1.bf16.msra.mxu0 0
    %2369 = vmatprep.subr.bf16.mxu0 0
    %2370 = vmatpush1.bf16.msra.mxu0 %v2350
    %2371 = vmatprep.subr.bf16.mxu0 0
    %2372 = vmatpush2.bf16.msra.mxu0 0
    %2373 = vmatprep.subr.bf16.mxu0 0
    %2374 = vmatpush2.bf16.msra.mxu0 0
    %2375 = vmatprep.subr.bf16.mxu0 0
    %2376 = vmatpush2.bf16.msra.mxu0 0
    %2377 = vmatprep.subr.bf16.mxu0 0
    %2378 = vmatpush2.bf16.msra.mxu0 0
    %2379 = vmatprep.subr.bf16.mxu0 0
    %2380 = vmatpush2.bf16.msra.mxu0 0
    %2381 = vmatprep.subr.bf16.mxu0 0
    %2382 = vmatpush2.bf16.msra.mxu0 0
    %2383 = vmatprep.subr.bf16.mxu0 0
    %2384 = vmatpush2.bf16.msra.mxu0 0
    %2385 = vmatprep.subr.bf16.mxu0 0
    %2386 = vmatpush2.bf16.msra.mxu0 0
    %2387 = vmatprep.mubr.bf16.mxu0 0
    %2388 = vmatmul.mubr.bf16.gmra.mxu0 %v2353
    %v2389 = vpop.f32.mrf.mxu0
    %v2390 = vadd.f32 0.0, %v2389
    %v2391 = vpop.f32.mrf.mxu0
    %v2392 = vpop.f32.mrf.mxu0
    %v2393 = vadd.f32 0.0, %v2392
    %v2394 = vpop.f32.mrf.mxu0
    %2395 = vdwg.mxu0
    %2396 = vrot.lane.b32.xlu0 %v2033, 104
    %v2397 = vpop.permute.xlu0 %2396
    %2398 = vrot.lane.b32.xlu0 %v2033, 72
    %v2399 = vpop.permute.xlu0 %2398
    %v2401 = vsel %vm360, %v2397, 0
    %v2404 = vsel %vm360, %v2399, 0
    %2406 = vmatprep.subr.bf16.mxu0 0
    %2407 = vmatpush1.bf16.xpose.msra.mxu0 0
    %2408 = vmatprep.subr.bf16.mxu0 0
    %2409 = vmatpush1.bf16.xpose.msra.mxu0 0
    %2410 = vmatprep.subr.bf16.mxu0 0
    %2411 = vmatpush1.bf16.xpose.msra.mxu0 0
    %2412 = vmatprep.subr.bf16.mxu0 0
    %2413 = vmatpush1.bf16.xpose.msra.mxu0 0
    %2414 = vmatprep.subr.bf16.mxu0 0
    %2415 = vmatpush1.bf16.xpose.msra.mxu0 0
    %2416 = vmatprep.subr.bf16.mxu0 0
    %2417 = vmatpush1.bf16.xpose.msra.mxu0 0
    %2418 = vmatprep.subr.bf16.mxu0 0
    %2419 = vmatpush1.bf16.xpose.msra.mxu0 0
    %2420 = vmatprep.subr.bf16.mxu0 0
    %2421 = vmatpush1.bf16.xpose.msra.mxu0 %v2404
    %2422 = vmatprep.subr.bf16.mxu0 0
    %2423 = vmatpush2.bf16.xpose.msra.mxu0 0
    %2424 = vmatprep.subr.bf16.mxu0 0
    %2425 = vmatpush2.bf16.xpose.msra.mxu0 0
    %2426 = vmatprep.subr.bf16.mxu0 0
    %2427 = vmatpush2.bf16.xpose.msra.mxu0 0
    %2428 = vmatprep.subr.bf16.mxu0 0
    %2429 = vmatpush2.bf16.xpose.msra.mxu0 0
    %2430 = vmatprep.subr.bf16.mxu0 0
    %2431 = vmatpush2.bf16.xpose.msra.mxu0 0
    %2432 = vmatprep.subr.bf16.mxu0 0
    %2433 = vmatpush2.bf16.xpose.msra.mxu0 0
    %2434 = vmatprep.subr.bf16.mxu0 0
    %2435 = vmatpush2.bf16.xpose.msra.mxu0 0
    %2436 = vmatprep.subr.bf16.mxu0 0
    %2437 = vmatpush2.bf16.xpose.msra.mxu0 0
    %2438 = vmatprep.mubr.bf16.mxu0 0
    %2439 = vmatmul.mubr.bf16.gmra.mxu0 %v2401
    %v2440 = vpop.f32.mrf.mxu0
    %v2441 = vadd.f32 %v66, %v2440
    %v2442 = vpop.f32.mrf.mxu0
    %v2443 = vpop.f32.mrf.mxu0
    %v2444 = vadd.f32 %v67, %v2443
    %v2445 = vpop.f32.mrf.mxu0
    %2446 = vdwg.mxu0
    %v2447 = vsel %vm408, %v2441, -inf
    %2448 = vmax.xlane.f32.xlu0 %v2447
    %v2449 = vpop.xlane.xlu0 %2448
    %v2450 = vsel %vm408, %v2444, -inf
    %2451 = vmax.xlane.f32.xlu0 %v2450
    %v2452 = vpop.xlane.xlu0 %2451
    %v2453 = vsub.f32 %v2441, %v2449
    %v2454 = vsub.f32 %v2444, %v2452
    %v2455 = vmul.f32 %v2453, 1.442695
    %v2456 = vpow.pop %v2455
    %v2457 = vmul.f32 %v2454, 1.442695
    %v2458 = vpow.pop %v2457
    %v2459 = vsel %vm408, %v2456, 0.0
    %2460 = vadd.xlane.f32.xlu0 %v2459
    %v2461 = vpop.xlane.xlu0 %2460
    %v2462 = vsel %vm408, %v2458, 0.0
    %2463 = vadd.xlane.f32.xlu0 %v2462
    %v2464 = vpop.xlane.xlu0 %2463
    %v2465 = vrcp.pop %v2461
    %v2466 = vmul.f32 %v2456, %v2465
    %v2467 = vrcp.pop %v2464
    %v2468 = vmul.f32 %v2458, %v2467
    %v2469 = vpack.c.bf16 %v2468, %v2466
    %2470 = vrot.lane.b32.xlu0 %v2033, 40
    %v2471 = vpop.permute.xlu0 %2470
    %v2474 = vsel %vm408, %v2469, 0
    %2476 = vmatprep.subr.bf16.mxu0 0
    %2477 = vmatpush1.bf16.msra.mxu0 0
    %2478 = vmatprep.subr.bf16.mxu0 0
    %2479 = vmatpush1.bf16.msra.mxu0 0
    %2480 = vmatprep.subr.bf16.mxu0 0
    %2481 = vmatpush1.bf16.msra.mxu0 0
    %2482 = vmatprep.subr.bf16.mxu0 0
    %2483 = vmatpush1.bf16.msra.mxu0 0
    %2484 = vmatprep.subr.bf16.mxu0 0
    %2485 = vmatpush1.bf16.msra.mxu0 0
    %2486 = vmatprep.subr.bf16.mxu0 0
    %2487 = vmatpush1.bf16.msra.mxu0 0
    %2488 = vmatprep.subr.bf16.mxu0 0
    %2489 = vmatpush1.bf16.msra.mxu0 0
    %2490 = vmatprep.subr.bf16.mxu0 0
    %2491 = vmatpush1.bf16.msra.mxu0 %v2471
    %2492 = vmatprep.subr.bf16.mxu0 0
    %2493 = vmatpush2.bf16.msra.mxu0 0
    %2494 = vmatprep.subr.bf16.mxu0 0
    %2495 = vmatpush2.bf16.msra.mxu0 0
    %2496 = vmatprep.subr.bf16.mxu0 0
    %2497 = vmatpush2.bf16.msra.mxu0 0
    %2498 = vmatprep.subr.bf16.mxu0 0
    %2499 = vmatpush2.bf16.msra.mxu0 0
    %2500 = vmatprep.subr.bf16.mxu0 0
    %2501 = vmatpush2.bf16.msra.mxu0 0
    %2502 = vmatprep.subr.bf16.mxu0 0
    %2503 = vmatpush2.bf16.msra.mxu0 0
    %2504 = vmatprep.subr.bf16.mxu0 0
    %2505 = vmatpush2.bf16.msra.mxu0 0
    %2506 = vmatprep.subr.bf16.mxu0 0
    %2507 = vmatpush2.bf16.msra.mxu0 0
    %2508 = vmatprep.mubr.bf16.mxu0 0
    %2509 = vmatmul.mubr.bf16.gmra.mxu0 %v2474
    %v2510 = vpop.f32.mrf.mxu0
    %v2511 = vadd.f32 0.0, %v2510
    %v2512 = vpop.f32.mrf.mxu0
    %v2513 = vpop.f32.mrf.mxu0
    %v2514 = vadd.f32 0.0, %v2513
    %v2515 = vpop.f32.mrf.mxu0
    %2516 = vdwg.mxu0
    %2519 = vrot.lane.b32.xlu0 %v2269, 8
    %v2520 = vpop.permute.xlu0 %2519
    %2521 = vrot.lane.b32.xlu0 %v2272, 8
    %v2522 = vpop.permute.xlu0 %2521
    %2527 = vrot.lane.b32.xlu0 %v2390, 16
    %v2528 = vpop.permute.xlu0 %2527
    %2529 = vrot.lane.b32.xlu0 %v2393, 16
    %v2530 = vpop.permute.xlu0 %2529
    %2535 = vrot.lane.b32.xlu0 %v2511, 24
    %v2536 = vpop.permute.xlu0 %2535
    %2537 = vrot.lane.b32.xlu0 %v2514, 24
    %v2538 = vpop.permute.xlu0 %2537
    %v2541 = vsel %vm360, %v2148, %v2520
    %v2542 = vsel %vm360, %v2151, %v2522
    %v2543 = vsel %vm408, %v2541, %v2528
    %v2544 = vsel %vm408, %v2542, %v2530
    %v2545 = vsel %vm870, %v2543, %v2536
    %v2546 = vsel %vm870, %v2544, %v2538
    %v2547 = vld [vmem:[#allocation2 + $0x18] sm:$0xf]
    %v2548 = vld [vmem:[#allocation2 + $0x5c] sm:$0xf]
    %v2549 = vld [vmem:[#allocation2 + $0xa0] sm:$0xf]
    %v2550 = vld [vmem:[#allocation2 + $0xe4] sm:$0xf]
    %v2551 = vpack.c.bf16 %v2546, %v2545
    %v2552 = vld [vmem:[#allocation7 + $0xf] sm:$0x1]
    %v2553 = vlaneseq
    %v2554 = vshrl.u32 %v2553, 7
    %v2555 = vsub.s32 0, %v2554
    %v2556 = vrot.slane %v2552, %v2555
    %v2561 = vunpack.c.l.b16 %v2547
    %v2562 = vunpack.c.l.b16 %v2548
    %v2563 = vunpack.c.l.b16 %v2549
    %v2564 = vunpack.c.l.b16 %v2550
    %v2565 = vpack.c.b16 %v2562, %v2561
    %v2566 = vpack.c.b16 %v2564, %v2563
    %v2570 = vsel %vm70, %v2551, 0
    %2572 = vmatprep.subr.bf16.mxu0 0
    %2573 = vmatpush1.bf16.msra.mxu0 0
    %2574 = vmatprep.subr.bf16.mxu0 0
    %2575 = vmatpush1.bf16.msra.mxu0 0
    %2576 = vmatprep.subr.bf16.mxu0 0
    %2577 = vmatpush1.bf16.msra.mxu0 0
    %2578 = vmatprep.subr.bf16.mxu0 0
    %2579 = vmatpush1.bf16.msra.mxu0 0
    %2580 = vmatprep.subr.bf16.mxu0 0
    %2581 = vmatpush1.bf16.msra.mxu0 0
    %2582 = vmatprep.subr.bf16.mxu0 0
    %2583 = vmatpush1.bf16.msra.mxu0 0
    %2584 = vmatprep.subr.bf16.mxu0 0
    %2585 = vmatpush1.bf16.msra.mxu0 %v2566
    %2586 = vmatprep.subr.bf16.mxu0 0
    %2587 = vmatpush1.bf16.msra.mxu0 %v2565
    %2588 = vmatprep.subr.bf16.mxu0 0
    %2589 = vmatpush2.bf16.msra.mxu0 0
    %2590 = vmatprep.subr.bf16.mxu0 0
    %2591 = vmatpush2.bf16.msra.mxu0 0
    %2592 = vmatprep.subr.bf16.mxu0 0
    %2593 = vmatpush2.bf16.msra.mxu0 0
    %2594 = vmatprep.subr.bf16.mxu0 0
    %2595 = vmatpush2.bf16.msra.mxu0 0
    %2596 = vmatprep.subr.bf16.mxu0 0
    %2597 = vmatpush2.bf16.msra.mxu0 0
    %2598 = vmatprep.subr.bf16.mxu0 0
    %2599 = vmatpush2.bf16.msra.mxu0 0
    %2600 = vmatprep.subr.bf16.mxu0 0
    %2601 = vmatpush2.bf16.msra.mxu0 0
    %2602 = vmatprep.subr.bf16.mxu0 0
    %2603 = vmatpush2.bf16.msra.mxu0 0
    %2604 = vmatprep.mubr.bf16.mxu0 0
    %2605 = vmatmul.mubr.bf16.gmra.mxu0 %v2570
    %v2606 = vpop.f32.mrf.mxu0
    %v2607 = vadd.f32 %v2556, %v2606
    %v2608 = vpop.f32.mrf.mxu0
    %v2609 = vpop.f32.mrf.mxu0
    %v2610 = vadd.f32 %v2556, %v2609
    %v2611 = vpop.f32.mrf.mxu0
    %2612 = vdwg.mxu0
    %v2613 = vadd.f32 %v1965, %v2607
    %v2614 = vadd.f32 %v1966, %v2610
    %v2615 = vsel %vm70, %v2613, 0.0
    %2616 = vadd.xlane.f32.xlu0 %v2615
    %v2617 = vpop.xlane.xlu0 %2616
    %v2618 = vsel %vm70, %v2614, 0.0
    %2619 = vadd.xlane.f32.xlu0 %v2618
    %v2620 = vpop.xlane.xlu0 %2619
    %v2621 = vmul.f32 %v2617, %v947
    %v2622 = vmul.f32 %v2620, %v947
    %v2623 = vsub.f32 %v2613, %v2621
    %v2624 = vsub.f32 %v2614, %v2622
    %v2625 = vmul.f32 %v2623, %v2623
    %v2626 = vmul.f32 %v2624, %v2624
    %v2627 = vsel %vm70, %v2625, 0.0
    %2628 = vadd.xlane.f32.xlu0 %v2627
    %v2629 = vpop.xlane.xlu0 %2628
    %v2630 = vsel %vm70, %v2626, 0.0
    %2631 = vadd.xlane.f32.xlu0 %v2630
    %v2632 = vpop.xlane.xlu0 %2631
    %v2633 = vmul.f32 %v2629, %v947
    %v2634 = vmul.f32 %v2632, %v947
    %v2635 = vadd.f32 %v2633, 1e-12
    %v2636 = vadd.f32 %v2634, 1e-12
    %v2637 = vrsqrt.pop %v2635
    %v2638 = vrsqrt.pop %v2636
    %v2639 = vmul.f32 %v2623, %v2637
    %v2640 = vmul.f32 %v2624, %v2638
    %v2641 = vld [vmem:[#allocation7 + $0x10] sm:$0x1]
    %v2642 = vlaneseq
    %v2643 = vshrl.u32 %v2642, 7
    %v2644 = vsub.s32 0, %v2643
    %v2645 = vrot.slane %v2641, %v2644
    %v2646 = vmul.f32 %v2639, %v2645
    %v2647 = vmul.f32 %v2640, %v2645
    %v2648 = vld [vmem:[#allocation7 + $0x11] sm:$0x1]
    %v2649 = vlaneseq
    %v2650 = vshrl.u32 %v2649, 7
    %v2651 = vsub.s32 0, %v2650
    %v2652 = vrot.slane %v2648, %v2651
    %v2653 = vadd.f32 %v2646, %v2652
    %v2654 = vadd.f32 %v2647, %v2652
    %v2655 = vld [vmem:[#allocation2 + $0x1c] sm:$0xf]
    %v2656 = vld [vmem:[#allocation2 + $0x60] sm:$0xf]
    %v2657 = vld [vmem:[#allocation2 + $0xa4] sm:$0xf]
    %v2658 = vld [vmem:[#allocation2 + $0xe8] sm:$0xf]
    %v2659 = vpack.c.bf16 %v2654, %v2653
    %v2660 = vld [vmem:[#allocation7 + $0x12] sm:$0x1]
    %v2661 = vlaneseq
    %v2662 = vshrl.u32 %v2661, 7
    %v2663 = vsub.s32 0, %v2662
    %v2664 = vrot.slane %v2660, %v2663
    %v2669 = vunpack.c.l.b16 %v2655
    %v2670 = vunpack.c.l.b16 %v2656
    %v2671 = vunpack.c.l.b16 %v2657
    %v2672 = vunpack.c.l.b16 %v2658
    %v2673 = vpack.c.b16 %v2670, %v2669
    %v2674 = vpack.c.b16 %v2672, %v2671
    %v2678 = vsel %vm70, %v2659, 0
    %2680 = vmatprep.subr.bf16.mxu0 0
    %2681 = vmatpush1.bf16.msra.mxu0 0
    %2682 = vmatprep.subr.bf16.mxu0 0
    %2683 = vmatpush1.bf16.msra.mxu0 0
    %2684 = vmatprep.subr.bf16.mxu0 0
    %2685 = vmatpush1.bf16.msra.mxu0 0
    %2686 = vmatprep.subr.bf16.mxu0 0
    %2687 = vmatpush1.bf16.msra.mxu0 0
    %2688 = vmatprep.subr.bf16.mxu0 0
    %2689 = vmatpush1.bf16.msra.mxu0 0
    %2690 = vmatprep.subr.bf16.mxu0 0
    %2691 = vmatpush1.bf16.msra.mxu0 0
    %2692 = vmatprep.subr.bf16.mxu0 0
    %2693 = vmatpush1.bf16.msra.mxu0 %v2674
    %2694 = vmatprep.subr.bf16.mxu0 0
    %2695 = vmatpush1.bf16.msra.mxu0 %v2673
    %2696 = vmatprep.subr.bf16.mxu0 0
    %2697 = vmatpush2.bf16.msra.mxu0 0
    %2698 = vmatprep.subr.bf16.mxu0 0
    %2699 = vmatpush2.bf16.msra.mxu0 0
    %2700 = vmatprep.subr.bf16.mxu0 0
    %2701 = vmatpush2.bf16.msra.mxu0 0
    %2702 = vmatprep.subr.bf16.mxu0 0
    %2703 = vmatpush2.bf16.msra.mxu0 0
    %2704 = vmatprep.subr.bf16.mxu0 0
    %2705 = vmatpush2.bf16.msra.mxu0 0
    %2706 = vmatprep.subr.bf16.mxu0 0
    %2707 = vmatpush2.bf16.msra.mxu0 0
    %2708 = vmatprep.subr.bf16.mxu0 0
    %2709 = vmatpush2.bf16.msra.mxu0 0
    %2710 = vmatprep.subr.bf16.mxu0 0
    %2711 = vmatpush2.bf16.msra.mxu0 0
    %2712 = vmatprep.mubr.bf16.mxu0 0
    %2713 = vmatmul.mubr.bf16.gmra.mxu0 %v2678
    %v2714 = vpop.f32.mrf.mxu0
    %v2715 = vadd.f32 %v2664, %v2714
    %v2716 = vpop.f32.mrf.mxu0
    %v2717 = vpop.f32.mrf.mxu0
    %v2718 = vadd.f32 %v2664, %v2717
    %v2719 = vpop.f32.mrf.mxu0
    %2720 = vdwg.mxu0
    %v2721 = vmul.f32 %v2715, 0.5
    %v2722 = vmul.f32 %v2718, 0.5
    %v2723 = vmul.f32 %v2715, 0.044715
    %v2724 = vmul.f32 %v2718, 0.044715
    %v2725 = vmul.f32 %v2723, %v2715
    %v2726 = vmul.f32 %v2724, %v2718
    %v2727 = vmul.f32 %v2725, %v2715
    %v2728 = vmul.f32 %v2726, %v2718
    %v2729 = vadd.f32 %v2715, %v2727
    %v2730 = vadd.f32 %v2718, %v2728
    %v2731 = vmul.f32 %v2729, 0.7978846
    %v2732 = vmul.f32 %v2730, 0.7978846
    %v2733 = vtanh.pop %v2731
    %v2734 = vtanh.pop %v2732
    %v2735 = vadd.f32 %v2733, 1.0
    %v2736 = vadd.f32 %v2734, 1.0
    %v2737 = vmul.f32 %v2721, %v2735
    %v2738 = vmul.f32 %v2722, %v2736
    %v2739 = vld [vmem:[#allocation5 + $0x4] sm:$0xf]
    %v2740 = vld [vmem:[#allocation5 + $0xc] sm:$0xf]
    %v2741 = vld [vmem:[#allocation5 + $0x14] sm:$0xf]
    %v2742 = vld [vmem:[#allocation5 + $0x1c] sm:$0xf]
    %v2743 = vld [vmem:[#allocation5 + $0x24] sm:$0xf]
    %v2744 = vld [vmem:[#allocation5 + $0x2c] sm:$0xf]
    %v2745 = vld [vmem:[#allocation5 + $0x34] sm:$0xf]
    %v2746 = vld [vmem:[#allocation5 + $0x3c] sm:$0xf]
    %v2747 = vpack.c.bf16 %v2738, %v2737
    %v2748 = vld [vmem:[#allocation7 + $0x13] sm:$0x1]
    %v2749 = vlaneseq
    %v2750 = vshrl.u32 %v2749, 7
    %v2751 = vsub.s32 0, %v2750
    %v2752 = vrot.slane %v2748, %v2751
    %v2761 = vunpack.c.l.b16 %v2739
    %v2762 = vunpack.c.l.b16 %v2740
    %v2763 = vunpack.c.l.b16 %v2741
    %v2764 = vunpack.c.l.b16 %v2742
    %v2765 = vunpack.c.l.b16 %v2743
    %v2766 = vunpack.c.l.b16 %v2744
    %v2767 = vunpack.c.l.b16 %v2745
    %v2768 = vunpack.c.l.b16 %v2746
    %v2769 = vpack.c.b16 %v2762, %v2761
    %v2770 = vpack.c.b16 %v2764, %v2763
    %v2771 = vpack.c.b16 %v2766, %v2765
    %v2772 = vpack.c.b16 %v2768, %v2767
    %v2778 = vsel %vm1104, %v2747, 0
    %2780 = vmatprep.subr.bf16.mxu0 0
    %2781 = vmatpush1.bf16.msra.mxu0 0
    %2782 = vmatprep.subr.bf16.mxu0 0
    %2783 = vmatpush1.bf16.msra.mxu0 0
    %2784 = vmatprep.subr.bf16.mxu0 0
    %2785 = vmatpush1.bf16.msra.mxu0 0
    %2786 = vmatprep.subr.bf16.mxu0 0
    %2787 = vmatpush1.bf16.msra.mxu0 0
    %2788 = vmatprep.subr.bf16.mxu0 0
    %2789 = vmatpush1.bf16.msra.mxu0 %v2772
    %2790 = vmatprep.subr.bf16.mxu0 0
    %2791 = vmatpush1.bf16.msra.mxu0 %v2771
    %2792 = vmatprep.subr.bf16.mxu0 0
    %2793 = vmatpush1.bf16.msra.mxu0 %v2770
    %2794 = vmatprep.subr.bf16.mxu0 0
    %2795 = vmatpush1.bf16.msra.mxu0 %v2769
    %2796 = vmatprep.subr.bf16.mxu0 0
    %2797 = vmatpush2.bf16.msra.mxu0 0
    %2798 = vmatprep.subr.bf16.mxu0 0
    %2799 = vmatpush2.bf16.msra.mxu0 0
    %2800 = vmatprep.subr.bf16.mxu0 0
    %2801 = vmatpush2.bf16.msra.mxu0 0
    %2802 = vmatprep.subr.bf16.mxu0 0
    %2803 = vmatpush2.bf16.msra.mxu0 0
    %2804 = vmatprep.subr.bf16.mxu0 0
    %2805 = vmatpush2.bf16.msra.mxu0 0
    %2806 = vmatprep.subr.bf16.mxu0 0
    %2807 = vmatpush2.bf16.msra.mxu0 0
    %2808 = vmatprep.subr.bf16.mxu0 0
    %2809 = vmatpush2.bf16.msra.mxu0 0
    %2810 = vmatprep.subr.bf16.mxu0 0
    %2811 = vmatpush2.bf16.msra.mxu0 0
    %2812 = vmatprep.mubr.bf16.mxu0 0
    %2813 = vmatmul.mubr.bf16.gmra.mxu0 %v2778
    %v2814 = vpop.f32.mrf.mxu0
    %v2815 = vadd.f32 %v2752, %v2814
    %v2816 = vpop.f32.mrf.mxu0
    %v2817 = vpop.f32.mrf.mxu0
    %v2818 = vadd.f32 %v2752, %v2817
    %v2819 = vpop.f32.mrf.mxu0
    %2820 = vdwg.mxu0
    %v2821 = vadd.f32 %v2653, %v2815
    %v2822 = vadd.f32 %v2654, %v2818
    %v2823 = vsel %vm70, %v2821, 0.0
    %2824 = vadd.xlane.f32.xlu0 %v2823
    %v2825 = vpop.xlane.xlu0 %2824
    %v2826 = vsel %vm70, %v2822, 0.0
    %2827 = vadd.xlane.f32.xlu0 %v2826
    %v2828 = vpop.xlane.xlu0 %2827
    %v2829 = vmul.f32 %v2825, %v947
    %v2830 = vmul.f32 %v2828, %v947
    %v2831 = vsub.f32 %v2821, %v2829
    %v2832 = vsub.f32 %v2822, %v2830
    %v2833 = vmul.f32 %v2831, %v2831
    %v2834 = vmul.f32 %v2832, %v2832
    %v2835 = vsel %vm70, %v2833, 0.0
    %2836 = vadd.xlane.f32.xlu0 %v2835
    %v2837 = vpop.xlane.xlu0 %2836
    %v2838 = vsel %vm70, %v2834, 0.0
    %2839 = vadd.xlane.f32.xlu0 %v2838
    %v2840 = vpop.xlane.xlu0 %2839
    %v2841 = vmul.f32 %v2837, %v947
    %v2842 = vmul.f32 %v2840, %v947
    %v2843 = vadd.f32 %v2841, 1e-12
    %v2844 = vadd.f32 %v2842, 1e-12
    %v2845 = vrsqrt.pop %v2843
    %v2846 = vrsqrt.pop %v2844
    %v2847 = vmul.f32 %v2831, %v2845
    %v2848 = vmul.f32 %v2832, %v2846
    %v2849 = vld [vmem:[#allocation7 + $0x14] sm:$0x1]
    %v2850 = vlaneseq
    %v2851 = vshrl.u32 %v2850, 7
    %v2852 = vsub.s32 0, %v2851
    %v2853 = vrot.slane %v2849, %v2852
    %v2854 = vmul.f32 %v2847, %v2853
    %v2855 = vmul.f32 %v2848, %v2853
    %v2856 = vld [vmem:[#allocation7 + $0x15] sm:$0x1]
    %v2857 = vlaneseq
    %v2858 = vshrl.u32 %v2857, 7
    %v2859 = vsub.s32 0, %v2858
    %v2860 = vrot.slane %v2856, %v2859
    %v2861 = vadd.f32 %v2854, %v2860
    %v2862 = vadd.f32 %v2855, %v2860
    %v2863 = vpack.c.bf16 %v2862, %v2861
    %v2865 = vsel %vm70, %v2863, 0
    %2867 = vmatprep.subr.bf16.mxu0 0
    %2868 = vmatpush1.bf16.msra.mxu0 0
    %2869 = vmatprep.subr.bf16.mxu0 0
    %2870 = vmatpush1.bf16.msra.mxu0 0
    %2871 = vmatprep.subr.bf16.mxu0 0
    %2872 = vmatpush1.bf16.msra.mxu0 0
    %2873 = vmatprep.subr.bf16.mxu0 0
    %2874 = vmatpush1.bf16.msra.mxu0 0
    %2875 = vmatprep.subr.bf16.mxu0 0
    %2876 = vmatpush1.bf16.msra.mxu0 0
    %2877 = vmatprep.subr.bf16.mxu0 0
    %2878 = vmatpush1.bf16.msra.mxu0 0
    %2879 = vmatprep.subr.bf16.mxu0 0
    %2880 = vmatpush1.bf16.msra.mxu0 %v1986
    %2881 = vmatprep.subr.bf16.mxu0 0
    %2882 = vmatpush1.bf16.msra.mxu0 %v1985
    %2883 = vmatprep.subr.bf16.mxu0 0
    %2884 = vmatpush2.bf16.msra.mxu0 0
    %2885 = vmatprep.subr.bf16.mxu0 0
    %2886 = vmatpush2.bf16.msra.mxu0 0
    %2887 = vmatprep.subr.bf16.mxu0 0
    %2888 = vmatpush2.bf16.msra.mxu0 0
    %2889 = vmatprep.subr.bf16.mxu0 0
    %2890 = vmatpush2.bf16.msra.mxu0 0
    %2891 = vmatprep.subr.bf16.mxu0 0
    %2892 = vmatpush2.bf16.msra.mxu0 0
    %2893 = vmatprep.subr.bf16.mxu0 0
    %2894 = vmatpush2.bf16.msra.mxu0 0
    %2895 = vmatprep.subr.bf16.mxu0 0
    %2896 = vmatpush2.bf16.msra.mxu0 0
    %2897 = vmatprep.subr.bf16.mxu0 0
    %2898 = vmatpush2.bf16.msra.mxu0 0
    %2899 = vmatprep.mubr.bf16.mxu0 0
    %2900 = vmatmul.mubr.bf16.gmra.mxu0 %v2865
    %v2901 = vpop.f32.mrf.mxu0
    %v2902 = vadd.f32 %v1976, %v2901
    %v2903 = vpop.f32.mrf.mxu0
    %v2904 = vpop.f32.mrf.mxu0
    %v2905 = vadd.f32 %v1976, %v2904
    %v2906 = vpop.f32.mrf.mxu0
    %2907 = vdwg.mxu0
    %v2908 = vpack.c.bf16 %v2905, %v2902
    %2910 = vrot.lane.b32.xlu0 %v2908, 96
    %v2911 = vpop.permute.xlu0 %2910
    %v2913 = vsel %vm360, %v2908, 0
    %v2916 = vsel %vm360, %v2911, 0
    %2918 = vmatprep.subr.bf16.mxu0 0
    %2919 = vmatpush1.bf16.xpose.msra.mxu0 0
    %2920 = vmatprep.subr.bf16.mxu0 0
    %2921 = vmatpush1.bf16.xpose.msra.mxu0 0
    %2922 = vmatprep.subr.bf16.mxu0 0
    %2923 = vmatpush1.bf16.xpose.msra.mxu0 0
    %2924 = vmatprep.subr.bf16.mxu0 0
    %2925 = vmatpush1.bf16.xpose.msra.mxu0 0
    %2926 = vmatprep.subr.bf16.mxu0 0
    %2927 = vmatpush1.bf16.xpose.msra.mxu0 0
    %2928 = vmatprep.subr.bf16.mxu0 0
    %2929 = vmatpush1.bf16.xpose.msra.mxu0 0
    %2930 = vmatprep.subr.bf16.mxu0 0
    %2931 = vmatpush1.bf16.xpose.msra.mxu0 0
    %2932 = vmatprep.subr.bf16.mxu0 0
    %2933 = vmatpush1.bf16.xpose.msra.mxu0 %v2916
    %2934 = vmatprep.subr.bf16.mxu0 0
    %2935 = vmatpush2.bf16.xpose.msra.mxu0 0
    %2936 = vmatprep.subr.bf16.mxu0 0
    %2937 = vmatpush2.bf16.xpose.msra.mxu0 0
    %2938 = vmatprep.subr.bf16.mxu0 0
    %2939 = vmatpush2.bf16.xpose.msra.mxu0 0
    %2940 = vmatprep.subr.bf16.mxu0 0
    %2941 = vmatpush2.bf16.xpose.msra.mxu0 0
    %2942 = vmatprep.subr.bf16.mxu0 0
    %2943 = vmatpush2.bf16.xpose.msra.mxu0 0
    %2944 = vmatprep.subr.bf16.mxu0 0
    %2945 = vmatpush2.bf16.xpose.msra.mxu0 0
    %2946 = vmatprep.subr.bf16.mxu0 0
    %2947 = vmatpush2.bf16.xpose.msra.mxu0 0
    %2948 = vmatprep.subr.bf16.mxu0 0
    %2949 = vmatpush2.bf16.xpose.msra.mxu0 0
    %2950 = vmatprep.mubr.bf16.mxu0 0
    %2951 = vmatmul.mubr.bf16.gmra.mxu0 %v2913
    %v2952 = vpop.f32.mrf.mxu0
    %v2953 = vadd.f32 %v66, %v2952
    %v2954 = vpop.f32.mrf.mxu0
    %v2955 = vpop.f32.mrf.mxu0
    %v2956 = vadd.f32 %v67, %v2955
    %v2957 = vpop.f32.mrf.mxu0
    %2958 = vdwg.mxu0
    %v2959 = vsel %vm408, %v2953, -inf
    %2960 = vmax.xlane.f32.xlu0 %v2959
    %v2961 = vpop.xlane.xlu0 %2960
    %v2962 = vsel %vm408, %v2956, -inf
    %2963 = vmax.xlane.f32.xlu0 %v2962
    %v2964 = vpop.xlane.xlu0 %2963
    %v2965 = vsub.f32 %v2953, %v2961
    %v2966 = vsub.f32 %v2956, %v2964
    %v2967 = vmul.f32 %v2965, 1.442695
    %v2968 = vpow.pop %v2967
    %v2969 = vmul.f32 %v2966, 1.442695
    %v2970 = vpow.pop %v2969
    %v2971 = vsel %vm408, %v2968, 0.0
    %2972 = vadd.xlane.f32.xlu0 %v2971
    %v2973 = vpop.xlane.xlu0 %2972
    %v2974 = vsel %vm408, %v2970, 0.0
    %2975 = vadd.xlane.f32.xlu0 %v2974
    %v2976 = vpop.xlane.xlu0 %2975
    %v2977 = vrcp.pop %v2973
    %v2978 = vmul.f32 %v2968, %v2977
    %v2979 = vrcp.pop %v2976
    %v2980 = vmul.f32 %v2970, %v2979
    %v2981 = vpack.c.bf16 %v2980, %v2978
    %2982 = vrot.lane.b32.xlu0 %v2908, 64
    %v2983 = vpop.permute.xlu0 %2982
    %v2986 = vsel %vm408, %v2981, 0
    %2988 = vmatprep.subr.bf16.mxu0 0
    %2989 = vmatpush1.bf16.msra.mxu0 0
    %2990 = vmatprep.subr.bf16.mxu0 0
    %2991 = vmatpush1.bf16.msra.mxu0 0
    %2992 = vmatprep.subr.bf16.mxu0 0
    %2993 = vmatpush1.bf16.msra.mxu0 0
    %2994 = vmatprep.subr.bf16.mxu0 0
    %2995 = vmatpush1.bf16.msra.mxu0 0
    %2996 = vmatprep.subr.bf16.mxu0 0
    %2997 = vmatpush1.bf16.msra.mxu0 0
    %2998 = vmatprep.subr.bf16.mxu0 0
    %2999 = vmatpush1.bf16.msra.mxu0 0
    %3000 = vmatprep.subr.bf16.mxu0 0
    %3001 = vmatpush1.bf16.msra.mxu0 0
    %3002 = vmatprep.subr.bf16.mxu0 0
    %3003 = vmatpush1.bf16.msra.mxu0 %v2983
    %3004 = vmatprep.subr.bf16.mxu0 0
    %3005 = vmatpush2.bf16.msra.mxu0 0
    %3006 = vmatprep.subr.bf16.mxu0 0
    %3007 = vmatpush2.bf16.msra.mxu0 0
    %3008 = vmatprep.subr.bf16.mxu0 0
    %3009 = vmatpush2.bf16.msra.mxu0 0
    %3010 = vmatprep.subr.bf16.mxu0 0
    %3011 = vmatpush2.bf16.msra.mxu0 0
    %3012 = vmatprep.subr.bf16.mxu0 0
    %3013 = vmatpush2.bf16.msra.mxu0 0
    %3014 = vmatprep.subr.bf16.mxu0 0
    %3015 = vmatpush2.bf16.msra.mxu0 0
    %3016 = vmatprep.subr.bf16.mxu0 0
    %3017 = vmatpush2.bf16.msra.mxu0 0
    %3018 = vmatprep.subr.bf16.mxu0 0
    %3019 = vmatpush2.bf16.msra.mxu0 0
    %3020 = vmatprep.mubr.bf16.mxu0 0
    %3021 = vmatmul.mubr.bf16.gmra.mxu0 %v2986
    %v3022 = vpop.f32.mrf.mxu0
    %v3023 = vadd.f32 0.0, %v3022
    %v3024 = vpop.f32.mrf.mxu0
    %v3025 = vpop.f32.mrf.mxu0
    %v3026 = vadd.f32 0.0, %v3025
    %v3027 = vpop.f32.mrf.mxu0
    %3028 = vdwg.mxu0
    %3029 = vrot.lane.b32.xlu0 %v2908, 120
    %v3030 = vpop.permute.xlu0 %3029
    %3031 = vrot.lane.b32.xlu0 %v2908, 88
    %v3032 = vpop.permute.xlu0 %3031
    %v3034 = vsel %vm360, %v3030, 0
    %v3037 = vsel %vm360, %v3032, 0
    %3039 = vmatprep.subr.bf16.mxu0 0
    %3040 = vmatpush1.bf16.xpose.msra.mxu0 0
    %3041 = vmatprep.subr.bf16.mxu0 0
    %3042 = vmatpush1.bf16.xpose.msra.mxu0 0
    %3043 = vmatprep.subr.bf16.mxu0 0
    %3044 = vmatpush1.bf16.xpose.msra.mxu0 0
    %3045 = vmatprep.subr.bf16.mxu0 0
    %3046 = vmatpush1.bf16.xpose.msra.mxu0 0
    %3047 = vmatprep.subr.bf16.mxu0 0
    %3048 = vmatpush1.bf16.xpose.msra.mxu0 0
    %3049 = vmatprep.subr.bf16.mxu0 0
    %3050 = vmatpush1.bf16.xpose.msra.mxu0 0
    %3051 = vmatprep.subr.bf16.mxu0 0
    %3052 = vmatpush1.bf16.xpose.msra.mxu0 0
    %3053 = vmatprep.subr.bf16.mxu0 0
    %3054 = vmatpush1.bf16.xpose.msra.mxu0 %v3037
    %3055 = vmatprep.subr.bf16.mxu0 0
    %3056 = vmatpush2.bf16.xpose.msra.mxu0 0
    %3057 = vmatprep.subr.bf16.mxu0 0
    %3058 = vmatpush2.bf16.xpose.msra.mxu0 0
    %3059 = vmatprep.subr.bf16.mxu0 0
    %3060 = vmatpush2.bf16.xpose.msra.mxu0 0
    %3061 = vmatprep.subr.bf16.mxu0 0
    %3062 = vmatpush2.bf16.xpose.msra.mxu0 0
    %3063 = vmatprep.subr.bf16.mxu0 0
    %3064 = vmatpush2.bf16.xpose.msra.mxu0 0
    %3065 = vmatprep.subr.bf16.mxu0 0
    %3066 = vmatpush2.bf16.xpose.msra.mxu0 0
    %3067 = vmatprep.subr.bf16.mxu0 0
    %3068 = vmatpush2.bf16.xpose.msra.mxu0 0
    %3069 = vmatprep.subr.bf16.mxu0 0
    %3070 = vmatpush2.bf16.xpose.msra.mxu0 0
    %3071 = vmatprep.mubr.bf16.mxu0 0
    %3072 = vmatmul.mubr.bf16.gmra.mxu0 %v3034
    %v3073 = vpop.f32.mrf.mxu0
    %v3074 = vadd.f32 %v66, %v3073
    %v3075 = vpop.f32.mrf.mxu0
    %v3076 = vpop.f32.mrf.mxu0
    %v3077 = vadd.f32 %v67, %v3076
    %v3078 = vpop.f32.mrf.mxu0
    %3079 = vdwg.mxu0
    %v3080 = vsel %vm408, %v3074, -inf
    %3081 = vmax.xlane.f32.xlu0 %v3080
    %v3082 = vpop.xlane.xlu0 %3081
    %v3083 = vsel %vm408, %v3077, -inf
    %3084 = vmax.xlane.f32.xlu0 %v3083
    %v3085 = vpop.xlane.xlu0 %3084
    %v3086 = vsub.f32 %v3074, %v3082
    %v3087 = vsub.f32 %v3077, %v3085
    %v3088 = vmul.f32 %v3086, 1.442695
    %v3089 = vpow.pop %v3088
    %v3090 = vmul.f32 %v3087, 1.442695
    %v3091 = vpow.pop %v3090
    %v3092 = vsel %vm408, %v3089, 0.0
    %3093 = vadd.xlane.f32.xlu0 %v3092
    %v3094 = vpop.xlane.xlu0 %3093
    %v3095 = vsel %vm408, %v3091, 0.0
    %3096 = vadd.xlane.f32.xlu0 %v3095
    %v3097 = vpop.xlane.xlu0 %3096
    %v3098 = vrcp.pop %v3094
    %v3099 = vmul.f32 %v3089, %v3098
    %v3100 = vrcp.pop %v3097
    %v3101 = vmul.f32 %v3091, %v3100
    %v3102 = vpack.c.bf16 %v3101, %v3099
    %3103 = vrot.lane.b32.xlu0 %v2908, 56
    %v3104 = vpop.permute.xlu0 %3103
    %v3107 = vsel %vm408, %v3102, 0
    %3109 = vmatprep.subr.bf16.mxu0 0
    %3110 = vmatpush1.bf16.msra.mxu0 0
    %3111 = vmatprep.subr.bf16.mxu0 0
    %3112 = vmatpush1.bf16.msra.mxu0 0
    %3113 = vmatprep.subr.bf16.mxu0 0
    %3114 = vmatpush1.bf16.msra.mxu0 0
    %3115 = vmatprep.subr.bf16.mxu0 0
    %3116 = vmatpush1.bf16.msra.mxu0 0
    %3117 = vmatprep.subr.bf16.mxu0 0
    %3118 = vmatpush1.bf16.msra.mxu0 0
    %3119 = vmatprep.subr.bf16.mxu0 0
    %3120 = vmatpush1.bf16.msra.mxu0 0
    %3121 = vmatprep.subr.bf16.mxu0 0
    %3122 = vmatpush1.bf16.msra.mxu0 0
    %3123 = vmatprep.subr.bf16.mxu0 0
    %3124 = vmatpush1.bf16.msra.mxu0 %v3104
    %3125 = vmatprep.subr.bf16.mxu0 0
    %3126 = vmatpush2.bf16.msra.mxu0 0
    %3127 = vmatprep.subr.bf16.mxu0 0
    %3128 = vmatpush2.bf16.msra.mxu0 0
    %3129 = vmatprep.subr.bf16.mxu0 0
    %3130 = vmatpush2.bf16.msra.mxu0 0
    %3131 = vmatprep.subr.bf16.mxu0 0
    %3132 = vmatpush2.bf16.msra.mxu0 0
    %3133 = vmatprep.subr.bf16.mxu0 0
    %3134 = vmatpush2.bf16.msra.mxu0 0
    %3135 = vmatprep.subr.bf16.mxu0 0
    %3136 = vmatpush2.bf16.msra.mxu0 0
    %3137 = vmatprep.subr.bf16.mxu0 0
    %3138 = vmatpush2.bf16.msra.mxu0 0
    %3139 = vmatprep.subr.bf16.mxu0 0
    %3140 = vmatpush2.bf16.msra.mxu0 0
    %3141 = vmatprep.mubr.bf16.mxu0 0
    %3142 = vmatmul.mubr.bf16.gmra.mxu0 %v3107
    %v3143 = vpop.f32.mrf.mxu0
    %v3144 = vadd.f32 0.0, %v3143
    %v3145 = vpop.f32.mrf.mxu0
    %v3146 = vpop.f32.mrf.mxu0
    %v3147 = vadd.f32 0.0, %v3146
    %v3148 = vpop.f32.mrf.mxu0
    %3149 = vdwg.mxu0
    %3150 = vrot.lane.b32.xlu0 %v2908, 112
    %v3151 = vpop.permute.xlu0 %3150
    %3152 = vrot.lane.b32.xlu0 %v2908, 80
    %v3153 = vpop.permute.xlu0 %3152
    %v3155 = vsel %vm360, %v3151, 0
    %v3158 = vsel %vm360, %v3153, 0
    %3160 = vmatprep.subr.bf16.mxu0 0
    %3161 = vmatpush1.bf16.xpose.msra.mxu0 0
    %3162 = vmatprep.subr.bf16.mxu0 0
    %3163 = vmatpush1.bf16.xpose.msra.mxu0 0
    %3164 = vmatprep.subr.bf16.mxu0 0
    %3165 = vmatpush1.bf16.xpose.msra.mxu0 0
    %3166 = vmatprep.subr.bf16.mxu0 0
    %3167 = vmatpush1.bf16.xpose.msra.mxu0 0
    %3168 = vmatprep.subr.bf16.mxu0 0
    %3169 = vmatpush1.bf16.xpose.msra.mxu0 0
    %3170 = vmatprep.subr.bf16.mxu0 0
    %3171 = vmatpush1.bf16.xpose.msra.mxu0 0
    %3172 = vmatprep.subr.bf16.mxu0 0
    %3173 = vmatpush1.bf16.xpose.msra.mxu0 0
    %3174 = vmatprep.subr.bf16.mxu0 0
    %3175 = vmatpush1.bf16.xpose.msra.mxu0 %v3158
    %3176 = vmatprep.subr.bf16.mxu0 0
    %3177 = vmatpush2.bf16.xpose.msra.mxu0 0
    %3178 = vmatprep.subr.bf16.mxu0 0
    %3179 = vmatpush2.bf16.xpose.msra.mxu0 0
    %3180 = vmatprep.subr.bf16.mxu0 0
    %3181 = vmatpush2.bf16.xpose.msra.mxu0 0
    %3182 = vmatprep.subr.bf16.mxu0 0
    %3183 = vmatpush2.bf16.xpose.msra.mxu0 0
    %3184 = vmatprep.subr.bf16.mxu0 0
    %3185 = vmatpush2.bf16.xpose.msra.mxu0 0
    %3186 = vmatprep.subr.bf16.mxu0 0
    %3187 = vmatpush2.bf16.xpose.msra.mxu0 0
    %3188 = vmatprep.subr.bf16.mxu0 0
    %3189 = vmatpush2.bf16.xpose.msra.mxu0 0
    %3190 = vmatprep.subr.bf16.mxu0 0
    %3191 = vmatpush2.bf16.xpose.msra.mxu0 0
    %3192 = vmatprep.mubr.bf16.mxu0 0
    %3193 = vmatmul.mubr.bf16.gmra.mxu0 %v3155
    %v3194 = vpop.f32.mrf.mxu0
    %v3195 = vadd.f32 %v66, %v3194
    %v3196 = vpop.f32.mrf.mxu0
    %v3197 = vpop.f32.mrf.mxu0
    %v3198 = vadd.f32 %v67, %v3197
    %v3199 = vpop.f32.mrf.mxu0
    %3200 = vdwg.mxu0
    %v3201 = vsel %vm408, %v3195, -inf
    %3202 = vmax.xlane.f32.xlu0 %v3201
    %v3203 = vpop.xlane.xlu0 %3202
    %v3204 = vsel %vm408, %v3198, -inf
    %3205 = vmax.xlane.f32.xlu0 %v3204
    %v3206 = vpop.xlane.xlu0 %3205
    %v3207 = vsub.f32 %v3195, %v3203
    %v3208 = vsub.f32 %v3198, %v3206
    %v3209 = vmul.f32 %v3207, 1.442695
    %v3210 = vpow.pop %v3209
    %v3211 = vmul.f32 %v3208, 1.442695
    %v3212 = vpow.pop %v3211
    %v3213 = vsel %vm408, %v3210, 0.0
    %3214 = vadd.xlane.f32.xlu0 %v3213
    %v3215 = vpop.xlane.xlu0 %3214
    %v3216 = vsel %vm408, %v3212, 0.0
    %3217 = vadd.xlane.f32.xlu0 %v3216
    %v3218 = vpop.xlane.xlu0 %3217
    %v3219 = vrcp.pop %v3215
    %v3220 = vmul.f32 %v3210, %v3219
    %v3221 = vrcp.pop %v3218
    %v3222 = vmul.f32 %v3212, %v3221
    %v3223 = vpack.c.bf16 %v3222, %v3220
    %3224 = vrot.lane.b32.xlu0 %v2908, 48
    %v3225 = vpop.permute.xlu0 %3224
    %v3228 = vsel %vm408, %v3223, 0
    %3230 = vmatprep.subr.bf16.mxu0 0
    %3231 = vmatpush1.bf16.msra.mxu0 0
    %3232 = vmatprep.subr.bf16.mxu0 0
    %3233 = vmatpush1.bf16.msra.mxu0 0
    %3234 = vmatprep.subr.bf16.mxu0 0
    %3235 = vmatpush1.bf16.msra.mxu0 0
    %3236 = vmatprep.subr.bf16.mxu0 0
    %3237 = vmatpush1.bf16.msra.mxu0 0
    %3238 = vmatprep.subr.bf16.mxu0 0
    %3239 = vmatpush1.bf16.msra.mxu0 0
    %3240 = vmatprep.subr.bf16.mxu0 0
    %3241 = vmatpush1.bf16.msra.mxu0 0
    %3242 = vmatprep.subr.bf16.mxu0 0
    %3243 = vmatpush1.bf16.msra.mxu0 0
    %3244 = vmatprep.subr.bf16.mxu0 0
    %3245 = vmatpush1.bf16.msra.mxu0 %v3225
    %3246 = vmatprep.subr.bf16.mxu0 0
    %3247 = vmatpush2.bf16.msra.mxu0 0
    %3248 = vmatprep.subr.bf16.mxu0 0
    %3249 = vmatpush2.bf16.msra.mxu0 0
    %3250 = vmatprep.subr.bf16.mxu0 0
    %3251 = vmatpush2.bf16.msra.mxu0 0
    %3252 = vmatprep.subr.bf16.mxu0 0
    %3253 = vmatpush2.bf16.msra.mxu0 0
    %3254 = vmatprep.subr.bf16.mxu0 0
    %3255 = vmatpush2.bf16.msra.mxu0 0
    %3256 = vmatprep.subr.bf16.mxu0 0
    %3257 = vmatpush2.bf16.msra.mxu0 0
    %3258 = vmatprep.subr.bf16.mxu0 0
    %3259 = vmatpush2.bf16.msra.mxu0 0
    %3260 = vmatprep.subr.bf16.mxu0 0
    %3261 = vmatpush2.bf16.msra.mxu0 0
    %3262 = vmatprep.mubr.bf16.mxu0 0
    %3263 = vmatmul.mubr.bf16.gmra.mxu0 %v3228
    %v3264 = vpop.f32.mrf.mxu0
    %v3265 = vadd.f32 0.0, %v3264
    %v3266 = vpop.f32.mrf.mxu0
    %v3267 = vpop.f32.mrf.mxu0
    %v3268 = vadd.f32 0.0, %v3267
    %v3269 = vpop.f32.mrf.mxu0
    %3270 = vdwg.mxu0
    %3271 = vrot.lane.b32.xlu0 %v2908, 104
    %v3272 = vpop.permute.xlu0 %3271
    %3273 = vrot.lane.b32.xlu0 %v2908, 72
    %v3274 = vpop.permute.xlu0 %3273
    %v3276 = vsel %vm360, %v3272, 0
    %v3279 = vsel %vm360, %v3274, 0
    %3281 = vmatprep.subr.bf16.mxu0 0
    %3282 = vmatpush1.bf16.xpose.msra.mxu0 0
    %3283 = vmatprep.subr.bf16.mxu0 0
    %3284 = vmatpush1.bf16.xpose.msra.mxu0 0
    %3285 = vmatprep.subr.bf16.mxu0 0
    %3286 = vmatpush1.bf16.xpose.msra.mxu0 0
    %3287 = vmatprep.subr.bf16.mxu0 0
    %3288 = vmatpush1.bf16.xpose.msra.mxu0 0
    %3289 = vmatprep.subr.bf16.mxu0 0
    %3290 = vmatpush1.bf16.xpose.msra.mxu0 0
    %3291 = vmatprep.subr.bf16.mxu0 0
    %3292 = vmatpush1.bf16.xpose.msra.mxu0 0
    %3293 = vmatprep.subr.bf16.mxu0 0
    %3294 = vmatpush1.bf16.xpose.msra.mxu0 0
    %3295 = vmatprep.subr.bf16.mxu0 0
    %3296 = vmatpush1.bf16.xpose.msra.mxu0 %v3279
    %3297 = vmatprep.subr.bf16.mxu0 0
    %3298 = vmatpush2.bf16.xpose.msra.mxu0 0
    %3299 = vmatprep.subr.bf16.mxu0 0
    %3300 = vmatpush2.bf16.xpose.msra.mxu0 0
    %3301 = vmatprep.subr.bf16.mxu0 0
    %3302 = vmatpush2.bf16.xpose.msra.mxu0 0
    %3303 = vmatprep.subr.bf16.mxu0 0
    %3304 = vmatpush2.bf16.xpose.msra.mxu0 0
    %3305 = vmatprep.subr.bf16.mxu0 0
    %3306 = vmatpush2.bf16.xpose.msra.mxu0 0
    %3307 = vmatprep.subr.bf16.mxu0 0
    %3308 = vmatpush2.bf16.xpose.msra.mxu0 0
    %3309 = vmatprep.subr.bf16.mxu0 0
    %3310 = vmatpush2.bf16.xpose.msra.mxu0 0
    %3311 = vmatprep.subr.bf16.mxu0 0
    %3312 = vmatpush2.bf16.xpose.msra.mxu0 0
    %3313 = vmatprep.mubr.bf16.mxu0 0
    %3314 = vmatmul.mubr.bf16.gmra.mxu0 %v3276
    %v3315 = vpop.f32.mrf.mxu0
    %v3316 = vadd.f32 %v66, %v3315
    %v3317 = vpop.f32.mrf.mxu0
    %v3318 = vpop.f32.mrf.mxu0
    %v3319 = vadd.f32 %v67, %v3318
    %v3320 = vpop.f32.mrf.mxu0
    %3321 = vdwg.mxu0
    %v3322 = vsel %vm408, %v3316, -inf
    %3323 = vmax.xlane.f32.xlu0 %v3322
    %v3324 = vpop.xlane.xlu0 %3323
    %v3325 = vsel %vm408, %v3319, -inf
    %3326 = vmax.xlane.f32.xlu0 %v3325
    %v3327 = vpop.xlane.xlu0 %3326
    %v3328 = vsub.f32 %v3316, %v3324
    %v3329 = vsub.f32 %v3319, %v3327
    %v3330 = vmul.f32 %v3328, 1.442695
    %v3331 = vpow.pop %v3330
    %v3332 = vmul.f32 %v3329, 1.442695
    %v3333 = vpow.pop %v3332
    %v3334 = vsel %vm408, %v3331, 0.0
    %3335 = vadd.xlane.f32.xlu0 %v3334
    %v3336 = vpop.xlane.xlu0 %3335
    %v3337 = vsel %vm408, %v3333, 0.0
    %3338 = vadd.xlane.f32.xlu0 %v3337
    %v3339 = vpop.xlane.xlu0 %3338
    %v3340 = vrcp.pop %v3336
    %v3341 = vmul.f32 %v3331, %v3340
    %v3342 = vrcp.pop %v3339
    %v3343 = vmul.f32 %v3333, %v3342
    %v3344 = vpack.c.bf16 %v3343, %v3341
    %3345 = vrot.lane.b32.xlu0 %v2908, 40
    %v3346 = vpop.permute.xlu0 %3345
    %v3349 = vsel %vm408, %v3344, 0
    %3351 = vmatprep.subr.bf16.mxu0 0
    %3352 = vmatpush1.bf16.msra.mxu0 0
    %3353 = vmatprep.subr.bf16.mxu0 0
    %3354 = vmatpush1.bf16.msra.mxu0 0
    %3355 = vmatprep.subr.bf16.mxu0 0
    %3356 = vmatpush1.bf16.msra.mxu0 0
    %3357 = vmatprep.subr.bf16.mxu0 0
    %3358 = vmatpush1.bf16.msra.mxu0 0
    %3359 = vmatprep.subr.bf16.mxu0 0
    %3360 = vmatpush1.bf16.msra.mxu0 0
    %3361 = vmatprep.subr.bf16.mxu0 0
    %3362 = vmatpush1.bf16.msra.mxu0 0
    %3363 = vmatprep.subr.bf16.mxu0 0
    %3364 = vmatpush1.bf16.msra.mxu0 0
    %3365 = vmatprep.subr.bf16.mxu0 0
    %3366 = vmatpush1.bf16.msra.mxu0 %v3346
    %3367 = vmatprep.subr.bf16.mxu0 0
    %3368 = vmatpush2.bf16.msra.mxu0 0
    %3369 = vmatprep.subr.bf16.mxu0 0
    %3370 = vmatpush2.bf16.msra.mxu0 0
    %3371 = vmatprep.subr.bf16.mxu0 0
    %3372 = vmatpush2.bf16.msra.mxu0 0
    %3373 = vmatprep.subr.bf16.mxu0 0
    %3374 = vmatpush2.bf16.msra.mxu0 0
    %3375 = vmatprep.subr.bf16.mxu0 0
    %3376 = vmatpush2.bf16.msra.mxu0 0
    %3377 = vmatprep.subr.bf16.mxu0 0
    %3378 = vmatpush2.bf16.msra.mxu0 0
    %3379 = vmatprep.subr.bf16.mxu0 0
    %3380 = vmatpush2.bf16.msra.mxu0 0
    %3381 = vmatprep.subr.bf16.mxu0 0
    %3382 = vmatpush2.bf16.msra.mxu0 0
    %3383 = vmatprep.mubr.bf16.mxu0 0
    %3384 = vmatmul.mubr.bf16.gmra.mxu0 %v3349
    %v3385 = vpop.f32.mrf.mxu0
    %v3386 = vadd.f32 0.0, %v3385
    %v3387 = vpop.f32.mrf.mxu0
    %v3388 = vpop.f32.mrf.mxu0
    %v3389 = vadd.f32 0.0, %v3388
    %v3390 = vpop.f32.mrf.mxu0
    %3391 = vdwg.mxu0
    %3394 = vrot.lane.b32.xlu0 %v3144, 8
    %v3395 = vpop.permute.xlu0 %3394
    %3396 = vrot.lane.b32.xlu0 %v3147, 8
    %v3397 = vpop.permute.xlu0 %3396
    %3402 = vrot.lane.b32.xlu0 %v3265, 16
    %v3403 = vpop.permute.xlu0 %3402
    %3404 = vrot.lane.b32.xlu0 %v3268, 16
    %v3405 = vpop.permute.xlu0 %3404
    %3410 = vrot.lane.b32.xlu0 %v3386, 24
    %v3411 = vpop.permute.xlu0 %3410
    %3412 = vrot.lane.b32.xlu0 %v3389, 24
    %v3413 = vpop.permute.xlu0 %3412
    %v3416 = vsel %vm360, %v3023, %v3395
    %v3417 = vsel %vm360, %v3026, %v3397
    %v3418 = vsel %vm408, %v3416, %v3403
    %v3419 = vsel %vm408, %v3417, %v3405
    %v3420 = vsel %vm870, %v3418, %v3411
    %v3421 = vsel %vm870, %v3419, %v3413
    %v3422 = vpack.c.bf16 %v3421, %v3420
    %v3424 = vsel %vm70, %v3422, 0
    %3426 = vmatprep.subr.bf16.mxu0 0
    %3427 = vmatpush1.bf16.msra.mxu0 0
    %3428 = vmatprep.subr.bf16.mxu0 0
    %3429 = vmatpush1.bf16.msra.mxu0 0
    %3430 = vmatprep.subr.bf16.mxu0 0
    %3431 = vmatpush1.bf16.msra.mxu0 0
    %3432 = vmatprep.subr.bf16.mxu0 0
    %3433 = vmatpush1.bf16.msra.mxu0 0
    %3434 = vmatprep.subr.bf16.mxu0 0
    %3435 = vmatpush1.bf16.msra.mxu0 0
    %3436 = vmatprep.subr.bf16.mxu0 0
    %3437 = vmatpush1.bf16.msra.mxu0 0
    %3438 = vmatprep.subr.bf16.mxu0 0
    %3439 = vmatpush1.bf16.msra.mxu0 %v2566
    %3440 = vmatprep.subr.bf16.mxu0 0
    %3441 = vmatpush1.bf16.msra.mxu0 %v2565
    %3442 = vmatprep.subr.bf16.mxu0 0
    %3443 = vmatpush2.bf16.msra.mxu0 0
    %3444 = vmatprep.subr.bf16.mxu0 0
    %3445 = vmatpush2.bf16.msra.mxu0 0
    %3446 = vmatprep.subr.bf16.mxu0 0
    %3447 = vmatpush2.bf16.msra.mxu0 0
    %3448 = vmatprep.subr.bf16.mxu0 0
    %3449 = vmatpush2.bf16.msra.mxu0 0
    %3450 = vmatprep.subr.bf16.mxu0 0
    %3451 = vmatpush2.bf16.msra.mxu0 0
    %3452 = vmatprep.subr.bf16.mxu0 0
    %3453 = vmatpush2.bf16.msra.mxu0 0
    %3454 = vmatprep.subr.bf16.mxu0 0
    %3455 = vmatpush2.bf16.msra.mxu0 0
    %3456 = vmatprep.subr.bf16.mxu0 0
    %3457 = vmatpush2.bf16.msra.mxu0 0
    %3458 = vmatprep.mubr.bf16.mxu0 0
    %3459 = vmatmul.mubr.bf16.gmra.mxu0 %v3424
    %v3460 = vpop.f32.mrf.mxu0
    %v3461 = vadd.f32 %v2556, %v3460
    %v3462 = vpop.f32.mrf.mxu0
    %v3463 = vpop.f32.mrf.mxu0
    %v3464 = vadd.f32 %v2556, %v3463
    %v3465 = vpop.f32.mrf.mxu0
    %3466 = vdwg.mxu0
    %v3467 = vadd.f32 %v2861, %v3461
    %v3468 = vadd.f32 %v2862, %v3464
    %v3469 = vsel %vm70, %v3467, 0.0
    %3470 = vadd.xlane.f32.xlu0 %v3469
    %v3471 = vpop.xlane.xlu0 %3470
    %v3472 = vsel %vm70, %v3468, 0.0
    %3473 = vadd.xlane.f32.xlu0 %v3472
    %v3474 = vpop.xlane.xlu0 %3473
    %v3475 = vmul.f32 %v3471, %v947
    %v3476 = vmul.f32 %v3474, %v947
    %v3477 = vsub.f32 %v3467, %v3475
    %v3478 = vsub.f32 %v3468, %v3476
    %v3479 = vmul.f32 %v3477, %v3477
    %v3480 = vmul.f32 %v3478, %v3478
    %v3481 = vsel %vm70, %v3479, 0.0
    %3482 = vadd.xlane.f32.xlu0 %v3481
    %v3483 = vpop.xlane.xlu0 %3482
    %v3484 = vsel %vm70, %v3480, 0.0
    %3485 = vadd.xlane.f32.xlu0 %v3484
    %v3486 = vpop.xlane.xlu0 %3485
    %v3487 = vmul.f32 %v3483, %v947
    %v3488 = vmul.f32 %v3486, %v947
    %v3489 = vadd.f32 %v3487, 1e-12
    %v3490 = vadd.f32 %v3488, 1e-12
    %v3491 = vrsqrt.pop %v3489
    %v3492 = vrsqrt.pop %v3490
    %v3493 = vmul.f32 %v3477, %v3491
    %v3494 = vmul.f32 %v3478, %v3492
    %v3495 = vmul.f32 %v3493, %v2645
    %v3496 = vmul.f32 %v3494, %v2645
    %v3497 = vadd.f32 %v3495, %v2652
    %v3498 = vadd.f32 %v3496, %v2652
    %v3499 = vpack.c.bf16 %v3498, %v3497
    %v3501 = vsel %vm70, %v3499, 0
    %3503 = vmatprep.subr.bf16.mxu0 0
    %3504 = vmatpush1.bf16.msra.mxu0 0
    %3505 = vmatprep.subr.bf16.mxu0 0
    %3506 = vmatpush1.bf16.msra.mxu0 0
    %3507 = vmatprep.subr.bf16.mxu0 0
    %3508 = vmatpush1.bf16.msra.mxu0 0
    %3509 = vmatprep.subr.bf16.mxu0 0
    %3510 = vmatpush1.bf16.msra.mxu0 0
    %3511 = vmatprep.subr.bf16.mxu0 0
    %3512 = vmatpush1.bf16.msra.mxu0 0
    %3513 = vmatprep.subr.bf16.mxu0 0
    %3514 = vmatpush1.bf16.msra.mxu0 0
    %3515 = vmatprep.subr.bf16.mxu0 0
    %3516 = vmatpush1.bf16.msra.mxu0 %v2674
    %3517 = vmatprep.subr.bf16.mxu0 0
    %3518 = vmatpush1.bf16.msra.mxu0 %v2673
    %3519 = vmatprep.subr.bf16.mxu0 0
    %3520 = vmatpush2.bf16.msra.mxu0 0
    %3521 = vmatprep.subr.bf16.mxu0 0
    %3522 = vmatpush2.bf16.msra.mxu0 0
    %3523 = vmatprep.subr.bf16.mxu0 0
    %3524 = vmatpush2.bf16.msra.mxu0 0
    %3525 = vmatprep.subr.bf16.mxu0 0
    %3526 = vmatpush2.bf16.msra.mxu0 0
    %3527 = vmatprep.subr.bf16.mxu0 0
    %3528 = vmatpush2.bf16.msra.mxu0 0
    %3529 = vmatprep.subr.bf16.mxu0 0
    %3530 = vmatpush2.bf16.msra.mxu0 0
    %3531 = vmatprep.subr.bf16.mxu0 0
    %3532 = vmatpush2.bf16.msra.mxu0 0
    %3533 = vmatprep.subr.bf16.mxu0 0
    %3534 = vmatpush2.bf16.msra.mxu0 0
    %3535 = vmatprep.mubr.bf16.mxu0 0
    %3536 = vmatmul.mubr.bf16.gmra.mxu0 %v3501
    %v3537 = vpop.f32.mrf.mxu0
    %v3538 = vadd.f32 %v2664, %v3537
    %v3539 = vpop.f32.mrf.mxu0
    %v3540 = vpop.f32.mrf.mxu0
    %v3541 = vadd.f32 %v2664, %v3540
    %v3542 = vpop.f32.mrf.mxu0
    %3543 = vdwg.mxu0
    %v3544 = vmul.f32 %v3538, 0.5
    %v3545 = vmul.f32 %v3541, 0.5
    %v3546 = vmul.f32 %v3538, 0.044715
    %v3547 = vmul.f32 %v3541, 0.044715
    %v3548 = vmul.f32 %v3546, %v3538
    %v3549 = vmul.f32 %v3547, %v3541
    %v3550 = vmul.f32 %v3548, %v3538
    %v3551 = vmul.f32 %v3549, %v3541
    %v3552 = vadd.f32 %v3538, %v3550
    %v3553 = vadd.f32 %v3541, %v3551
    %v3554 = vmul.f32 %v3552, 0.7978846
    %v3555 = vmul.f32 %v3553, 0.7978846
    %v3556 = vtanh.pop %v3554
    %v3557 = vtanh.pop %v3555
    %v3558 = vadd.f32 %v3556, 1.0
    %v3559 = vadd.f32 %v3557, 1.0
    %v3560 = vmul.f32 %v3544, %v3558
    %v3561 = vmul.f32 %v3545, %v3559
    %v3562 = vpack.c.bf16 %v3561, %v3560
    %v3564 = vsel %vm1104, %v3562, 0
    %3566 = vmatprep.subr.bf16.mxu0 0
    %3567 = vmatpush1.bf16.msra.mxu0 0
    %3568 = vmatprep.subr.bf16.mxu0 0
    %3569 = vmatpush1.bf16.msra.mxu0 0
    %3570 = vmatprep.subr.bf16.mxu0 0
    %3571 = vmatpush1.bf16.msra.mxu0 0
    %3572 = vmatprep.subr.bf16.mxu0 0
    %3573 = vmatpush1.bf16.msra.mxu0 0
    %3574 = vmatprep.subr.bf16.mxu0 0
    %3575 = vmatpush1.bf16.msra.mxu0 %v2772
    %3576 = vmatprep.subr.bf16.mxu0 0
    %3577 = vmatpush1.bf16.msra.mxu0 %v2771
    %3578 = vmatprep.subr.bf16.mxu0 0
    %3579 = vmatpush1.bf16.msra.mxu0 %v2770
    %3580 = vmatprep.subr.bf16.mxu0 0
    %3581 = vmatpush1.bf16.msra.mxu0 %v2769
    %3582 = vmatprep.subr.bf16.mxu0 0
    %3583 = vmatpush2.bf16.msra.mxu0 0
    %3584 = vmatprep.subr.bf16.mxu0 0
    %3585 = vmatpush2.bf16.msra.mxu0 0
    %3586 = vmatprep.subr.bf16.mxu0 0
    %3587 = vmatpush2.bf16.msra.mxu0 0
    %3588 = vmatprep.subr.bf16.mxu0 0
    %3589 = vmatpush2.bf16.msra.mxu0 0
    %3590 = vmatprep.subr.bf16.mxu0 0
    %3591 = vmatpush2.bf16.msra.mxu0 0
    %3592 = vmatprep.subr.bf16.mxu0 0
    %3593 = vmatpush2.bf16.msra.mxu0 0
    %3594 = vmatprep.subr.bf16.mxu0 0
    %3595 = vmatpush2.bf16.msra.mxu0 0
    %3596 = vmatprep.subr.bf16.mxu0 0
    %3597 = vmatpush2.bf16.msra.mxu0 0
    %3598 = vmatprep.mubr.bf16.mxu0 0
    %3599 = vmatmul.mubr.bf16.gmra.mxu0 %v3564
    %v3600 = vpop.f32.mrf.mxu0
    %v3601 = vadd.f32 %v2752, %v3600
    %v3602 = vpop.f32.mrf.mxu0
    %v3603 = vpop.f32.mrf.mxu0
    %v3604 = vadd.f32 %v2752, %v3603
    %v3605 = vpop.f32.mrf.mxu0
    %3606 = vdwg.mxu0
    %v3607 = vadd.f32 %v3497, %v3601
    %v3608 = vadd.f32 %v3498, %v3604
    %v3609 = vsel %vm70, %v3607, 0.0
    %3610 = vadd.xlane.f32.xlu0 %v3609
    %v3611 = vpop.xlane.xlu0 %3610
    %v3612 = vsel %vm70, %v3608, 0.0
    %3613 = vadd.xlane.f32.xlu0 %v3612
    %v3614 = vpop.xlane.xlu0 %3613
    %v3615 = vmul.f32 %v3611, %v947
    %v3616 = vmul.f32 %v3614, %v947
    %v3617 = vsub.f32 %v3607, %v3615
    %v3618 = vsub.f32 %v3608, %v3616
    %v3619 = vmul.f32 %v3617, %v3617
    %v3620 = vmul.f32 %v3618, %v3618
    %v3621 = vsel %vm70, %v3619, 0.0
    %3622 = vadd.xlane.f32.xlu0 %v3621
    %v3623 = vpop.xlane.xlu0 %3622
    %v3624 = vsel %vm70, %v3620, 0.0
    %3625 = vadd.xlane.f32.xlu0 %v3624
    %v3626 = vpop.xlane.xlu0 %3625
    %v3627 = vmul.f32 %v3623, %v947
    %v3628 = vmul.f32 %v3626, %v947
    %v3629 = vadd.f32 %v3627, 1e-12
    %v3630 = vadd.f32 %v3628, 1e-12
    %v3631 = vrsqrt.pop %v3629
    %v3632 = vrsqrt.pop %v3630
    %v3633 = vmul.f32 %v3617, %v3631
    %v3634 = vmul.f32 %v3618, %v3632
    %v3635 = vmul.f32 %v3633, %v2853
    %v3636 = vmul.f32 %v3634, %v2853
    %v3637 = vadd.f32 %v3635, %v2860
    %v3638 = vadd.f32 %v3636, %v2860
    %v3639 = vld [vmem:[#allocation2 + $0x20] sm:$0xf]
    %v3640 = vld [vmem:[#allocation2 + $0x64] sm:$0xf]
    %v3641 = vld [vmem:[#allocation2 + $0xa8] sm:$0xf]
    %v3642 = vld [vmem:[#allocation2 + $0xec] sm:$0xf]
    %v3643 = vpack.c.bf16 %v3638, %v3637
    %v3644 = vld [vmem:[#allocation7 + $0x16] sm:$0x1]
    %v3645 = vlaneseq
    %v3646 = vshrl.u32 %v3645, 7
    %v3647 = vsub.s32 0, %v3646
    %v3648 = vrot.slane %v3644, %v3647
    %v3653 = vunpack.c.l.b16 %v3639
    %v3654 = vunpack.c.l.b16 %v3640
    %v3655 = vunpack.c.l.b16 %v3641
    %v3656 = vunpack.c.l.b16 %v3642
    %v3657 = vpack.c.b16 %v3654, %v3653
    %v3658 = vpack.c.b16 %v3656, %v3655
    %v3662 = vsel %vm70, %v3643, 0
    %3664 = vmatprep.subr.bf16.mxu0 0
    %3665 = vmatpush1.bf16.msra.mxu0 0
    %3666 = vmatprep.subr.bf16.mxu0 0
    %3667 = vmatpush1.bf16.msra.mxu0 0
    %3668 = vmatprep.subr.bf16.mxu0 0
    %3669 = vmatpush1.bf16.msra.mxu0 0
    %3670 = vmatprep.subr.bf16.mxu0 0
    %3671 = vmatpush1.bf16.msra.mxu0 0
    %3672 = vmatprep.subr.bf16.mxu0 0
    %3673 = vmatpush1.bf16.msra.mxu0 0
    %3674 = vmatprep.subr.bf16.mxu0 0
    %3675 = vmatpush1.bf16.msra.mxu0 0
    %3676 = vmatprep.subr.bf16.mxu0 0
    %3677 = vmatpush1.bf16.msra.mxu0 %v3658
    %3678 = vmatprep.subr.bf16.mxu0 0
    %3679 = vmatpush1.bf16.msra.mxu0 %v3657
    %3680 = vmatprep.subr.bf16.mxu0 0
    %3681 = vmatpush2.bf16.msra.mxu0 0
    %3682 = vmatprep.subr.bf16.mxu0 0
    %3683 = vmatpush2.bf16.msra.mxu0 0
    %3684 = vmatprep.subr.bf16.mxu0 0
    %3685 = vmatpush2.bf16.msra.mxu0 0
    %3686 = vmatprep.subr.bf16.mxu0 0
    %3687 = vmatpush2.bf16.msra.mxu0 0
    %3688 = vmatprep.subr.bf16.mxu0 0
    %3689 = vmatpush2.bf16.msra.mxu0 0
    %3690 = vmatprep.subr.bf16.mxu0 0
    %3691 = vmatpush2.bf16.msra.mxu0 0
    %3692 = vmatprep.subr.bf16.mxu0 0
    %3693 = vmatpush2.bf16.msra.mxu0 0
    %3694 = vmatprep.subr.bf16.mxu0 0
    %3695 = vmatpush2.bf16.msra.mxu0 0
    %3696 = vmatprep.mubr.bf16.mxu0 0
    %3697 = vmatmul.mubr.bf16.gmra.mxu0 %v3662
    %v3698 = vpop.f32.mrf.mxu0
    %v3699 = vadd.f32 %v3648, %v3698
    %v3700 = vpop.f32.mrf.mxu0
    %v3701 = vpop.f32.mrf.mxu0
    %v3702 = vadd.f32 %v3648, %v3701
    %v3703 = vpop.f32.mrf.mxu0
    %3704 = vdwg.mxu0
    %v3705 = vmul.f32 %v3699, 0.5
    %v3706 = vmul.f32 %v3702, 0.5
    %v3707 = vmul.f32 %v3699, 0.044715
    %v3708 = vmul.f32 %v3702, 0.044715
    %v3709 = vmul.f32 %v3707, %v3699
    %v3710 = vmul.f32 %v3708, %v3702
    %v3711 = vmul.f32 %v3709, %v3699
    %v3712 = vmul.f32 %v3710, %v3702
    %v3713 = vadd.f32 %v3699, %v3711
    %v3714 = vadd.f32 %v3702, %v3712
    %v3715 = vmul.f32 %v3713, 0.7978846
    %v3716 = vmul.f32 %v3714, 0.7978846
    %v3717 = vtanh.pop %v3715
    %v3718 = vtanh.pop %v3716
    %v3719 = vadd.f32 %v3717, 1.0
    %v3720 = vadd.f32 %v3718, 1.0
    %v3721 = vmul.f32 %v3705, %v3719
    %v3722 = vmul.f32 %v3706, %v3720
    %v3723 = vsel %vm70, %v3721, 0.0
    %v3724 = vsel %vm70, %v3722, 0.0
    %v3725 = vadd.f32 %v3723, %v3724
    %v3726 = vrot.slane %v3725, 4
    %v3727 = vadd.f32 %v3725, %v3726
    %v3728 = vrot.slane %v3727, 2
    %v3729 = vadd.f32 %v3727, %v3728
    %v3730 = vrot.slane %v3729, 1
    %v3731 = vadd.f32 %v3729, %v3730
    %v3732 = vmul.f32 %v3731, %v80
    %v3733 = vsub.f32 %v3721, %v3732
    %v3734 = vsub.f32 %v3722, %v3732
    %v3735 = vmul.f32 %v3733, %v3733
    %v3736 = vmul.f32 %v3734, %v3734
    %v3737 = vsel %vm70, %v3735, 0.0
    %v3738 = vsel %vm70, %v3736, 0.0
    %v3739 = vadd.f32 %v3737, %v3738
    %v3740 = vrot.slane %v3739, 4
    %v3741 = vadd.f32 %v3739, %v3740
    %v3742 = vrot.slane %v3741, 2
    %v3743 = vadd.f32 %v3741, %v3742
    %v3744 = vrot.slane %v3743, 1
    %v3745 = vadd.f32 %v3743, %v3744
    %v3746 = vmul.f32 %v3745, %v80
    %v3747 = vadd.f32 %v3746, 1e-05
    %v3748 = vrsqrt.pop %v3747
    %v3749 = vmul.f32 %v3733, %v3748
    %v3750 = vmul.f32 %v3734, %v3748
    %v3751 = vld [vmem:[#allocation7 + $0x17] sm:$0x1]
    %v3752 = vlaneseq
    %v3753 = vshrl.u32 %v3752, 7
    %v3754 = vsub.s32 0, %v3753
    %v3755 = vrot.slane %v3751, %v3754
    %v3756 = vmul.f32 %v3749, %v3755
    %v3757 = vmul.f32 %v3750, %v3755
    %v3758 = vld [vmem:[#allocation7 + $0x18] sm:$0x1]
    %v3759 = vlaneseq
    %v3760 = vshrl.u32 %v3759, 7
    %v3761 = vsub.s32 0, %v3760
    %v3762 = vrot.slane %v3758, %v3761
    %v3763 = vadd.f32 %v3756, %v3762
    %v3764 = vadd.f32 %v3757, %v3762
    %v3765 = vld [vmem:[#allocation2 + $0x24] sm:$0xf]
    %v3766 = vld [vmem:[#allocation2 + $0x68] sm:$0xf]
    %v3767 = vld [vmem:[#allocation2 + $0xac] sm:$0xf]
    %v3768 = vld [vmem:[#allocation2 + $0xf0] sm:$0xf]
    %v3769 = vpack.c.bf16 %v3764, %v3763
    %v3770 = vld [vmem:[#allocation7 + $0x19] sm:$0x1]
    %v3771 = vlaneseq
    %v3772 = vshrl.u32 %v3771, 7
    %v3773 = vsub.s32 0, %v3772
    %v3774 = vrot.slane %v3770, %v3773
    %v3779 = vunpack.c.l.b16 %v3765
    %v3780 = vunpack.c.l.b16 %v3766
    %v3781 = vunpack.c.l.b16 %v3767
    %v3782 = vunpack.c.l.b16 %v3768
    %v3783 = vpack.c.b16 %v3780, %v3779
    %v3784 = vpack.c.b16 %v3782, %v3781
    %v3788 = vsel %vm70, %v3769, 0
    %3790 = vmatprep.subr.bf16.mxu0 0
    %3791 = vmatpush1.bf16.msra.mxu0 0
    %3792 = vmatprep.subr.bf16.mxu0 0
    %3793 = vmatpush1.bf16.msra.mxu0 0
    %3794 = vmatprep.subr.bf16.mxu0 0
    %3795 = vmatpush1.bf16.msra.mxu0 0
    %3796 = vmatprep.subr.bf16.mxu0 0
    %3797 = vmatpush1.bf16.msra.mxu0 0
    %3798 = vmatprep.subr.bf16.mxu0 0
    %3799 = vmatpush1.bf16.msra.mxu0 0
    %3800 = vmatprep.subr.bf16.mxu0 0
    %3801 = vmatpush1.bf16.msra.mxu0 0
    %3802 = vmatprep.subr.bf16.mxu0 0
    %3803 = vmatpush1.bf16.msra.mxu0 %v3784
    %3804 = vmatprep.subr.bf16.mxu0 0
    %3805 = vmatpush1.bf16.msra.mxu0 %v3783
    %3806 = vmatprep.subr.bf16.mxu0 0
    %3807 = vmatpush2.bf16.msra.mxu0 0
    %3808 = vmatprep.subr.bf16.mxu0 0
    %3809 = vmatpush2.bf16.msra.mxu0 0
    %3810 = vmatprep.subr.bf16.mxu0 0
    %3811 = vmatpush2.bf16.msra.mxu0 0
    %3812 = vmatprep.subr.bf16.mxu0 0
    %3813 = vmatpush2.bf16.msra.mxu0 0
    %3814 = vmatprep.subr.bf16.mxu0 0
    %3815 = vmatpush2.bf16.msra.mxu0 0
    %3816 = vmatprep.subr.bf16.mxu0 0
    %3817 = vmatpush2.bf16.msra.mxu0 0
    %3818 = vmatprep.subr.bf16.mxu0 0
    %3819 = vmatpush2.bf16.msra.mxu0 0
    %3820 = vmatprep.subr.bf16.mxu0 0
    %3821 = vmatpush2.bf16.msra.mxu0 0
    %3822 = vmatprep.mubr.bf16.mxu0 0
    %3823 = vmatmul.mubr.bf16.gmra.mxu0 %v3788
    %v3824 = vpop.f32.mrf.mxu0
    %v3825 = vadd.f32 %v3774, %v3824
    %v3826 = vpop.f32.mrf.mxu0
    %v3827 = vpop.f32.mrf.mxu0
    %v3828 = vadd.f32 %v3774, %v3827
    %v3829 = vpop.f32.mrf.mxu0
    %3830 = vdwg.mxu0
    %v3831 = vmul.f32 %v3825, 0.5
    %v3832 = vmul.f32 %v3828, 0.5
    %v3833 = vmul.f32 %v3825, 0.044715
    %v3834 = vmul.f32 %v3828, 0.044715
    %v3835 = vmul.f32 %v3833, %v3825
    %v3836 = vmul.f32 %v3834, %v3828
    %v3837 = vmul.f32 %v3835, %v3825
    %v3838 = vmul.f32 %v3836, %v3828
    %v3839 = vadd.f32 %v3825, %v3837
    %v3840 = vadd.f32 %v3828, %v3838
    %v3841 = vmul.f32 %v3839, 0.7978846
    %v3842 = vmul.f32 %v3840, 0.7978846
    %v3843 = vtanh.pop %v3841
    %v3844 = vtanh.pop %v3842
    %v3845 = vadd.f32 %v3843, 1.0
    %v3846 = vadd.f32 %v3844, 1.0
    %v3847 = vmul.f32 %v3831, %v3845
    %v3848 = vmul.f32 %v3832, %v3846
    %v3849 = vsel %vm70, %v3847, 0.0
    %v3850 = vsel %vm70, %v3848, 0.0
    %v3851 = vadd.f32 %v3849, %v3850
    %v3852 = vrot.slane %v3851, 4
    %v3853 = vadd.f32 %v3851, %v3852
    %v3854 = vrot.slane %v3853, 2
    %v3855 = vadd.f32 %v3853, %v3854
    %v3856 = vrot.slane %v3855, 1
    %v3857 = vadd.f32 %v3855, %v3856
    %v3858 = vmul.f32 %v3857, %v80
    %v3859 = vsub.f32 %v3847, %v3858
    %v3860 = vsub.f32 %v3848, %v3858
    %v3861 = vmul.f32 %v3859, %v3859
    %v3862 = vmul.f32 %v3860, %v3860
    %v3863 = vsel %vm70, %v3861, 0.0
    %v3864 = vsel %vm70, %v3862, 0.0
    %v3865 = vadd.f32 %v3863, %v3864
    %v3866 = vrot.slane %v3865, 4
    %v3867 = vadd.f32 %v3865, %v3866
    %v3868 = vrot.slane %v3867, 2
    %v3869 = vadd.f32 %v3867, %v3868
    %v3870 = vrot.slane %v3869, 1
    %v3871 = vadd.f32 %v3869, %v3870
    %v3872 = vmul.f32 %v3871, %v80
    %v3873 = vadd.f32 %v3872, 1e-05
    %v3874 = vrsqrt.pop %v3873
    %v3875 = vmul.f32 %v3859, %v3874
    %v3876 = vmul.f32 %v3860, %v3874
    %v3877 = vld [vmem:[#allocation7 + $0x1a] sm:$0x1]
    %v3878 = vlaneseq
    %v3879 = vshrl.u32 %v3878, 7
    %v3880 = vsub.s32 0, %v3879
    %v3881 = vrot.slane %v3877, %v3880
    %v3882 = vmul.f32 %v3875, %v3881
    %v3883 = vmul.f32 %v3876, %v3881
    %v3884 = vld [vmem:[#allocation7 + $0x1b] sm:$0x1]
    %v3885 = vlaneseq
    %v3886 = vshrl.u32 %v3885, 7
    %v3887 = vsub.s32 0, %v3886
    %v3888 = vrot.slane %v3884, %v3887
    %v3889 = vadd.f32 %v3882, %v3888
    %v3890 = vadd.f32 %v3883, %v3888
    %v3891 = vld [vmem:[#allocation2 + $0x28] sm:$0xf]
    %v3892 = vld [vmem:[#allocation2 + $0x6c] sm:$0xf]
    %v3893 = vld [vmem:[#allocation2 + $0xb0] sm:$0xf]
    %v3894 = vld [vmem:[#allocation2 + $0xf4] sm:$0xf]
    %v3895 = vpack.c.bf16 %v3890, %v3889
    %v3896 = vld [vmem:[#allocation7 + $0x1c] sm:$0x1]
    %v3897 = vlaneseq
    %v3898 = vshrl.u32 %v3897, 7
    %v3899 = vsub.s32 0, %v3898
    %v3900 = vrot.slane %v3896, %v3899
    %v3905 = vunpack.c.l.b16 %v3891
    %v3906 = vunpack.c.l.b16 %v3892
    %v3907 = vunpack.c.l.b16 %v3893
    %v3908 = vunpack.c.l.b16 %v3894
    %v3909 = vpack.c.b16 %v3906, %v3905
    %v3910 = vpack.c.b16 %v3908, %v3907
    %v3914 = vsel %vm70, %v3895, 0
    %3916 = vmatprep.subr.bf16.mxu0 0
    %3917 = vmatpush1.bf16.msra.mxu0 0
    %3918 = vmatprep.subr.bf16.mxu0 0
    %3919 = vmatpush1.bf16.msra.mxu0 0
    %3920 = vmatprep.subr.bf16.mxu0 0
    %3921 = vmatpush1.bf16.msra.mxu0 0
    %3922 = vmatprep.subr.bf16.mxu0 0
    %3923 = vmatpush1.bf16.msra.mxu0 0
    %3924 = vmatprep.subr.bf16.mxu0 0
    %3925 = vmatpush1.bf16.msra.mxu0 0
    %3926 = vmatprep.subr.bf16.mxu0 0
    %3927 = vmatpush1.bf16.msra.mxu0 0
    %3928 = vmatprep.subr.bf16.mxu0 0
    %3929 = vmatpush1.bf16.msra.mxu0 %v3910
    %3930 = vmatprep.subr.bf16.mxu0 0
    %3931 = vmatpush1.bf16.msra.mxu0 %v3909
    %3932 = vmatprep.subr.bf16.mxu0 0
    %3933 = vmatpush2.bf16.msra.mxu0 0
    %3934 = vmatprep.subr.bf16.mxu0 0
    %3935 = vmatpush2.bf16.msra.mxu0 0
    %3936 = vmatprep.subr.bf16.mxu0 0
    %3937 = vmatpush2.bf16.msra.mxu0 0
    %3938 = vmatprep.subr.bf16.mxu0 0
    %3939 = vmatpush2.bf16.msra.mxu0 0
    %3940 = vmatprep.subr.bf16.mxu0 0
    %3941 = vmatpush2.bf16.msra.mxu0 0
    %3942 = vmatprep.subr.bf16.mxu0 0
    %3943 = vmatpush2.bf16.msra.mxu0 0
    %3944 = vmatprep.subr.bf16.mxu0 0
    %3945 = vmatpush2.bf16.msra.mxu0 0
    %3946 = vmatprep.subr.bf16.mxu0 0
    %3947 = vmatpush2.bf16.msra.mxu0 0
    %3948 = vmatprep.mubr.bf16.mxu0 0
    %3949 = vmatmul.mubr.bf16.gmra.mxu0 %v3914
    %v3950 = vpop.f32.mrf.mxu0
    %v3951 = vadd.f32 %v3900, %v3950
    %v3952 = vpop.f32.mrf.mxu0
    %v3953 = vpop.f32.mrf.mxu0
    %v3954 = vadd.f32 %v3900, %v3953
    %v3955 = vpop.f32.mrf.mxu0
    %3956 = vdwg.mxu0
    %v3957 = vld [vmem:[%s2] sm:$0x3]
    %v3958 = vpack.c.bf16 %v3957, %v3957
    %v3959 = vpack.c.bf16 %v3954, %v3951
    %v3961 = vsel %vm408, %v3958, 0
    %3963 = vmatprep.subr.bf16.mxu0 0
    %3964 = vmatpush1.bf16.msra.mxu0 0
    %3965 = vmatprep.subr.bf16.mxu0 0
    %3966 = vmatpush1.bf16.msra.mxu0 0
    %3967 = vmatprep.subr.bf16.mxu0 0
    %3968 = vmatpush1.bf16.msra.mxu0 0
    %3969 = vmatprep.subr.bf16.mxu0 0
    %3970 = vmatpush1.bf16.msra.mxu0 0
    %3971 = vmatprep.subr.bf16.mxu0 0
    %3972 = vmatpush1.bf16.msra.mxu0 0
    %3973 = vmatprep.subr.bf16.mxu0 0
    %3974 = vmatpush1.bf16.msra.mxu0 0
    %3975 = vmatprep.subr.bf16.mxu0 0
    %3976 = vmatpush1.bf16.msra.mxu0 0
    %3977 = vmatprep.subr.bf16.mxu0 0
    %3978 = vmatpush1.bf16.msra.mxu0 %v3959
    %3979 = vmatprep.subr.bf16.mxu0 0
    %3980 = vmatpush2.bf16.msra.mxu0 0
    %3981 = vmatprep.subr.bf16.mxu0 0
    %3982 = vmatpush2.bf16.msra.mxu0 0
    %3983 = vmatprep.subr.bf16.mxu0 0
    %3984 = vmatpush2.bf16.msra.mxu0 0
    %3985 = vmatprep.subr.bf16.mxu0 0
    %3986 = vmatpush2.bf16.msra.mxu0 0
    %3987 = vmatprep.subr.bf16.mxu0 0
    %3988 = vmatpush2.bf16.msra.mxu0 0
    %3989 = vmatprep.subr.bf16.mxu0 0
    %3990 = vmatpush2.bf16.msra.mxu0 0
    %3991 = vmatprep.subr.bf16.mxu0 0
    %3992 = vmatpush2.bf16.msra.mxu0 0
    %3993 = vmatprep.subr.bf16.mxu0 0
    %3994 = vmatpush2.bf16.msra.mxu0 0
    %3995 = vmatprep.mubr.bf16.mxu0 0
    %3996 = vmatmul.mubr.bf16.gmra.mxu0 %v3961
    %v3997 = vpop.f32.mrf.mxu0
    %v3998 = vadd.f32 0.0, %v3997
    %v3999 = vpop.f32.mrf.mxu0
    %v4000 = vpop.f32.mrf.mxu0
    %v4001 = vpop.f32.mrf.mxu0
    %4002 = vdwg.mxu0
    %v4003 = vld [vmem:[#allocation2 + $0x2c] sm:$0xf]
    %v4004 = vld [vmem:[#allocation2 + $0x70] sm:$0xf]
    %v4005 = vld [vmem:[#allocation2 + $0xb4] sm:$0xf]
    %v4006 = vld [vmem:[#allocation2 + $0xf8] sm:$0xf]
    %v4007 = vpack.c.bf16 %v3998, %v3998
    %v4008 = vld [vmem:[#allocation7 + $0x1d] sm:$0x1]
    %v4009 = vlaneseq
    %v4010 = vshrl.u32 %v4009, 7
    %v4011 = vsub.s32 0, %v4010
    %v4012 = vrot.slane %v4008, %v4011
    %v4017 = vunpack.c.l.b16 %v4003
    %v4018 = vunpack.c.l.b16 %v4004
    %v4019 = vunpack.c.l.b16 %v4005
    %v4020 = vunpack.c.l.b16 %v4006
    %v4021 = vpack.c.b16 %v4018, %v4017
    %v4022 = vpack.c.b16 %v4020, %v4019
    %v4026 = vsel %vm70, %v4007, 0
    %4028 = vmatprep.subr.bf16.mxu0 0
    %4029 = vmatpush1.bf16.msra.mxu0 0
    %4030 = vmatprep.subr.bf16.mxu0 0
    %4031 = vmatpush1.bf16.msra.mxu0 0
    %4032 = vmatprep.subr.bf16.mxu0 0
    %4033 = vmatpush1.bf16.msra.mxu0 0
    %4034 = vmatprep.subr.bf16.mxu0 0
    %4035 = vmatpush1.bf16.msra.mxu0 0
    %4036 = vmatprep.subr.bf16.mxu0 0
    %4037 = vmatpush1.bf16.msra.mxu0 0
    %4038 = vmatprep.subr.bf16.mxu0 0
    %4039 = vmatpush1.bf16.msra.mxu0 0
    %4040 = vmatprep.subr.bf16.mxu0 0
    %4041 = vmatpush1.bf16.msra.mxu0 %v4022
    %4042 = vmatprep.subr.bf16.mxu0 0
    %4043 = vmatpush1.bf16.msra.mxu0 %v4021
    %4044 = vmatprep.subr.bf16.mxu0 0
    %4045 = vmatpush2.bf16.msra.mxu0 0
    %4046 = vmatprep.subr.bf16.mxu0 0
    %4047 = vmatpush2.bf16.msra.mxu0 0
    %4048 = vmatprep.subr.bf16.mxu0 0
    %4049 = vmatpush2.bf16.msra.mxu0 0
    %4050 = vmatprep.subr.bf16.mxu0 0
    %4051 = vmatpush2.bf16.msra.mxu0 0
    %4052 = vmatprep.subr.bf16.mxu0 0
    %4053 = vmatpush2.bf16.msra.mxu0 0
    %4054 = vmatprep.subr.bf16.mxu0 0
    %4055 = vmatpush2.bf16.msra.mxu0 0
    %4056 = vmatprep.subr.bf16.mxu0 0
    %4057 = vmatpush2.bf16.msra.mxu0 0
    %4058 = vmatprep.subr.bf16.mxu0 0
    %4059 = vmatpush2.bf16.msra.mxu0 0
    %4060 = vmatprep.mubr.bf16.mxu0 0
    %4061 = vmatmul.mubr.bf16.gmra.mxu0 %v4026
    %v4062 = vpop.f32.mrf.mxu0
    %v4063 = vadd.f32 %v4012, %v4062
    %v4064 = vpop.f32.mrf.mxu0
    %v4065 = vpop.f32.mrf.mxu0
    %v4066 = vpop.f32.mrf.mxu0
    %4067 = vdwg.mxu0
    %v4068 = vmax.f32 %v4063, 0.0
    %v4069 = vld [vmem:[#allocation2 + $0x30] sm:$0xf]
    %v4070 = vld [vmem:[#allocation2 + $0x74] sm:$0xf]
    %v4071 = vld [vmem:[#allocation2 + $0xb8] sm:$0xf]
    %v4072 = vld [vmem:[#allocation2 + $0xfc] sm:$0xf]
    %v4073 = vpack.c.bf16 %v4068, %v4068
    %v4074 = vld [vmem:[#allocation7 + $0x1e] sm:$0x1]
    %v4075 = vlaneseq
    %v4076 = vshrl.u32 %v4075, 7
    %v4077 = vsub.s32 0, %v4076
    %v4078 = vrot.slane %v4074, %v4077
    %v4083 = vunpack.c.l.b16 %v4069
    %v4084 = vunpack.c.l.b16 %v4070
    %v4085 = vunpack.c.l.b16 %v4071
    %v4086 = vunpack.c.l.b16 %v4072
    %v4087 = vpack.c.b16 %v4084, %v4083
    %v4088 = vpack.c.b16 %v4086, %v4085
    %v4092 = vsel %vm70, %v4073, 0
    %4094 = vmatprep.subr.bf16.mxu0 0
    %4095 = vmatpush1.bf16.msra.mxu0 0
    %4096 = vmatprep.subr.bf16.mxu0 0
    %4097 = vmatpush1.bf16.msra.mxu0 0
    %4098 = vmatprep.subr.bf16.mxu0 0
    %4099 = vmatpush1.bf16.msra.mxu0 0
    %4100 = vmatprep.subr.bf16.mxu0 0
    %4101 = vmatpush1.bf16.msra.mxu0 0
    %4102 = vmatprep.subr.bf16.mxu0 0
    %4103 = vmatpush1.bf16.msra.mxu0 0
    %4104 = vmatprep.subr.bf16.mxu0 0
    %4105 = vmatpush1.bf16.msra.mxu0 0
    %4106 = vmatprep.subr.bf16.mxu0 0
    %4107 = vmatpush1.bf16.msra.mxu0 %v4088
    %4108 = vmatprep.subr.bf16.mxu0 0
    %4109 = vmatpush1.bf16.msra.mxu0 %v4087
    %4110 = vmatprep.subr.bf16.mxu0 0
    %4111 = vmatpush2.bf16.msra.mxu0 0
    %4112 = vmatprep.subr.bf16.mxu0 0
    %4113 = vmatpush2.bf16.msra.mxu0 0
    %4114 = vmatprep.subr.bf16.mxu0 0
    %4115 = vmatpush2.bf16.msra.mxu0 0
    %4116 = vmatprep.subr.bf16.mxu0 0
    %4117 = vmatpush2.bf16.msra.mxu0 0
    %4118 = vmatprep.subr.bf16.mxu0 0
    %4119 = vmatpush2.bf16.msra.mxu0 0
    %4120 = vmatprep.subr.bf16.mxu0 0
    %4121 = vmatpush2.bf16.msra.mxu0 0
    %4122 = vmatprep.subr.bf16.mxu0 0
    %4123 = vmatpush2.bf16.msra.mxu0 0
    %4124 = vmatprep.subr.bf16.mxu0 0
    %4125 = vmatpush2.bf16.msra.mxu0 0
    %4126 = vmatprep.mubr.bf16.mxu0 0
    %4127 = vmatmul.mubr.bf16.gmra.mxu0 %v4092
    %v4128 = vpop.f32.mrf.mxu0
    %v4129 = vadd.f32 %v4078, %v4128
    %v4130 = vpop.f32.mrf.mxu0
    %v4131 = vpop.f32.mrf.mxu0
    %v4132 = vpop.f32.mrf.mxu0
    %4133 = vdwg.mxu0
    %v4134 = vld [vmem:[#allocation2 + $0x34] sm:$0xf]
    %v4135 = vld [vmem:[#allocation2 + $0x78] sm:$0xf]
    %v4136 = vld [vmem:[#allocation2 + $0xbc] sm:$0xf]
    %v4137 = vld [vmem:[#allocation2 + $0x100] sm:$0xf]
    %v4138 = vpack.c.bf16 %v4129, %v4129
    %v4139 = vld [vmem:[#allocation7 + $0x1f] sm:$0x1]
    %v4140 = vlaneseq
    %v4141 = vshrl.u32 %v4140, 7
    %v4142 = vsub.s32 0, %v4141
    %v4143 = vrot.slane %v4139, %v4142
    %v4148 = vunpack.c.l.b16 %v4134
    %v4149 = vunpack.c.l.b16 %v4135
    %v4150 = vunpack.c.l.b16 %v4136
    %v4151 = vunpack.c.l.b16 %v4137
    %v4152 = vpack.c.b16 %v4149, %v4148
    %v4153 = vpack.c.b16 %v4151, %v4150
    %v4157 = vsel %vm70, %v4138, 0
    %4159 = vmatprep.subr.bf16.mxu0 0
    %4160 = vmatpush1.bf16.msra.mxu0 0
    %4161 = vmatprep.subr.bf16.mxu0 0
    %4162 = vmatpush1.bf16.msra.mxu0 0
    %4163 = vmatprep.subr.bf16.mxu0 0
    %4164 = vmatpush1.bf16.msra.mxu0 0
    %4165 = vmatprep.subr.bf16.mxu0 0
    %4166 = vmatpush1.bf16.msra.mxu0 0
    %4167 = vmatprep.subr.bf16.mxu0 0
    %4168 = vmatpush1.bf16.msra.mxu0 0
    %4169 = vmatprep.subr.bf16.mxu0 0
    %4170 = vmatpush1.bf16.msra.mxu0 0
    %4171 = vmatprep.subr.bf16.mxu0 0
    %4172 = vmatpush1.bf16.msra.mxu0 %v4153
    %4173 = vmatprep.subr.bf16.mxu0 0
    %4174 = vmatpush1.bf16.msra.mxu0 %v4152
    %4175 = vmatprep.subr.bf16.mxu0 0
    %4176 = vmatpush2.bf16.msra.mxu0 0
    %4177 = vmatprep.subr.bf16.mxu0 0
    %4178 = vmatpush2.bf16.msra.mxu0 0
    %4179 = vmatprep.subr.bf16.mxu0 0
    %4180 = vmatpush2.bf16.msra.mxu0 0
    %4181 = vmatprep.subr.bf16.mxu0 0
    %4182 = vmatpush2.bf16.msra.mxu0 0
    %4183 = vmatprep.subr.bf16.mxu0 0
    %4184 = vmatpush2.bf16.msra.mxu0 0
    %4185 = vmatprep.subr.bf16.mxu0 0
    %4186 = vmatpush2.bf16.msra.mxu0 0
    %4187 = vmatprep.subr.bf16.mxu0 0
    %4188 = vmatpush2.bf16.msra.mxu0 0
    %4189 = vmatprep.subr.bf16.mxu0 0
    %4190 = vmatpush2.bf16.msra.mxu0 0
    %4191 = vmatprep.mubr.bf16.mxu0 0
    %4192 = vmatmul.mubr.bf16.gmra.mxu0 %v4157
    %v4193 = vpop.f32.mrf.mxu0
    %v4194 = vadd.f32 %v4143, %v4193
    %v4195 = vpop.f32.mrf.mxu0
    %v4196 = vpop.f32.mrf.mxu0
    %v4197 = vpop.f32.mrf.mxu0
    %4198 = vdwg.mxu0
    %v4199 = vmax.f32 %v4194, 0.0
    %v4200 = vld [vmem:[#allocation2 + $0x38] sm:$0xf]
    %v4201 = vld [vmem:[#allocation2 + $0x7c] sm:$0xf]
    %v4202 = vld [vmem:[#allocation2 + $0xc0] sm:$0xf]
    %v4203 = vld [vmem:[#allocation2 + $0x104] sm:$0xf]
    %v4204 = vpack.c.bf16 %v4199, %v4199
    %v4205 = vld [vmem:[#allocation7 + $0x20] sm:$0x1]
    %v4206 = vlaneseq
    %v4207 = vshrl.u32 %v4206, 7
    %v4208 = vsub.s32 0, %v4207
    %v4209 = vrot.slane %v4205, %v4208
    %v4214 = vunpack.c.l.b16 %v4200
    %v4215 = vunpack.c.l.b16 %v4201
    %v4216 = vunpack.c.l.b16 %v4202
    %v4217 = vunpack.c.l.b16 %v4203
    %v4218 = vpack.c.b16 %v4215, %v4214
    %v4219 = vpack.c.b16 %v4217, %v4216
    %v4223 = vsel %vm70, %v4204, 0
    %4225 = vmatprep.subr.bf16.mxu0 0
    %4226 = vmatpush1.bf16.msra.mxu0 0
    %4227 = vmatprep.subr.bf16.mxu0 0
    %4228 = vmatpush1.bf16.msra.mxu0 0
    %4229 = vmatprep.subr.bf16.mxu0 0
    %4230 = vmatpush1.bf16.msra.mxu0 0
    %4231 = vmatprep.subr.bf16.mxu0 0
    %4232 = vmatpush1.bf16.msra.mxu0 0
    %4233 = vmatprep.subr.bf16.mxu0 0
    %4234 = vmatpush1.bf16.msra.mxu0 0
    %4235 = vmatprep.subr.bf16.mxu0 0
    %4236 = vmatpush1.bf16.msra.mxu0 0
    %4237 = vmatprep.subr.bf16.mxu0 0
    %4238 = vmatpush1.bf16.msra.mxu0 %v4219
    %4239 = vmatprep.subr.bf16.mxu0 0
    %4240 = vmatpush1.bf16.msra.mxu0 %v4218
    %4241 = vmatprep.subr.bf16.mxu0 0
    %4242 = vmatpush2.bf16.msra.mxu0 0
    %4243 = vmatprep.subr.bf16.mxu0 0
    %4244 = vmatpush2.bf16.msra.mxu0 0
    %4245 = vmatprep.subr.bf16.mxu0 0
    %4246 = vmatpush2.bf16.msra.mxu0 0
    %4247 = vmatprep.subr.bf16.mxu0 0
    %4248 = vmatpush2.bf16.msra.mxu0 0
    %4249 = vmatprep.subr.bf16.mxu0 0
    %4250 = vmatpush2.bf16.msra.mxu0 0
    %4251 = vmatprep.subr.bf16.mxu0 0
    %4252 = vmatpush2.bf16.msra.mxu0 0
    %4253 = vmatprep.subr.bf16.mxu0 0
    %4254 = vmatpush2.bf16.msra.mxu0 0
    %4255 = vmatprep.subr.bf16.mxu0 0
    %4256 = vmatpush2.bf16.msra.mxu0 0
    %4257 = vmatprep.mubr.bf16.mxu0 0
    %4258 = vmatmul.mubr.bf16.gmra.mxu0 %v4223
    %v4259 = vpop.f32.mrf.mxu0
    %v4260 = vadd.f32 %v4209, %v4259
    %v4261 = vpop.f32.mrf.mxu0
    %v4262 = vpop.f32.mrf.mxu0
    %v4263 = vpop.f32.mrf.mxu0
    %4264 = vdwg.mxu0
    %v4265 = vmax.f32 %v4260, 0.0
    %v4266 = vld [vmem:[#allocation2 + $0x3c] sm:$0xf]
    %v4267 = vld [vmem:[#allocation2 + $0x80] sm:$0xf]
    %v4268 = vld [vmem:[#allocation2 + $0xc4] sm:$0xf]
    %v4269 = vld [vmem:[#allocation2 + $0x108] sm:$0xf]
    %v4270 = vpack.c.bf16 %v4265, %v4265
    %v4271 = vld [vmem:[#allocation7 + $0x21] sm:$0x1]
    %v4272 = vlaneseq
    %v4273 = vshrl.u32 %v4272, 7
    %v4274 = vsub.s32 0, %v4273
    %v4275 = vrot.slane %v4271, %v4274
    %v4280 = vunpack.c.l.b16 %v4266
    %v4281 = vunpack.c.l.b16 %v4267
    %v4282 = vunpack.c.l.b16 %v4268
    %v4283 = vunpack.c.l.b16 %v4269
    %v4284 = vpack.c.b16 %v4281, %v4280
    %v4285 = vpack.c.b16 %v4283, %v4282
    %v4289 = vsel %vm70, %v4270, 0
    %4291 = vmatprep.subr.bf16.mxu0 0
    %4292 = vmatpush1.bf16.msra.mxu0 0
    %4293 = vmatprep.subr.bf16.mxu0 0
    %4294 = vmatpush1.bf16.msra.mxu0 0
    %4295 = vmatprep.subr.bf16.mxu0 0
    %4296 = vmatpush1.bf16.msra.mxu0 0
    %4297 = vmatprep.subr.bf16.mxu0 0
    %4298 = vmatpush1.bf16.msra.mxu0 0
    %4299 = vmatprep.subr.bf16.mxu0 0
    %4300 = vmatpush1.bf16.msra.mxu0 0
    %4301 = vmatprep.subr.bf16.mxu0 0
    %4302 = vmatpush1.bf16.msra.mxu0 0
    %4303 = vmatprep.subr.bf16.mxu0 0
    %4304 = vmatpush1.bf16.msra.mxu0 %v4285
    %4305 = vmatprep.subr.bf16.mxu0 0
    %4306 = vmatpush1.bf16.msra.mxu0 %v4284
    %4307 = vmatprep.subr.bf16.mxu0 0
    %4308 = vmatpush2.bf16.msra.mxu0 0
    %4309 = vmatprep.subr.bf16.mxu0 0
    %4310 = vmatpush2.bf16.msra.mxu0 0
    %4311 = vmatprep.subr.bf16.mxu0 0
    %4312 = vmatpush2.bf16.msra.mxu0 0
    %4313 = vmatprep.subr.bf16.mxu0 0
    %4314 = vmatpush2.bf16.msra.mxu0 0
    %4315 = vmatprep.subr.bf16.mxu0 0
    %4316 = vmatpush2.bf16.msra.mxu0 0
    %4317 = vmatprep.subr.bf16.mxu0 0
    %4318 = vmatpush2.bf16.msra.mxu0 0
    %4319 = vmatprep.subr.bf16.mxu0 0
    %4320 = vmatpush2.bf16.msra.mxu0 0
    %4321 = vmatprep.subr.bf16.mxu0 0
    %4322 = vmatpush2.bf16.msra.mxu0 0
    %4323 = vmatprep.mubr.bf16.mxu0 0
    %4324 = vmatmul.mubr.bf16.gmra.mxu0 %v4289
    %v4325 = vpop.f32.mrf.mxu0
    %v4326 = vadd.f32 %v4275, %v4325
    %v4327 = vpop.f32.mrf.mxu0
    %v4328 = vpop.f32.mrf.mxu0
    %v4329 = vpop.f32.mrf.mxu0
    %4330 = vdwg.mxu0
    %v4331 = vmax.f32 %v4326, 0.0
    %v4332 = vld [vmem:[#allocation2 + $0x40] sm:$0xf]
    %v4333 = vld [vmem:[#allocation2 + $0x84] sm:$0xf]
    %v4334 = vld [vmem:[#allocation2 + $0xc8] sm:$0xf]
    %v4335 = vld [vmem:[#allocation2 + $0x10c] sm:$0xf]
    %v4336 = vpack.c.bf16 %v4331, %v4331
    %v4337 = vld [vmem:[#allocation7 + $0x22] sm:$0x1]
    %v4338 = vlaneseq
    %v4339 = vshrl.u32 %v4338, 7
    %v4340 = vsub.s32 0, %v4339
    %v4341 = vrot.slane %v4337, %v4340
    %v4346 = vunpack.c.l.b16 %v4332
    %v4347 = vunpack.c.l.b16 %v4333
    %v4348 = vunpack.c.l.b16 %v4334
    %v4349 = vunpack.c.l.b16 %v4335
    %v4350 = vpack.c.b16 %v4347, %v4346
    %v4351 = vpack.c.b16 %v4349, %v4348
    %v4355 = vsel %vm70, %v4336, 0
    %4357 = vmatprep.subr.bf16.mxu0 0
    %4358 = vmatpush1.bf16.msra.mxu0 0
    %4359 = vmatprep.subr.bf16.mxu0 0
    %4360 = vmatpush1.bf16.msra.mxu0 0
    %4361 = vmatprep.subr.bf16.mxu0 0
    %4362 = vmatpush1.bf16.msra.mxu0 0
    %4363 = vmatprep.subr.bf16.mxu0 0
    %4364 = vmatpush1.bf16.msra.mxu0 0
    %4365 = vmatprep.subr.bf16.mxu0 0
    %4366 = vmatpush1.bf16.msra.mxu0 0
    %4367 = vmatprep.subr.bf16.mxu0 0
    %4368 = vmatpush1.bf16.msra.mxu0 0
    %4369 = vmatprep.subr.bf16.mxu0 0
    %4370 = vmatpush1.bf16.msra.mxu0 %v4351
    %4371 = vmatprep.subr.bf16.mxu0 0
    %4372 = vmatpush1.bf16.msra.mxu0 %v4350
    %4373 = vmatprep.subr.bf16.mxu0 0
    %4374 = vmatpush2.bf16.msra.mxu0 0
    %4375 = vmatprep.subr.bf16.mxu0 0
    %4376 = vmatpush2.bf16.msra.mxu0 0
    %4377 = vmatprep.subr.bf16.mxu0 0
    %4378 = vmatpush2.bf16.msra.mxu0 0
    %4379 = vmatprep.subr.bf16.mxu0 0
    %4380 = vmatpush2.bf16.msra.mxu0 0
    %4381 = vmatprep.subr.bf16.mxu0 0
    %4382 = vmatpush2.bf16.msra.mxu0 0
    %4383 = vmatprep.subr.bf16.mxu0 0
    %4384 = vmatpush2.bf16.msra.mxu0 0
    %4385 = vmatprep.subr.bf16.mxu0 0
    %4386 = vmatpush2.bf16.msra.mxu0 0
    %4387 = vmatprep.subr.bf16.mxu0 0
    %4388 = vmatpush2.bf16.msra.mxu0 0
    %4389 = vmatprep.mubr.bf16.mxu0 0
    %4390 = vmatmul.mubr.bf16.gmra.mxu0 %v4355
    %v4391 = vpop.f32.mrf.mxu0
    %v4392 = vadd.f32 %v4341, %v4391
    %v4393 = vpop.f32.mrf.mxu0
    %v4394 = vpop.f32.mrf.mxu0
    %v4395 = vpop.f32.mrf.mxu0
    %4396 = vdwg.mxu0
    %4397 = vst [vmem:[#allocation8] sm:$0x3] %v4392
    // Predicated region
    $region38: #{_lambda_.1} parent=1 // pred_check
      _
    $region39: #{_lambda_.1} parent=1 // pred_check_branch
      %4399 = sbr.rel (0) target = $region41
    $region40: #{_lambda_.1} parent=1 // pred_region
      %s4401 = ssub.s32 32, 32
      %4402 = vsyncadd [#allocation4], %s4401
      %s4404 = sshll.u32 [#allocation8], 4
      %s4405 = int_to_ptr.vmem [resolvable:$true] %s4404
      %4407 = dma.vmem_to_hbm [thread:$0]  %s4405, 32, %s6, [#allocation4]
    $region41: #{_lambda_.1} parent=1 // pred_fallthru
      _
    // Predicated region
    $region42: #{_lambda_.1} parent=1 // pred_check
      _
    $region43: #{_lambda_.1} parent=1 // pred_check_branch
      %4409 = sbr.rel (0) target = $region45
    $region44: #{_lambda_.1} parent=1 // pred_region
      %4410 = dma.done [#allocation4], 32
    $region45: #{_lambda_.1} parent=1 // pred_fallthru
      _
    %4411 = vsyncpa [#allocation3], 1
    %4412 = vsyncpa [#allocation6], 1
    %4413 = vsyncpa [#allocation4], 1

</llo_original>
